<compile_context>
chip_gen: v6e
topology: v6e:2x2x1
jax: 0.10.0
libtpu: 0.0.40
codegen_flags: <defaults>
</compile_context>

<pallas_src>
import jax
import jax.numpy as jnp
import numpy as np
from jax.experimental import pallas as pl
from jax.experimental.pallas import tpu as pltpu


# ----------------------------- Pallas kernels ------------------------------

def _conv_pool_kernel(p_ref, w_ref, b_ref, o_ref):
    """Fused conv-as-matmul + bias + 2x2 max-pool + ReLU (transposed layout).

    p_ref: (4, K, tm)  4 pool-window taps; K = KH*KW*C patch depth (sublanes);
                       tm = tile of flattened (b, pooled_h, pooled_w) on lanes.
    w_ref: (OC, K)     weight matrix, K ordered (kh, kw, c).
    b_ref: (OC, 1)     bias column.
    o_ref: (OC, tm)    lane-dense pooled output tile.
    """
    w = w_ref[...]
    y0 = jnp.dot(w, p_ref[0], preferred_element_type=jnp.float32)
    y1 = jnp.dot(w, p_ref[1], preferred_element_type=jnp.float32)
    y2 = jnp.dot(w, p_ref[2], preferred_element_type=jnp.float32)
    y3 = jnp.dot(w, p_ref[3], preferred_element_type=jnp.float32)
    y = jnp.maximum(jnp.maximum(y0, y1), jnp.maximum(y2, y3))
    # bias is per-output-channel, so max-then-(bias,relu) == relu(pool(conv+b))
    o_ref[...] = jnp.maximum(y + b_ref[...], 0.0)


def _fc_head_kernel(x_ref, w1_ref, b1_ref, w2_ref, b2_ref, o_ref):
    """Fused fc1(+ReLU) -> fc2; all operands resident in VMEM."""
    h = jnp.dot(x_ref[...], w1_ref[...], preferred_element_type=jnp.float32)
    h = jnp.maximum(h + b1_ref[...], 0.0)
    o_ref[...] = jnp.dot(h, w2_ref[...], preferred_element_type=jnp.float32) + b2_ref[...]


# ----------------------------- Pallas wrappers ------------------------------

def _round_up(v, m):
    return ((v + m - 1) // m) * m


def conv_pool_stage(p, w, b, *, m_cap=2048):
    """out(OC, M) = relu(maxpool2x2(conv)) from pool-tap-grouped patches.

    p: (4, K, M) float32, w: (OC, K), b: (OC,).  M is tiled on lanes in
    128-multiples; padded lane columns are sliced off (they hold relu(b)).
    """
    _, K, M = p.shape
    OC = w.shape[0]
    m128 = _round_up(M, 128)
    nsteps = max(1, -(-m128 // m_cap))          # near-even split, few big steps
    tm = _round_up(-(-m128 // nsteps), 128)
    mp = nsteps * tm
    if mp != M:
        p = jnp.pad(p, ((0, 0), (0, 0), (0, mp - M)))
    out = pl.pallas_call(
        _conv_pool_kernel,
        out_shape=jax.ShapeDtypeStruct((OC, mp), jnp.float32),
        grid=(nsteps,),
        in_specs=[
            pl.BlockSpec((4, K, tm), lambda i: (0, 0, i)),   # patch tile (lanes = M)
            pl.BlockSpec((OC, K), lambda i: (0, 0)),         # weights, resident
            pl.BlockSpec((OC, 1), lambda i: (0, 0)),         # bias column
        ],
        out_specs=pl.BlockSpec((OC, tm), lambda i: (0, i)),
        compiler_params=pltpu.CompilerParams(dimension_semantics=("parallel",)),
    )(p, w, b.reshape(OC, 1))
    return out[:, :M]


def fc_head(x, w1, b1, w2, b2):
    """q = relu(x @ w1.T + b1) @ w2.T + b2 in a single kernel (no 128-row padding)."""
    B, F = x.shape
    H = w1.shape[0]
    A = w2.shape[0]
    return pl.pallas_call(
        _fc_head_kernel,
        out_shape=jax.ShapeDtypeStruct((B, A), jnp.float32),
        grid=(1,),
        in_specs=[
            pl.BlockSpec((B, F), lambda i: (0, 0)),
            pl.BlockSpec((F, H), lambda i: (0, 0)),
            pl.BlockSpec((1, H), lambda i: (0, 0)),
            pl.BlockSpec((H, A), lambda i: (0, 0)),
            pl.BlockSpec((1, A), lambda i: (0, 0)),
        ],
        out_specs=pl.BlockSpec((B, A), lambda i: (0, 0)),
    )(x, w1.T, b1.reshape(1, H), w2.T, b2.reshape(1, A))


# ------------------------------- JAX glue -----------------------------------

def conv_weight_matrix(w):
    """(OC, IC, KH, KW) -> (OC, KH*KW*IC), matching (kh, kw, c) patch ordering."""
    OC = w.shape[0]
    return w.transpose(0, 2, 3, 1).reshape(OC, -1)


def conv1_pool_patches(x, ksize):
    """conv1: stride == kernel, so patches are a pure space-to-depth reshape.

    x: (B, C, H, W) -> (4, KH*KW*C, B*PH*PW); leading axis = the 2x2 pool tap.
    """
    B, C, H, W = x.shape
    PH, PW = H // (2 * ksize), W // (2 * ksize)
    xr = x.reshape(B, C, PH, 2, ksize, PW, 2, ksize)
    # (b, c, ph, dh, kh, pw, dw, kw) -> (dh, dw, kh, kw, c, b, ph, pw)
    xr = xr.transpose(3, 6, 4, 7, 1, 0, 2, 5)
    return xr.reshape(4, ksize * ksize * C, B * PH * PW), PH, PW


def pool_grouped_patches(act, ksize, stride):
    """General conv patches grouped by the 2x2 pool window (floor-mode pool).

    act: (C, B, H, W) -> (4, KH*KW*C, B*PH*PW); conv rows/cols the pool would
    discard are never generated.  K ordered (kh, kw, c); M ordered (b, ph, pw).
    """
    C, B, H, W = act.shape
    OH = (H - ksize) // stride + 1
    OW = (W - ksize) // stride + 1
    PH, PW = OH // 2, OW // 2
    step = 2 * stride
    taps = []
    for dh in range(2):
        for dw in range(2):
            pieces = []
            for i in range(ksize):
                for j in range(ksize):
                    h0 = stride * dh + i
                    w0 = stride * dw + j
                    sl = act[:, :, h0::step, w0::step][:, :, :PH, :PW]
                    pieces.append(sl)                     # (C, B, PH, PW)
            taps.append(jnp.stack(pieces, axis=0))        # (KH*KW, C, B, PH, PW)
    p = jnp.stack(taps, axis=0)                           # (4, KH*KW, C, B, PH, PW)
    return p.reshape(4, ksize * ksize * C, B * PH * PW), PH, PW


def init_params(key, input_channels, num_actions):
    def unif(k, shape, fan_in):
        bound = 1.0 / np.sqrt(fan_in)
        return jax.random.uniform(k, shape, jnp.float32, -bound, bound)
    ks = jax.random.split(key, 10)
    return {
        "conv1_w": unif(ks[0], (16, input_channels, 4, 4), input_channels * 16),
        "conv1_b": unif(ks[1], (16,), input_channels * 16),
        "conv2_w": unif(ks[2], (32, 16, 4, 4), 16 * 16),
        "conv2_b": unif(ks[3], (32,), 16 * 16),
        "conv3_w": unif(ks[4], (16, 32, 3, 3), 32 * 9),
        "conv3_b": unif(ks[5], (16,), 32 * 9),
        "fc1_w":   unif(ks[6], (32, 288), 288),
        "fc1_b":   unif(ks[7], (32,), 288),
        "fc2_w":   unif(ks[8], (num_actions, 32), 32),
        "fc2_b":   unif(ks[9], (num_actions,), 32),
    }


def dqn_forward(params, x):
    B = x.shape[0]

    # --- conv1 (k=4, s=4) + ReLU + pool1: one kernel, 1536-lane tiles --------
    p1, ph1, pw1 = conv1_pool_patches(x, 4)
    a1 = conv_pool_stage(p1, conv_weight_matrix(params["conv1_w"]), params["conv1_b"])
    act1 = a1.reshape(16, B, ph1, pw1)          # (C, B, 64, 36)

    # --- conv2 (k=4, s=2) + ReLU + pool2 -------------------------------------
    p2, ph2, pw2 = pool_grouped_patches(act1, 4, 2)
    a2 = conv_pool_stage(p2, conv_weight_matrix(params["conv2_w"]), params["conv2_b"])
    act2 = a2.reshape(32, B, ph2, pw2)          # (C, B, 15, 8)

    # --- conv3 (k=3, s=1) + ReLU + pool3 -------------------------------------
    p3, ph3, pw3 = pool_grouped_patches(act2, 3, 1)
    a3 = conv_pool_stage(p3, conv_weight_matrix(params["conv3_w"]), params["conv3_b"])
    act3 = a3.reshape(16, B, ph3, pw3)          # (C, B, 6, 3)

    # --- flatten in PyTorch NCHW order, fused fc1+fc2 ------------------------
    xf = act3.transpose(1, 0, 2, 3).reshape(B, 16 * ph3 * pw3)   # (B, 288)
    return fc_head(xf, params["fc1_w"], params["fc1_b"],
                   params["fc2_w"], params["fc2_b"])


def dqn_forward_ref(params, x):
    """Pure-JAX reference (mirrors the PyTorch forward) for validation."""
    def conv(x, w, b, s):
        y = jax.lax.conv_general_dilated(
            x, w, (s, s), "VALID", dimension_numbers=("NCHW", "OIHW", "NCHW"))
        return jax.nn.relu(y + b[None, :, None, None])

    def pool(x):
        return jax.lax.reduce_window(x, -jnp.inf, jax.lax.max,
                                     (1, 1, 2, 2), (1, 1, 2, 2), "VALID")

    x = pool(conv(x, params["conv1_w"], params["conv1_b"], 4))
    x = pool(conv(x, params["conv2_w"], params["conv2_b"], 2))
    x = pool(conv(x, params["conv3_w"], params["conv3_b"], 1))
    x = x.reshape(-1, 288)
    x = jax.nn.relu(x @ params["fc1_w"].T + params["fc1_b"])
    return x @ params["fc2_w"].T + params["fc2_b"]


if __name__ == "__main__":
    key = jax.random.PRNGKey(0)
    k_param, k_x = jax.random.split(key)

    input_channels, num_actions = 4, 2
    batch = 2
    # Flappy Bird screen: H=512, W=288 (the only spatial size consistent with
    # the hard-coded reshape(-1, 288) in the original forward).
    x = jax.random.normal(k_x, (batch, input_channels, 512, 288), jnp.float32)

    params = init_params(k_param, input_channels, num_actions)

    q = jax.block_until_ready(jax.jit(dqn_forward)(params, x))
    q_ref = jax.block_until_ready(jax.jit(dqn_forward_ref)(params, x))

    assert q.shape == (batch, num_actions)
    assert np.allclose(np.asarray(q), np.asarray(q_ref), rtol=1e-2, atol=1e-2)

    print("KERNEL_OK")
</pallas_src>

<mosaic_0001>
module attributes {stable_mosaic.version = 11 : i64} {
  func.func @_conv_pool_kernel(%arg0: i32, %arg1: memref<4x64x1536xf32, #tpu.memory_space<vmem>>, %arg2: memref<16x64xf32, #tpu.memory_space<vmem>>, %arg3: memref<16x1xf32, #tpu.memory_space<vmem>>, %arg4: memref<16x1536xf32, #tpu.memory_space<vmem>>) attributes {dimension_semantics = [#tpu.dimension_semantics<parallel>], iteration_bounds = array<i64: 3>, scalar_prefetch = 0 : i64, scratch_operands = 0 : i64, tpu.core_type = #tpu.core_type<tc>, window_params = [{transform_indices = @transform_0, window_bounds = array<i64: 4, 64, 1536>}, {pipeline_mode = #tpu.pipeline_mode<synchronous>, transform_indices = @transform_1, window_bounds = array<i64: 16, 64>}, {pipeline_mode = #tpu.pipeline_mode<synchronous>, transform_indices = @transform_2, window_bounds = array<i64: 16, 1>}, {transform_indices = @transform_3, window_bounds = array<i64: 16, 1536>}]} {
    %c0 = arith.constant 0 : index
    %c0_0 = arith.constant 0 : index
    %0 = vector.load %arg2[%c0, %c0_0] : memref<16x64xf32, #tpu.memory_space<vmem>>, vector<16x64xf32>
    %c0_1 = arith.constant 0 : index
    %c0_2 = arith.constant 0 : index
    %c0_3 = arith.constant 0 : index
    %1 = vector.load %arg1[%c0_1, %c0_2, %c0_3] : memref<4x64x1536xf32, #tpu.memory_space<vmem>>, vector<1x64x1536xf32>
    %2 = vector.shape_cast %1 : vector<1x64x1536xf32> to vector<64x1536xf32>
    %cst = arith.constant dense<0.000000e+00> : vector<16x1536xf32>
    %3 = tpu.matmul %0, %2, %cst {dimension_numbers = #tpu.dot_dimension_numbers<[1], [0], [0], [1], [0, 0, 1, 1], [], []>} : vector<16x64xf32>, vector<64x1536xf32>, vector<16x1536xf32> -> vector<16x1536xf32>
    %c1 = arith.constant 1 : index
    %c0_4 = arith.constant 0 : index
    %c0_5 = arith.constant 0 : index
    %4 = vector.load %arg1[%c1, %c0_4, %c0_5] : memref<4x64x1536xf32, #tpu.memory_space<vmem>>, vector<1x64x1536xf32>
    %5 = vector.shape_cast %4 : vector<1x64x1536xf32> to vector<64x1536xf32>
    %cst_6 = arith.constant dense<0.000000e+00> : vector<16x1536xf32>
    %6 = tpu.matmul %0, %5, %cst_6 {dimension_numbers = #tpu.dot_dimension_numbers<[1], [0], [0], [1], [0, 0, 1, 1], [], []>} : vector<16x64xf32>, vector<64x1536xf32>, vector<16x1536xf32> -> vector<16x1536xf32>
    %c2 = arith.constant 2 : index
    %c0_7 = arith.constant 0 : index
    %c0_8 = arith.constant 0 : index
    %7 = vector.load %arg1[%c2, %c0_7, %c0_8] : memref<4x64x1536xf32, #tpu.memory_space<vmem>>, vector<1x64x1536xf32>
    %8 = vector.shape_cast %7 : vector<1x64x1536xf32> to vector<64x1536xf32>
    %cst_9 = arith.constant dense<0.000000e+00> : vector<16x1536xf32>
    %9 = tpu.matmul %0, %8, %cst_9 {dimension_numbers = #tpu.dot_dimension_numbers<[1], [0], [0], [1], [0, 0, 1, 1], [], []>} : vector<16x64xf32>, vector<64x1536xf32>, vector<16x1536xf32> -> vector<16x1536xf32>
    %c3 = arith.constant 3 : index
    %c0_10 = arith.constant 0 : index
    %c0_11 = arith.constant 0 : index
    %10 = vector.load %arg1[%c3, %c0_10, %c0_11] : memref<4x64x1536xf32, #tpu.memory_space<vmem>>, vector<1x64x1536xf32>
    %11 = vector.shape_cast %10 : vector<1x64x1536xf32> to vector<64x1536xf32>
    %cst_12 = arith.constant dense<0.000000e+00> : vector<16x1536xf32>
    %12 = tpu.matmul %0, %11, %cst_12 {dimension_numbers = #tpu.dot_dimension_numbers<[1], [0], [0], [1], [0, 0, 1, 1], [], []>} : vector<16x64xf32>, vector<64x1536xf32>, vector<16x1536xf32> -> vector<16x1536xf32>
    %13 = arith.maximumf %3, %6 : vector<16x1536xf32>
    %14 = arith.maximumf %9, %12 : vector<16x1536xf32>
    %15 = arith.maximumf %13, %14 : vector<16x1536xf32>
    %c0_13 = arith.constant 0 : index
    %c0_14 = arith.constant 0 : index
    %16 = vector.load %arg3[%c0_13, %c0_14] : memref<16x1xf32, #tpu.memory_space<vmem>>, vector<16x1xf32>
    %17 = vector.broadcast %16 : vector<16x1xf32> to vector<16x1536xf32>
    %18 = arith.addf %15, %17 : vector<16x1536xf32>
    %cst_15 = arith.constant 0.000000e+00 : f32
    %19 = vector.broadcast %cst_15 : f32 to vector<16x1536xf32>
    %20 = arith.maximumf %18, %19 : vector<16x1536xf32>
    %c0_16 = arith.constant 0 : index
    %c0_17 = arith.constant 0 : index
    %21 = vector.load %arg4[%c0_16, %c0_17] : memref<16x1536xf32, #tpu.memory_space<vmem>>, vector<16x1536xf32>
    tpu.vector_store %arg4[%c0_16, %c0_17], %20 {strides = array<i32>} : memref<16x1536xf32, #tpu.memory_space<vmem>>, vector<16x1536xf32>,
    return
  }
  func.func @transform_0(%arg0: i32) -> (i32, i32, i32) {
    %c0_i32 = arith.constant 0 : i32
    %c0_i32_0 = arith.constant 0 : i32
    %c0_i32_1 = arith.constant 0 : i32
    return %c0_i32, %c0_i32_0, %arg0 : i32, i32, i32
  }
  func.func @transform_1(%arg0: i32) -> (i32, i32) {
    %c0_i32 = arith.constant 0 : i32
    %c0_i32_0 = arith.constant 0 : i32
    %c0_i32_1 = arith.constant 0 : i32
    return %c0_i32, %c0_i32_0 : i32, i32
  }
  func.func @transform_2(%arg0: i32) -> (i32, i32) {
    %c0_i32 = arith.constant 0 : i32
    %c0_i32_0 = arith.constant 0 : i32
    %c0_i32_1 = arith.constant 0 : i32
    return %c0_i32, %c0_i32_0 : i32, i32
  }
  func.func @transform_3(%arg0: i32) -> (i32, i32) {
    %c0_i32 = arith.constant 0 : i32
    %c0_i32_0 = arith.constant 0 : i32
    return %c0_i32, %arg0 : i32, i32
  }
}

module attributes {stable_mosaic.version = 11 : i64} {
  func.func @_conv_pool_kernel(%arg0: i32, %arg1: memref<4x256x256xf32, #tpu.memory_space<vmem>>, %arg2: memref<32x256xf32, #tpu.memory_space<vmem>>, %arg3: memref<32x1xf32, #tpu.memory_space<vmem>>, %arg4: memref<32x256xf32, #tpu.memory_space<vmem>>) attributes {dimension_semantics = [#tpu.dimension_semantics<parallel>], iteration_bounds = array<i64: 1>, scalar_prefetch = 0 : i64, scratch_operands = 0 : i64, tpu.core_type = #tpu.core_type<tc>, window_params = [{transform_indices = @transform_0, window_bounds = array<i64: 4, 256, 256>}, {pipeline_mode = #tpu.pipeline_mode<synchronous>, transform_indices = @transform_1, window_bounds = array<i64: 32, 256>}, {pipeline_mode = #tpu.pipeline_mode<synchronous>, transform_indices = @transform_2, window_bounds = array<i64: 32, 1>}, {transform_indices = @transform_3, window_bounds = array<i64: 32, 256>}]} {
    %c0 = arith.constant 0 : index
    %c0_0 = arith.constant 0 : index
    %0 = vector.load %arg2[%c0, %c0_0] : memref<32x256xf32, #tpu.memory_space<vmem>>, vector<32x256xf32>
    %c0_1 = arith.constant 0 : index
    %c0_2 = arith.constant 0 : index
    %c0_3 = arith.constant 0 : index
    %1 = vector.load %arg1[%c0_1, %c0_2, %c0_3] : memref<4x256x256xf32, #tpu.memory_space<vmem>>, vector<1x256x256xf32>
    %2 = vector.shape_cast %1 : vector<1x256x256xf32> to vector<256x256xf32>
    %cst = arith.constant dense<0.000000e+00> : vector<32x256xf32>
    %3 = tpu.matmul %0, %2, %cst {dimension_numbers = #tpu.dot_dimension_numbers<[1], [0], [0], [1], [0, 0, 1, 1], [], []>} : vector<32x256xf32>, vector<256x256xf32>, vector<32x256xf32> -> vector<32x256xf32>
    %c1 = arith.constant 1 : index
    %c0_4 = arith.constant 0 : index
    %c0_5 = arith.constant 0 : index
    %4 = vector.load %arg1[%c1, %c0_4, %c0_5] : memref<4x256x256xf32, #tpu.memory_space<vmem>>, vector<1x256x256xf32>
    %5 = vector.shape_cast %4 : vector<1x256x256xf32> to vector<256x256xf32>
    %cst_6 = arith.constant dense<0.000000e+00> : vector<32x256xf32>
    %6 = tpu.matmul %0, %5, %cst_6 {dimension_numbers = #tpu.dot_dimension_numbers<[1], [0], [0], [1], [0, 0, 1, 1], [], []>} : vector<32x256xf32>, vector<256x256xf32>, vector<32x256xf32> -> vector<32x256xf32>
    %c2 = arith.constant 2 : index
    %c0_7 = arith.constant 0 : index
    %c0_8 = arith.constant 0 : index
    %7 = vector.load %arg1[%c2, %c0_7, %c0_8] : memref<4x256x256xf32, #tpu.memory_space<vmem>>, vector<1x256x256xf32>
    %8 = vector.shape_cast %7 : vector<1x256x256xf32> to vector<256x256xf32>
    %cst_9 = arith.constant dense<0.000000e+00> : vector<32x256xf32>
    %9 = tpu.matmul %0, %8, %cst_9 {dimension_numbers = #tpu.dot_dimension_numbers<[1], [0], [0], [1], [0, 0, 1, 1], [], []>} : vector<32x256xf32>, vector<256x256xf32>, vector<32x256xf32> -> vector<32x256xf32>
    %c3 = arith.constant 3 : index
    %c0_10 = arith.constant 0 : index
    %c0_11 = arith.constant 0 : index
    %10 = vector.load %arg1[%c3, %c0_10, %c0_11] : memref<4x256x256xf32, #tpu.memory_space<vmem>>, vector<1x256x256xf32>
    %11 = vector.shape_cast %10 : vector<1x256x256xf32> to vector<256x256xf32>
    %cst_12 = arith.constant dense<0.000000e+00> : vector<32x256xf32>
    %12 = tpu.matmul %0, %11, %cst_12 {dimension_numbers = #tpu.dot_dimension_numbers<[1], [0], [0], [1], [0, 0, 1, 1], [], []>} : vector<32x256xf32>, vector<256x256xf32>, vector<32x256xf32> -> vector<32x256xf32>
    %13 = arith.maximumf %3, %6 : vector<32x256xf32>
    %14 = arith.maximumf %9, %12 : vector<32x256xf32>
    %15 = arith.maximumf %13, %14 : vector<32x256xf32>
    %c0_13 = arith.constant 0 : index
    %c0_14 = arith.constant 0 : index
    %16 = vector.load %arg3[%c0_13, %c0_14] : memref<32x1xf32, #tpu.memory_space<vmem>>, vector<32x1xf32>
    %17 = vector.broadcast %16 : vector<32x1xf32> to vector<32x256xf32>
    %18 = arith.addf %15, %17 : vector<32x256xf32>
    %cst_15 = arith.constant 0.000000e+00 : f32
    %19 = vector.broadcast %cst_15 : f32 to vector<32x256xf32>
    %20 = arith.maximumf %18, %19 : vector<32x256xf32>
    %c0_16 = arith.constant 0 : index
    %c0_17 = arith.constant 0 : index
    %21 = vector.load %arg4[%c0_16, %c0_17] : memref<32x256xf32, #tpu.memory_space<vmem>>, vector<32x256xf32>
    tpu.vector_store %arg4[%c0_16, %c0_17], %20 {strides = array<i32>} : memref<32x256xf32, #tpu.memory_space<vmem>>, vector<32x256xf32>,
    return
  }
  func.func @transform_0(%arg0: i32) -> (i32, i32, i32) {
    %c0_i32 = arith.constant 0 : i32
    %c0_i32_0 = arith.constant 0 : i32
    %c0_i32_1 = arith.constant 0 : i32
    return %c0_i32, %c0_i32_0, %arg0 : i32, i32, i32
  }
  func.func @transform_1(%arg0: i32) -> (i32, i32) {
    %c0_i32 = arith.constant 0 : i32
    %c0_i32_0 = arith.constant 0 : i32
    %c0_i32_1 = arith.constant 0 : i32
    return %c0_i32, %c0_i32_0 : i32, i32
  }
  func.func @transform_2(%arg0: i32) -> (i32, i32) {
    %c0_i32 = arith.constant 0 : i32
    %c0_i32_0 = arith.constant 0 : i32
    %c0_i32_1 = arith.constant 0 : i32
    return %c0_i32, %c0_i32_0 : i32, i32
  }
  func.func @transform_3(%arg0: i32) -> (i32, i32) {
    %c0_i32 = arith.constant 0 : i32
    %c0_i32_0 = arith.constant 0 : i32
    return %c0_i32, %arg0 : i32, i32
  }
}

module attributes {stable_mosaic.version = 11 : i64} {
  func.func @_conv_pool_kernel(%arg0: i32, %arg1: memref<4x288x128xf32, #tpu.memory_space<vmem>>, %arg2: memref<16x288xf32, #tpu.memory_space<vmem>>, %arg3: memref<16x1xf32, #tpu.memory_space<vmem>>, %arg4: memref<16x128xf32, #tpu.memory_space<vmem>>) attributes {dimension_semantics = [#tpu.dimension_semantics<parallel>], iteration_bounds = array<i64: 1>, scalar_prefetch = 0 : i64, scratch_operands = 0 : i64, tpu.core_type = #tpu.core_type<tc>, window_params = [{transform_indices = @transform_0, window_bounds = array<i64: 4, 288, 128>}, {pipeline_mode = #tpu.pipeline_mode<synchronous>, transform_indices = @transform_1, window_bounds = array<i64: 16, 288>}, {pipeline_mode = #tpu.pipeline_mode<synchronous>, transform_indices = @transform_2, window_bounds = array<i64: 16, 1>}, {transform_indices = @transform_3, window_bounds = array<i64: 16, 128>}]} {
    %c0 = arith.constant 0 : index
    %c0_0 = arith.constant 0 : index
    %0 = vector.load %arg2[%c0, %c0_0] : memref<16x288xf32, #tpu.memory_space<vmem>>, vector<16x288xf32>
    %c0_1 = arith.constant 0 : index
    %c0_2 = arith.constant 0 : index
    %c0_3 = arith.constant 0 : index
    %1 = vector.load %arg1[%c0_1, %c0_2, %c0_3] : memref<4x288x128xf32, #tpu.memory_space<vmem>>, vector<1x288x128xf32>
    %2 = vector.shape_cast %1 : vector<1x288x128xf32> to vector<288x128xf32>
    %cst = arith.constant dense<0.000000e+00> : vector<16x128xf32>
    %3 = tpu.matmul %0, %2, %cst {dimension_numbers = #tpu.dot_dimension_numbers<[1], [0], [0], [1], [0, 0, 1, 1], [], []>} : vector<16x288xf32>, vector<288x128xf32>, vector<16x128xf32> -> vector<16x128xf32>
    %c1 = arith.constant 1 : index
    %c0_4 = arith.constant 0 : index
    %c0_5 = arith.constant 0 : index
    %4 = vector.load %arg1[%c1, %c0_4, %c0_5] : memref<4x288x128xf32, #tpu.memory_space<vmem>>, vector<1x288x128xf32>
    %5 = vector.shape_cast %4 : vector<1x288x128xf32> to vector<288x128xf32>
    %cst_6 = arith.constant dense<0.000000e+00> : vector<16x128xf32>
    %6 = tpu.matmul %0, %5, %cst_6 {dimension_numbers = #tpu.dot_dimension_numbers<[1], [0], [0], [1], [0, 0, 1, 1], [], []>} : vector<16x288xf32>, vector<288x128xf32>, vector<16x128xf32> -> vector<16x128xf32>
    %c2 = arith.constant 2 : index
    %c0_7 = arith.constant 0 : index
    %c0_8 = arith.constant 0 : index
    %7 = vector.load %arg1[%c2, %c0_7, %c0_8] : memref<4x288x128xf32, #tpu.memory_space<vmem>>, vector<1x288x128xf32>
    %8 = vector.shape_cast %7 : vector<1x288x128xf32> to vector<288x128xf32>
    %cst_9 = arith.constant dense<0.000000e+00> : vector<16x128xf32>
    %9 = tpu.matmul %0, %8, %cst_9 {dimension_numbers = #tpu.dot_dimension_numbers<[1], [0], [0], [1], [0, 0, 1, 1], [], []>} : vector<16x288xf32>, vector<288x128xf32>, vector<16x128xf32> -> vector<16x128xf32>
    %c3 = arith.constant 3 : index
    %c0_10 = arith.constant 0 : index
    %c0_11 = arith.constant 0 : index
    %10 = vector.load %arg1[%c3, %c0_10, %c0_11] : memref<4x288x128xf32, #tpu.memory_space<vmem>>, vector<1x288x128xf32>
    %11 = vector.shape_cast %10 : vector<1x288x128xf32> to vector<288x128xf32>
    %cst_12 = arith.constant dense<0.000000e+00> : vector<16x128xf32>
    %12 = tpu.matmul %0, %11, %cst_12 {dimension_numbers = #tpu.dot_dimension_numbers<[1], [0], [0], [1], [0, 0, 1, 1], [], []>} : vector<16x288xf32>, vector<288x128xf32>, vector<16x128xf32> -> vector<16x128xf32>
    %13 = arith.maximumf %3, %6 : vector<16x128xf32>
    %14 = arith.maximumf %9, %12 : vector<16x128xf32>
    %15 = arith.maximumf %13, %14 : vector<16x128xf32>
    %c0_13 = arith.constant 0 : index
    %c0_14 = arith.constant 0 : index
    %16 = vector.load %arg3[%c0_13, %c0_14] : memref<16x1xf32, #tpu.memory_space<vmem>>, vector<16x1xf32>
    %17 = vector.broadcast %16 : vector<16x1xf32> to vector<16x128xf32>
    %18 = arith.addf %15, %17 : vector<16x128xf32>
    %cst_15 = arith.constant 0.000000e+00 : f32
    %19 = vector.broadcast %cst_15 : f32 to vector<16x128xf32>
    %20 = arith.maximumf %18, %19 : vector<16x128xf32>
    %c0_16 = arith.constant 0 : index
    %c0_17 = arith.constant 0 : index
    %21 = vector.load %arg4[%c0_16, %c0_17] : memref<16x128xf32, #tpu.memory_space<vmem>>, vector<16x128xf32>
    tpu.vector_store %arg4[%c0_16, %c0_17], %20 {strides = array<i32>} : memref<16x128xf32, #tpu.memory_space<vmem>>, vector<16x128xf32>,
    return
  }
  func.func @transform_0(%arg0: i32) -> (i32, i32, i32) {
    %c0_i32 = arith.constant 0 : i32
    %c0_i32_0 = arith.constant 0 : i32
    %c0_i32_1 = arith.constant 0 : i32
    return %c0_i32, %c0_i32_0, %arg0 : i32, i32, i32
  }
  func.func @transform_1(%arg0: i32) -> (i32, i32) {
    %c0_i32 = arith.constant 0 : i32
    %c0_i32_0 = arith.constant 0 : i32
    %c0_i32_1 = arith.constant 0 : i32
    return %c0_i32, %c0_i32_0 : i32, i32
  }
  func.func @transform_2(%arg0: i32) -> (i32, i32) {
    %c0_i32 = arith.constant 0 : i32
    %c0_i32_0 = arith.constant 0 : i32
    %c0_i32_1 = arith.constant 0 : i32
    return %c0_i32, %c0_i32_0 : i32, i32
  }
  func.func @transform_3(%arg0: i32) -> (i32, i32) {
    %c0_i32 = arith.constant 0 : i32
    %c0_i32_0 = arith.constant 0 : i32
    return %c0_i32, %arg0 : i32, i32
  }
}

module attributes {stable_mosaic.version = 11 : i64} {
  func.func @_fc_head_kernel(%arg0: i32, %arg1: memref<2x288xf32, #tpu.memory_space<vmem>>, %arg2: memref<288x32xf32, #tpu.memory_space<vmem>>, %arg3: memref<1x32xf32, #tpu.memory_space<vmem>>, %arg4: memref<32x2xf32, #tpu.memory_space<vmem>>, %arg5: memref<1x2xf32, #tpu.memory_space<vmem>>, %arg6: memref<2x2xf32, #tpu.memory_space<vmem>>) attributes {dimension_semantics = [#tpu.dimension_semantics<arbitrary>], iteration_bounds = array<i64: 1>, scalar_prefetch = 0 : i64, scratch_operands = 0 : i64, tpu.core_type = #tpu.core_type<tc>, window_params = [{pipeline_mode = #tpu.pipeline_mode<synchronous>, transform_indices = @transform_0, window_bounds = array<i64: 2, 288>}, {pipeline_mode = #tpu.pipeline_mode<synchronous>, transform_indices = @transform_1, window_bounds = array<i64: 288, 32>}, {pipeline_mode = #tpu.pipeline_mode<synchronous>, transform_indices = @transform_2, window_bounds = array<i64: 1, 32>}, {pipeline_mode = #tpu.pipeline_mode<synchronous>, transform_indices = @transform_3, window_bounds = array<i64: 32, 2>}, {pipeline_mode = #tpu.pipeline_mode<synchronous>, transform_indices = @transform_4, window_bounds = array<i64: 1, 2>}, {pipeline_mode = #tpu.pipeline_mode<synchronous>, transform_indices = @transform_5, window_bounds = array<i64: 2, 2>}]} {
    %c0 = arith.constant 0 : index
    %c0_0 = arith.constant 0 : index
    %0 = vector.load %arg1[%c0, %c0_0] : memref<2x288xf32, #tpu.memory_space<vmem>>, vector<2x288xf32>
    %c0_1 = arith.constant 0 : index
    %c0_2 = arith.constant 0 : index
    %1 = vector.load %arg2[%c0_1, %c0_2] : memref<288x32xf32, #tpu.memory_space<vmem>>, vector<288x32xf32>
    %cst = arith.constant dense<0.000000e+00> : vector<2x32xf32>
    %2 = tpu.matmul %0, %1, %cst {dimension_numbers = #tpu.dot_dimension_numbers<[1], [0], [0], [1], [0, 0, 1, 1], [], []>} : vector<2x288xf32>, vector<288x32xf32>, vector<2x32xf32> -> vector<2x32xf32>
    %c0_3 = arith.constant 0 : index
    %c0_4 = arith.constant 0 : index
    %3 = vector.load %arg3[%c0_3, %c0_4] : memref<1x32xf32, #tpu.memory_space<vmem>>, vector<1x32xf32>
    %4 = vector.broadcast %3 : vector<1x32xf32> to vector<2x32xf32>
    %5 = arith.addf %2, %4 : vector<2x32xf32>
    %cst_5 = arith.constant 0.000000e+00 : f32
    %6 = vector.broadcast %cst_5 : f32 to vector<2x32xf32>
    %7 = arith.maximumf %5, %6 : vector<2x32xf32>
    %c0_6 = arith.constant 0 : index
    %c0_7 = arith.constant 0 : index
    %8 = vector.load %arg4[%c0_6, %c0_7] : memref<32x2xf32, #tpu.memory_space<vmem>>, vector<32x2xf32>
    %cst_8 = arith.constant dense<0.000000e+00> : vector<2x2xf32>
    %9 = tpu.matmul %7, %8, %cst_8 {dimension_numbers = #tpu.dot_dimension_numbers<[1], [0], [0], [1], [0, 0, 1, 1], [], []>} : vector<2x32xf32>, vector<32x2xf32>, vector<2x2xf32> -> vector<2x2xf32>
    %c0_9 = arith.constant 0 : index
    %c0_10 = arith.constant 0 : index
    %10 = vector.load %arg5[%c0_9, %c0_10] : memref<1x2xf32, #tpu.memory_space<vmem>>, vector<1x2xf32>
    %11 = vector.broadcast %10 : vector<1x2xf32> to vector<2x2xf32>
    %12 = arith.addf %9, %11 : vector<2x2xf32>
    %c0_11 = arith.constant 0 : index
    %c0_12 = arith.constant 0 : index
    %13 = vector.load %arg6[%c0_11, %c0_12] : memref<2x2xf32, #tpu.memory_space<vmem>>, vector<2x2xf32>
    tpu.vector_store %arg6[%c0_11, %c0_12], %12 {strides = array<i32>} : memref<2x2xf32, #tpu.memory_space<vmem>>, vector<2x2xf32>,
    return
  }
  func.func @transform_0(%arg0: i32) -> (i32, i32) {
    %c0_i32 = arith.constant 0 : i32
    %c0_i32_0 = arith.constant 0 : i32
    %c0_i32_1 = arith.constant 0 : i32
    return %c0_i32, %c0_i32_0 : i32, i32
  }
  func.func @transform_1(%arg0: i32) -> (i32, i32) {
    %c0_i32 = arith.constant 0 : i32
    %c0_i32_0 = arith.constant 0 : i32
    %c0_i32_1 = arith.constant 0 : i32
    return %c0_i32, %c0_i32_0 : i32, i32
  }
  func.func @transform_2(%arg0: i32) -> (i32, i32) {
    %c0_i32 = arith.constant 0 : i32
    %c0_i32_0 = arith.constant 0 : i32
    %c0_i32_1 = arith.constant 0 : i32
    return %c0_i32, %c0_i32_0 : i32, i32
  }
  func.func @transform_3(%arg0: i32) -> (i32, i32) {
    %c0_i32 = arith.constant 0 : i32
    %c0_i32_0 = arith.constant 0 : i32
    %c0_i32_1 = arith.constant 0 : i32
    return %c0_i32, %c0_i32_0 : i32, i32
  }
  func.func @transform_4(%arg0: i32) -> (i32, i32) {
    %c0_i32 = arith.constant 0 : i32
    %c0_i32_0 = arith.constant 0 : i32
    %c0_i32_1 = arith.constant 0 : i32
    return %c0_i32, %c0_i32_0 : i32, i32
  }
  func.func @transform_5(%arg0: i32) -> (i32, i32) {
    %c0_i32 = arith.constant 0 : i32
    %c0_i32_0 = arith.constant 0 : i32
    %c0_i32_1 = arith.constant 0 : i32
    return %c0_i32, %c0_i32_0 : i32, i32
  }
}

</mosaic_0001>

<llo_original>
// kernel: dqn_forward.4
$region0: #{dqn_forward.4}
  #allocation0 [shape = 'u32[]', space=smem, size = 0x4, offset = 0x4, fixed_abs, tag = 'smem constant byte address 0x4 - core index']
  #allocation1 [shape = 'u32[144,128]{1,0:T(1,128)}', space=vmem, size = 0x12000, scoped, tag = 'internal scratch']
  %s0 = inlined_call_operand.vmem [shape: f32[4,64,4608], index: 0, kind: input, shape index: {}]
  %s1 = inlined_call_operand.vmem [shape: f32[16,64], index: 1, kind: input, shape index: {}]
  %s2 = inlined_call_operand.vmem [shape: f32[16,1], index: 2, kind: input, shape index: {}]
  %s3 = inlined_call_operand.vmem [shape: f32[16,4608], index: 3, kind: output, shape index: {}]
  %s4 = sld [smem:[#allocation0]]
  $region87: #{dqn_forward.4} parent=0
    _
  %s6 = ssub.s32 1, %s4
  %s7 = scalar_select 0, %s6, %s4
  $region1: #{dqn_forward.4} parent=0
    #allocation2 [shape = 'u8[3145728]{0}', space=vmem, size = 0x300000, scoped, tag = 'input window, operand 0']
    #allocation3 [shape = 'u8[196608]{0}', space=vmem, size = 0x30000, scoped, tag = 'output window, operand 0']
    loop: start=0, step=1, limit=5
    $region2: #{dqn_forward.4} parent=1 // loop_pre_header
      _
    $region3: #{dqn_forward.4} parent=1 // loop_header
      %s9 = sphi 0, %s13
      %p10 = scmp.ge.s32.totalorder %s9, 5
      %s19 = sphi 0, %s21
      %s22 = sphi 0, %s19
      %s23 = sphi 0, %s22
      %s39 = sphi 0, %s23
      %s43 = sphi 0, %s43
      %s45 = sphi 0, %s43
      %s46 = sphi 0, %s45
      %s60 = sphi 0, %s46
      %s64 = sphi 0, %s64
      %s66 = sphi 0, %s64
      %s67 = sphi 0, %s66
      %s81 = sphi 0, %s67
      %s87 = sphi 0, %s89
      %s90 = sphi 0, %s87
      %s91 = sphi 0, %s90
      %s107 = sphi 0, %s91
    $region4: #{dqn_forward.4} parent=1 // loop_header_branch
      %12 = sbr.rel (%p10) target = $region8
    $region5: #{dqn_forward.4} parent=1 // loop_body
      %s14 = ssub.s32 %s9, 1
      %s15 = ssub.s32 %s9, 2
      %s16 = sadd.s32 %s9, 1
      %s17 = ssub.s32 %s9, %s16
      %p18 = scmp.eq.s32.totalorder %s17, 0
      %s20 = sadd.s32 %s19, 1
      %s21 = scalar_select %p18, %s19, %s20
      %p24 = pneg %p18
      %p25 = scmp.eq.s32.totalorder %s9, 2
      %p26 = por %p24, %p25
      %p27 = scmp.ne.s32.totalorder %s19, %s22
      %p28 = scmp.eq.s32.totalorder %s9, 0
      %p29 = por %p27, %p28
      %p30 = scmp.ne.s32.totalorder %s19, %s22
      %p31 = scmp.eq.s32.totalorder %s14, 2
      %p32 = por %p30, %p31
      %p33 = scmp.ne.s32.totalorder %s22, %s23
      %p34 = scmp.eq.s32.totalorder %s14, 0
      %p35 = por %p33, %p34
      %p36 = scmp.ne.s32.totalorder %s22, %s23
      %p37 = scmp.eq.s32.totalorder %s15, 2
      %p38 = por %p36, %p37
      %p40 = scmp.ne.s32.totalorder %s23, %s39
      %p41 = scmp.eq.s32.totalorder %s15, 0
      %p42 = por %p40, %p41
      %s44 = sadd.s32 %s43, 1
      %p47 = scmp.eq.s32.totalorder %s9, 2
      %p48 = scmp.ne.s32.totalorder %s43, %s45
      %p49 = scmp.eq.s32.totalorder %s9, 0
      %p50 = por %p48, %p49
      %p51 = scmp.ne.s32.totalorder %s43, %s45
      %p52 = scmp.eq.s32.totalorder %s14, 2
      %p53 = por %p51, %p52
      %p54 = scmp.ne.s32.totalorder %s45, %s46
      %p55 = scmp.eq.s32.totalorder %s14, 0
      %p56 = por %p54, %p55
      %p57 = scmp.ne.s32.totalorder %s45, %s46
      %p58 = scmp.eq.s32.totalorder %s15, 2
      %p59 = por %p57, %p58
      %p61 = scmp.ne.s32.totalorder %s46, %s60
      %p62 = scmp.eq.s32.totalorder %s15, 0
      %p63 = por %p61, %p62
      %s65 = sadd.s32 %s64, 1
      %p68 = scmp.eq.s32.totalorder %s9, 2
      %p69 = scmp.ne.s32.totalorder %s64, %s66
      %p70 = scmp.eq.s32.totalorder %s9, 0
      %p71 = por %p69, %p70
      %p72 = scmp.ne.s32.totalorder %s64, %s66
      %p73 = scmp.eq.s32.totalorder %s14, 2
      %p74 = por %p72, %p73
      %p75 = scmp.ne.s32.totalorder %s66, %s67
      %p76 = scmp.eq.s32.totalorder %s14, 0
      %p77 = por %p75, %p76
      %p78 = scmp.ne.s32.totalorder %s66, %s67
      %p79 = scmp.eq.s32.totalorder %s15, 2
      %p80 = por %p78, %p79
      %p82 = scmp.ne.s32.totalorder %s67, %s81
      %p83 = scmp.eq.s32.totalorder %s15, 0
      %p84 = por %p82, %p83
      %s85 = ssub.s32 %s9, %s16
      %p86 = scmp.eq.s32.totalorder %s85, 0
      %s88 = sadd.s32 %s87, 1
      %s89 = scalar_select %p86, %s87, %s88
      %p92 = pneg %p86
      %p93 = scmp.eq.s32.totalorder %s9, 2
      %p94 = por %p92, %p93
      %p95 = scmp.ne.s32.totalorder %s87, %s90
      %p96 = scmp.eq.s32.totalorder %s9, 0
      %p97 = por %p95, %p96
      %p98 = scmp.ne.s32.totalorder %s87, %s90
      %p99 = scmp.eq.s32.totalorder %s14, 2
      %p100 = por %p98, %p99
      %p101 = scmp.ne.s32.totalorder %s90, %s91
      %p102 = scmp.eq.s32.totalorder %s14, 0
      %p103 = por %p101, %p102
      %p104 = scmp.ne.s32.totalorder %s90, %s91
      %p105 = scmp.eq.s32.totalorder %s15, 2
      %p106 = por %p104, %p105
      %p108 = scmp.ne.s32.totalorder %s91, %s107
      %p109 = scmp.eq.s32.totalorder %s15, 0
      %p110 = por %p108, %p109
      %p111 = scmp.le.s32.totalorder 1, %s9
      %p112 = scmp.lt.s32.totalorder %s9, 4
      %p113 = pnand %p111, %p112
      %p114 = pneg %p113
      // Predicated region
      $region9: #{dqn_forward.4} parent=5 // pred_check
        _
      $region10: #{dqn_forward.4} parent=5 // pred_check_branch
        %116 = sbr.rel (%p113) target = $region12
      $region11: #{dqn_forward.4} parent=5 // pred_region
        %s117 = ssub.s32 %s9, 1
        // Predicated region
        $region13: #{dqn_forward.4} parent=11 // pred_check
          %p118 = pneg %p56
        $region14: #{dqn_forward.4} parent=11 // pred_check_branch
          %120 = sbr.rel (%p118) target = $region16
        $region15: #{dqn_forward.4} parent=11 // pred_region
          _
        $region16: #{dqn_forward.4} parent=11 // pred_fallthru
          _
        // Predicated region
        $region17: #{dqn_forward.4} parent=11 // pred_check
          %p121 = pneg %p77
        $region18: #{dqn_forward.4} parent=11 // pred_check_branch
          %123 = sbr.rel (%p121) target = $region20
        $region19: #{dqn_forward.4} parent=11 // pred_region
          _
        $region20: #{dqn_forward.4} parent=11 // pred_fallthru
          _
      $region12: #{dqn_forward.4} parent=5 // pred_fallthru
        _
      %p124 = scmp.lt.s32.totalorder %s9, 3
      // Predicated region
      $region21: #{dqn_forward.4} parent=5 // pred_check
        %p125 = pneg %p124
      $region22: #{dqn_forward.4} parent=5 // pred_check_branch
        %127 = sbr.rel (%p125) target = $region24
      $region23: #{dqn_forward.4} parent=5 // pred_region
        // Predicated region
        $region25: #{dqn_forward.4} parent=23 // pred_check
          %p128 = pneg %p29
        $region26: #{dqn_forward.4} parent=23 // pred_check_branch
          %130 = sbr.rel (%p128) target = $region28
        $region27: #{dqn_forward.4} parent=23 // pred_region
          %s131 = sand.u32 %s19, 1
          %s132 = sand.u32 %s19, 1
          %s133 = smul.addr %s132, 3072
          %s134 = scalar_lea.vmem [#allocation2], %s133
          %s135 = smul.u32 12, %s9
          %s136 = smul.addr %s135, 8
          %s137 = scalar_lea.vmem %s0, %s136
          // Predicated region
          $region29: #{dqn_forward.4} parent=27 // pred_check
            _
          $region30: #{dqn_forward.4} parent=27 // pred_check_branch
            %139 = sbr.rel (0) target = $region32
          $region31: #{dqn_forward.4} parent=27 // pred_region
            // Predicated region
            $region33: #{dqn_forward.4} parent=31 // pred_check
              _
            $region34: #{dqn_forward.4} parent=31 // pred_check_branch
              %141 = sbr.rel (0) target = $region36
            $region35: #{dqn_forward.4} parent=31 // pred_region
              loop: start=0, step=1, limit=1
              $region37: #{dqn_forward.4} parent=35 // loop_pre_header
                _
              $region38: #{dqn_forward.4} parent=35 // loop_header
                %s143 = sphi 0, %s147
                %p144 = scmp.ge.s32.totalorder %s143, 1
                %s148 = sphi %s137, %s137
                %s149 = sphi %s134, %s134
              $region39: #{dqn_forward.4} parent=35 // loop_header_branch
                %146 = sbr.rel (%p144) target = $region43
              $region40: #{dqn_forward.4} parent=35 // loop_body
                %v150 = vld [vmem:[%s148] sm:$0xff]
                %151 = vst [vmem:[%s149] sm:$0xff] %v150
                %v152 = vld [vmem:[%s148 + $0x8] sm:$0xff]
                %153 = vst [vmem:[%s149 + $0x8] sm:$0xff] %v152
                %v154 = vld [vmem:[%s148 + $0x10] sm:$0xff]
                %155 = vst [vmem:[%s149 + $0x10] sm:$0xff] %v154
                %v156 = vld [vmem:[%s148 + $0x18] sm:$0xff]
                %157 = vst [vmem:[%s149 + $0x18] sm:$0xff] %v156
                %v158 = vld [vmem:[%s148 + $0x20] sm:$0xff]
                %159 = vst [vmem:[%s149 + $0x20] sm:$0xff] %v158
                %v160 = vld [vmem:[%s148 + $0x28] sm:$0xff]
                %161 = vst [vmem:[%s149 + $0x28] sm:$0xff] %v160
                %v162 = vld [vmem:[%s148 + $0x30] sm:$0xff]
                %163 = vst [vmem:[%s149 + $0x30] sm:$0xff] %v162
                %v164 = vld [vmem:[%s148 + $0x38] sm:$0xff]
                %165 = vst [vmem:[%s149 + $0x38] sm:$0xff] %v164
                %v166 = vld [vmem:[%s148 + $0x40] sm:$0xff]
                %167 = vst [vmem:[%s149 + $0x40] sm:$0xff] %v166
                %v168 = vld [vmem:[%s148 + $0x48] sm:$0xff]
                %169 = vst [vmem:[%s149 + $0x48] sm:$0xff] %v168
                %v170 = vld [vmem:[%s148 + $0x50] sm:$0xff]
                %171 = vst [vmem:[%s149 + $0x50] sm:$0xff] %v170
                %v172 = vld [vmem:[%s148 + $0x58] sm:$0xff]
                %173 = vst [vmem:[%s149 + $0x58] sm:$0xff] %v172
                %v174 = vld [vmem:[%s148 + $0x120] sm:$0xff]
                %175 = vst [vmem:[%s149 + $0x60] sm:$0xff] %v174
                %v176 = vld [vmem:[%s148 + $0x128] sm:$0xff]
                %177 = vst [vmem:[%s149 + $0x68] sm:$0xff] %v176
                %v178 = vld [vmem:[%s148 + $0x130] sm:$0xff]
                %179 = vst [vmem:[%s149 + $0x70] sm:$0xff] %v178
                %v180 = vld [vmem:[%s148 + $0x138] sm:$0xff]
                %181 = vst [vmem:[%s149 + $0x78] sm:$0xff] %v180
                %v182 = vld [vmem:[%s148 + $0x140] sm:$0xff]
                %183 = vst [vmem:[%s149 + $0x80] sm:$0xff] %v182
                %v184 = vld [vmem:[%s148 + $0x148] sm:$0xff]
                %185 = vst [vmem:[%s149 + $0x88] sm:$0xff] %v184
                %v186 = vld [vmem:[%s148 + $0x150] sm:$0xff]
                %187 = vst [vmem:[%s149 + $0x90] sm:$0xff] %v186
                %v188 = vld [vmem:[%s148 + $0x158] sm:$0xff]
                %189 = vst [vmem:[%s149 + $0x98] sm:$0xff] %v188
                %v190 = vld [vmem:[%s148 + $0x160] sm:$0xff]
                %191 = vst [vmem:[%s149 + $0xa0] sm:$0xff] %v190
                %v192 = vld [vmem:[%s148 + $0x168] sm:$0xff]
                %193 = vst [vmem:[%s149 + $0xa8] sm:$0xff] %v192
                %v194 = vld [vmem:[%s148 + $0x170] sm:$0xff]
                %195 = vst [vmem:[%s149 + $0xb0] sm:$0xff] %v194
                %v196 = vld [vmem:[%s148 + $0x178] sm:$0xff]
                %197 = vst [vmem:[%s149 + $0xb8] sm:$0xff] %v196
                %v198 = vld [vmem:[%s148 + $0x240] sm:$0xff]
                %199 = vst [vmem:[%s149 + $0xc0] sm:$0xff] %v198
                %v200 = vld [vmem:[%s148 + $0x248] sm:$0xff]
                %201 = vst [vmem:[%s149 + $0xc8] sm:$0xff] %v200
                %v202 = vld [vmem:[%s148 + $0x250] sm:$0xff]
                %203 = vst [vmem:[%s149 + $0xd0] sm:$0xff] %v202
                %v204 = vld [vmem:[%s148 + $0x258] sm:$0xff]
                %205 = vst [vmem:[%s149 + $0xd8] sm:$0xff] %v204
                %v206 = vld [vmem:[%s148 + $0x260] sm:$0xff]
                %207 = vst [vmem:[%s149 + $0xe0] sm:$0xff] %v206
                %v208 = vld [vmem:[%s148 + $0x268] sm:$0xff]
                %209 = vst [vmem:[%s149 + $0xe8] sm:$0xff] %v208
                %v210 = vld [vmem:[%s148 + $0x270] sm:$0xff]
                %211 = vst [vmem:[%s149 + $0xf0] sm:$0xff] %v210
                %v212 = vld [vmem:[%s148 + $0x278] sm:$0xff]
                %213 = vst [vmem:[%s149 + $0xf8] sm:$0xff] %v212
                %v214 = vld [vmem:[%s148 + $0x280] sm:$0xff]
                %215 = vst [vmem:[%s149 + $0x100] sm:$0xff] %v214
                %v216 = vld [vmem:[%s148 + $0x288] sm:$0xff]
                %217 = vst [vmem:[%s149 + $0x108] sm:$0xff] %v216
                %v218 = vld [vmem:[%s148 + $0x290] sm:$0xff]
                %219 = vst [vmem:[%s149 + $0x110] sm:$0xff] %v218
                %v220 = vld [vmem:[%s148 + $0x298] sm:$0xff]
                %221 = vst [vmem:[%s149 + $0x118] sm:$0xff] %v220
                %v222 = vld [vmem:[%s148 + $0x360] sm:$0xff]
                %223 = vst [vmem:[%s149 + $0x120] sm:$0xff] %v222
                %v224 = vld [vmem:[%s148 + $0x368] sm:$0xff]
                %225 = vst [vmem:[%s149 + $0x128] sm:$0xff] %v224
                %v226 = vld [vmem:[%s148 + $0x370] sm:$0xff]
                %227 = vst [vmem:[%s149 + $0x130] sm:$0xff] %v226
                %v228 = vld [vmem:[%s148 + $0x378] sm:$0xff]
                %229 = vst [vmem:[%s149 + $0x138] sm:$0xff] %v228
                %v230 = vld [vmem:[%s148 + $0x380] sm:$0xff]
                %231 = vst [vmem:[%s149 + $0x140] sm:$0xff] %v230
                %v232 = vld [vmem:[%s148 + $0x388] sm:$0xff]
                %233 = vst [vmem:[%s149 + $0x148] sm:$0xff] %v232
                %v234 = vld [vmem:[%s148 + $0x390] sm:$0xff]
                %235 = vst [vmem:[%s149 + $0x150] sm:$0xff] %v234
                %v236 = vld [vmem:[%s148 + $0x398] sm:$0xff]
                %237 = vst [vmem:[%s149 + $0x158] sm:$0xff] %v236
                %v238 = vld [vmem:[%s148 + $0x3a0] sm:$0xff]
                %239 = vst [vmem:[%s149 + $0x160] sm:$0xff] %v238
                %v240 = vld [vmem:[%s148 + $0x3a8] sm:$0xff]
                %241 = vst [vmem:[%s149 + $0x168] sm:$0xff] %v240
                %v242 = vld [vmem:[%s148 + $0x3b0] sm:$0xff]
                %243 = vst [vmem:[%s149 + $0x170] sm:$0xff] %v242
                %v244 = vld [vmem:[%s148 + $0x3b8] sm:$0xff]
                %245 = vst [vmem:[%s149 + $0x178] sm:$0xff] %v244
                %v246 = vld [vmem:[%s148 + $0x480] sm:$0xff]
                %247 = vst [vmem:[%s149 + $0x180] sm:$0xff] %v246
                %v248 = vld [vmem:[%s148 + $0x488] sm:$0xff]
                %249 = vst [vmem:[%s149 + $0x188] sm:$0xff] %v248
                %v250 = vld [vmem:[%s148 + $0x490] sm:$0xff]
                %251 = vst [vmem:[%s149 + $0x190] sm:$0xff] %v250
                %v252 = vld [vmem:[%s148 + $0x498] sm:$0xff]
                %253 = vst [vmem:[%s149 + $0x198] sm:$0xff] %v252
                %v254 = vld [vmem:[%s148 + $0x4a0] sm:$0xff]
                %255 = vst [vmem:[%s149 + $0x1a0] sm:$0xff] %v254
                %v256 = vld [vmem:[%s148 + $0x4a8] sm:$0xff]
                %257 = vst [vmem:[%s149 + $0x1a8] sm:$0xff] %v256
                %v258 = vld [vmem:[%s148 + $0x4b0] sm:$0xff]
                %259 = vst [vmem:[%s149 + $0x1b0] sm:$0xff] %v258
                %v260 = vld [vmem:[%s148 + $0x4b8] sm:$0xff]
                %261 = vst [vmem:[%s149 + $0x1b8] sm:$0xff] %v260
                %v262 = vld [vmem:[%s148 + $0x4c0] sm:$0xff]
                %263 = vst [vmem:[%s149 + $0x1c0] sm:$0xff] %v262
                %v264 = vld [vmem:[%s148 + $0x4c8] sm:$0xff]
                %265 = vst [vmem:[%s149 + $0x1c8] sm:$0xff] %v264
                %v266 = vld [vmem:[%s148 + $0x4d0] sm:$0xff]
                %267 = vst [vmem:[%s149 + $0x1d0] sm:$0xff] %v266
                %v268 = vld [vmem:[%s148 + $0x4d8] sm:$0xff]
                %269 = vst [vmem:[%s149 + $0x1d8] sm:$0xff] %v268
                %v270 = vld [vmem:[%s148 + $0x5a0] sm:$0xff]
                %271 = vst [vmem:[%s149 + $0x1e0] sm:$0xff] %v270
                %v272 = vld [vmem:[%s148 + $0x5a8] sm:$0xff]
                %273 = vst [vmem:[%s149 + $0x1e8] sm:$0xff] %v272
                %v274 = vld [vmem:[%s148 + $0x5b0] sm:$0xff]
                %275 = vst [vmem:[%s149 + $0x1f0] sm:$0xff] %v274
                %v276 = vld [vmem:[%s148 + $0x5b8] sm:$0xff]
                %277 = vst [vmem:[%s149 + $0x1f8] sm:$0xff] %v276
                %v278 = vld [vmem:[%s148 + $0x5c0] sm:$0xff]
                %279 = vst [vmem:[%s149 + $0x200] sm:$0xff] %v278
                %v280 = vld [vmem:[%s148 + $0x5c8] sm:$0xff]
                %281 = vst [vmem:[%s149 + $0x208] sm:$0xff] %v280
                %v282 = vld [vmem:[%s148 + $0x5d0] sm:$0xff]
                %283 = vst [vmem:[%s149 + $0x210] sm:$0xff] %v282
                %v284 = vld [vmem:[%s148 + $0x5d8] sm:$0xff]
                %285 = vst [vmem:[%s149 + $0x218] sm:$0xff] %v284
                %v286 = vld [vmem:[%s148 + $0x5e0] sm:$0xff]
                %287 = vst [vmem:[%s149 + $0x220] sm:$0xff] %v286
                %v288 = vld [vmem:[%s148 + $0x5e8] sm:$0xff]
                %289 = vst [vmem:[%s149 + $0x228] sm:$0xff] %v288
                %v290 = vld [vmem:[%s148 + $0x5f0] sm:$0xff]
                %291 = vst [vmem:[%s149 + $0x230] sm:$0xff] %v290
                %v292 = vld [vmem:[%s148 + $0x5f8] sm:$0xff]
                %293 = vst [vmem:[%s149 + $0x238] sm:$0xff] %v292
                %v294 = vld [vmem:[%s148 + $0x6c0] sm:$0xff]
                %295 = vst [vmem:[%s149 + $0x240] sm:$0xff] %v294
                %v296 = vld [vmem:[%s148 + $0x6c8] sm:$0xff]
                %297 = vst [vmem:[%s149 + $0x248] sm:$0xff] %v296
                %v298 = vld [vmem:[%s148 + $0x6d0] sm:$0xff]
                %299 = vst [vmem:[%s149 + $0x250] sm:$0xff] %v298
                %v300 = vld [vmem:[%s148 + $0x6d8] sm:$0xff]
                %301 = vst [vmem:[%s149 + $0x258] sm:$0xff] %v300
                %v302 = vld [vmem:[%s148 + $0x6e0] sm:$0xff]
                %303 = vst [vmem:[%s149 + $0x260] sm:$0xff] %v302
                %v304 = vld [vmem:[%s148 + $0x6e8] sm:$0xff]
                %305 = vst [vmem:[%s149 + $0x268] sm:$0xff] %v304
                %v306 = vld [vmem:[%s148 + $0x6f0] sm:$0xff]
                %307 = vst [vmem:[%s149 + $0x270] sm:$0xff] %v306
                %v308 = vld [vmem:[%s148 + $0x6f8] sm:$0xff]
                %309 = vst [vmem:[%s149 + $0x278] sm:$0xff] %v308
                %v310 = vld [vmem:[%s148 + $0x700] sm:$0xff]
                %311 = vst [vmem:[%s149 + $0x280] sm:$0xff] %v310
                %v312 = vld [vmem:[%s148 + $0x708] sm:$0xff]
                %313 = vst [vmem:[%s149 + $0x288] sm:$0xff] %v312
                %v314 = vld [vmem:[%s148 + $0x710] sm:$0xff]
                %315 = vst [vmem:[%s149 + $0x290] sm:$0xff] %v314
                %v316 = vld [vmem:[%s148 + $0x718] sm:$0xff]
                %317 = vst [vmem:[%s149 + $0x298] sm:$0xff] %v316
                %v318 = vld [vmem:[%s148 + $0x7e0] sm:$0xff]
                %319 = vst [vmem:[%s149 + $0x2a0] sm:$0xff] %v318
                %v320 = vld [vmem:[%s148 + $0x7e8] sm:$0xff]
                %321 = vst [vmem:[%s149 + $0x2a8] sm:$0xff] %v320
                %v322 = vld [vmem:[%s148 + $0x7f0] sm:$0xff]
                %323 = vst [vmem:[%s149 + $0x2b0] sm:$0xff] %v322
                %v324 = vld [vmem:[%s148 + $0x7f8] sm:$0xff]
                %325 = vst [vmem:[%s149 + $0x2b8] sm:$0xff] %v324
                %v326 = vld [vmem:[%s148 + $0x800] sm:$0xff]
                %327 = vst [vmem:[%s149 + $0x2c0] sm:$0xff] %v326
                %v328 = vld [vmem:[%s148 + $0x808] sm:$0xff]
                %329 = vst [vmem:[%s149 + $0x2c8] sm:$0xff] %v328
                %v330 = vld [vmem:[%s148 + $0x810] sm:$0xff]
                %331 = vst [vmem:[%s149 + $0x2d0] sm:$0xff] %v330
                %v332 = vld [vmem:[%s148 + $0x818] sm:$0xff]
                %333 = vst [vmem:[%s149 + $0x2d8] sm:$0xff] %v332
                %v334 = vld [vmem:[%s148 + $0x820] sm:$0xff]
                %335 = vst [vmem:[%s149 + $0x2e0] sm:$0xff] %v334
                %v336 = vld [vmem:[%s148 + $0x828] sm:$0xff]
                %337 = vst [vmem:[%s149 + $0x2e8] sm:$0xff] %v336
                %v338 = vld [vmem:[%s148 + $0x830] sm:$0xff]
                %339 = vst [vmem:[%s149 + $0x2f0] sm:$0xff] %v338
                %v340 = vld [vmem:[%s148 + $0x838] sm:$0xff]
                %341 = vst [vmem:[%s149 + $0x2f8] sm:$0xff] %v340
                %v342 = vld [vmem:[%s148 + $0x900] sm:$0xff]
                %343 = vst [vmem:[%s149 + $0x300] sm:$0xff] %v342
                %v344 = vld [vmem:[%s148 + $0x908] sm:$0xff]
                %345 = vst [vmem:[%s149 + $0x308] sm:$0xff] %v344
                %v346 = vld [vmem:[%s148 + $0x910] sm:$0xff]
                %347 = vst [vmem:[%s149 + $0x310] sm:$0xff] %v346
                %v348 = vld [vmem:[%s148 + $0x918] sm:$0xff]
                %349 = vst [vmem:[%s149 + $0x318] sm:$0xff] %v348
                %v350 = vld [vmem:[%s148 + $0x920] sm:$0xff]
                %351 = vst [vmem:[%s149 + $0x320] sm:$0xff] %v350
                %v352 = vld [vmem:[%s148 + $0x928] sm:$0xff]
                %353 = vst [vmem:[%s149 + $0x328] sm:$0xff] %v352
                %v354 = vld [vmem:[%s148 + $0x930] sm:$0xff]
                %355 = vst [vmem:[%s149 + $0x330] sm:$0xff] %v354
                %v356 = vld [vmem:[%s148 + $0x938] sm:$0xff]
                %357 = vst [vmem:[%s149 + $0x338] sm:$0xff] %v356
                %v358 = vld [vmem:[%s148 + $0x940] sm:$0xff]
                %359 = vst [vmem:[%s149 + $0x340] sm:$0xff] %v358
                %v360 = vld [vmem:[%s148 + $0x948] sm:$0xff]
                %361 = vst [vmem:[%s149 + $0x348] sm:$0xff] %v360
                %v362 = vld [vmem:[%s148 + $0x950] sm:$0xff]
                %363 = vst [vmem:[%s149 + $0x350] sm:$0xff] %v362
                %v364 = vld [vmem:[%s148 + $0x958] sm:$0xff]
                %365 = vst [vmem:[%s149 + $0x358] sm:$0xff] %v364
                %v366 = vld [vmem:[%s148 + $0xa20] sm:$0xff]
                %367 = vst [vmem:[%s149 + $0x360] sm:$0xff] %v366
                %v368 = vld [vmem:[%s148 + $0xa28] sm:$0xff]
                %369 = vst [vmem:[%s149 + $0x368] sm:$0xff] %v368
                %v370 = vld [vmem:[%s148 + $0xa30] sm:$0xff]
                %371 = vst [vmem:[%s149 + $0x370] sm:$0xff] %v370
                %v372 = vld [vmem:[%s148 + $0xa38] sm:$0xff]
                %373 = vst [vmem:[%s149 + $0x378] sm:$0xff] %v372
                %v374 = vld [vmem:[%s148 + $0xa40] sm:$0xff]
                %375 = vst [vmem:[%s149 + $0x380] sm:$0xff] %v374
                %v376 = vld [vmem:[%s148 + $0xa48] sm:$0xff]
                %377 = vst [vmem:[%s149 + $0x388] sm:$0xff] %v376
                %v378 = vld [vmem:[%s148 + $0xa50] sm:$0xff]
                %379 = vst [vmem:[%s149 + $0x390] sm:$0xff] %v378
                %v380 = vld [vmem:[%s148 + $0xa58] sm:$0xff]
                %381 = vst [vmem:[%s149 + $0x398] sm:$0xff] %v380
                %v382 = vld [vmem:[%s148 + $0xa60] sm:$0xff]
                %383 = vst [vmem:[%s149 + $0x3a0] sm:$0xff] %v382
                %v384 = vld [vmem:[%s148 + $0xa68] sm:$0xff]
                %385 = vst [vmem:[%s149 + $0x3a8] sm:$0xff] %v384
                %v386 = vld [vmem:[%s148 + $0xa70] sm:$0xff]
                %387 = vst [vmem:[%s149 + $0x3b0] sm:$0xff] %v386
                %v388 = vld [vmem:[%s148 + $0xa78] sm:$0xff]
                %389 = vst [vmem:[%s149 + $0x3b8] sm:$0xff] %v388
                %v390 = vld [vmem:[%s148 + $0xb40] sm:$0xff]
                %391 = vst [vmem:[%s149 + $0x3c0] sm:$0xff] %v390
                %v392 = vld [vmem:[%s148 + $0xb48] sm:$0xff]
                %393 = vst [vmem:[%s149 + $0x3c8] sm:$0xff] %v392
                %v394 = vld [vmem:[%s148 + $0xb50] sm:$0xff]
                %395 = vst [vmem:[%s149 + $0x3d0] sm:$0xff] %v394
                %v396 = vld [vmem:[%s148 + $0xb58] sm:$0xff]
                %397 = vst [vmem:[%s149 + $0x3d8] sm:$0xff] %v396
                %v398 = vld [vmem:[%s148 + $0xb60] sm:$0xff]
                %399 = vst [vmem:[%s149 + $0x3e0] sm:$0xff] %v398
                %v400 = vld [vmem:[%s148 + $0xb68] sm:$0xff]
                %401 = vst [vmem:[%s149 + $0x3e8] sm:$0xff] %v400
                %v402 = vld [vmem:[%s148 + $0xb70] sm:$0xff]
                %403 = vst [vmem:[%s149 + $0x3f0] sm:$0xff] %v402
                %v404 = vld [vmem:[%s148 + $0xb78] sm:$0xff]
                %405 = vst [vmem:[%s149 + $0x3f8] sm:$0xff] %v404
                %v406 = vld [vmem:[%s148 + $0xb80] sm:$0xff]
                %407 = vst [vmem:[%s149 + $0x400] sm:$0xff] %v406
                %v408 = vld [vmem:[%s148 + $0xb88] sm:$0xff]
                %409 = vst [vmem:[%s149 + $0x408] sm:$0xff] %v408
                %v410 = vld [vmem:[%s148 + $0xb90] sm:$0xff]
                %411 = vst [vmem:[%s149 + $0x410] sm:$0xff] %v410
                %v412 = vld [vmem:[%s148 + $0xb98] sm:$0xff]
                %413 = vst [vmem:[%s149 + $0x418] sm:$0xff] %v412
                %v414 = vld [vmem:[%s148 + $0xc60] sm:$0xff]
                %415 = vst [vmem:[%s149 + $0x420] sm:$0xff] %v414
                %v416 = vld [vmem:[%s148 + $0xc68] sm:$0xff]
                %417 = vst [vmem:[%s149 + $0x428] sm:$0xff] %v416
                %v418 = vld [vmem:[%s148 + $0xc70] sm:$0xff]
                %419 = vst [vmem:[%s149 + $0x430] sm:$0xff] %v418
                %v420 = vld [vmem:[%s148 + $0xc78] sm:$0xff]
                %421 = vst [vmem:[%s149 + $0x438] sm:$0xff] %v420
                %v422 = vld [vmem:[%s148 + $0xc80] sm:$0xff]
                %423 = vst [vmem:[%s149 + $0x440] sm:$0xff] %v422
                %v424 = vld [vmem:[%s148 + $0xc88] sm:$0xff]
                %425 = vst [vmem:[%s149 + $0x448] sm:$0xff] %v424
                %v426 = vld [vmem:[%s148 + $0xc90] sm:$0xff]
                %427 = vst [vmem:[%s149 + $0x450] sm:$0xff] %v426
                %v428 = vld [vmem:[%s148 + $0xc98] sm:$0xff]
                %429 = vst [vmem:[%s149 + $0x458] sm:$0xff] %v428
                %v430 = vld [vmem:[%s148 + $0xca0] sm:$0xff]
                %431 = vst [vmem:[%s149 + $0x460] sm:$0xff] %v430
                %v432 = vld [vmem:[%s148 + $0xca8] sm:$0xff]
                %433 = vst [vmem:[%s149 + $0x468] sm:$0xff] %v432
                %v434 = vld [vmem:[%s148 + $0xcb0] sm:$0xff]
                %435 = vst [vmem:[%s149 + $0x470] sm:$0xff] %v434
                %v436 = vld [vmem:[%s148 + $0xcb8] sm:$0xff]
                %437 = vst [vmem:[%s149 + $0x478] sm:$0xff] %v436
                %v438 = vld [vmem:[%s148 + $0xd80] sm:$0xff]
                %439 = vst [vmem:[%s149 + $0x480] sm:$0xff] %v438
                %v440 = vld [vmem:[%s148 + $0xd88] sm:$0xff]
                %441 = vst [vmem:[%s149 + $0x488] sm:$0xff] %v440
                %v442 = vld [vmem:[%s148 + $0xd90] sm:$0xff]
                %443 = vst [vmem:[%s149 + $0x490] sm:$0xff] %v442
                %v444 = vld [vmem:[%s148 + $0xd98] sm:$0xff]
                %445 = vst [vmem:[%s149 + $0x498] sm:$0xff] %v444
                %v446 = vld [vmem:[%s148 + $0xda0] sm:$0xff]
                %447 = vst [vmem:[%s149 + $0x4a0] sm:$0xff] %v446
                %v448 = vld [vmem:[%s148 + $0xda8] sm:$0xff]
                %449 = vst [vmem:[%s149 + $0x4a8] sm:$0xff] %v448
                %v450 = vld [vmem:[%s148 + $0xdb0] sm:$0xff]
                %451 = vst [vmem:[%s149 + $0x4b0] sm:$0xff] %v450
                %v452 = vld [vmem:[%s148 + $0xdb8] sm:$0xff]
                %453 = vst [vmem:[%s149 + $0x4b8] sm:$0xff] %v452
                %v454 = vld [vmem:[%s148 + $0xdc0] sm:$0xff]
                %455 = vst [vmem:[%s149 + $0x4c0] sm:$0xff] %v454
                %v456 = vld [vmem:[%s148 + $0xdc8] sm:$0xff]
                %457 = vst [vmem:[%s149 + $0x4c8] sm:$0xff] %v456
                %v458 = vld [vmem:[%s148 + $0xdd0] sm:$0xff]
                %459 = vst [vmem:[%s149 + $0x4d0] sm:$0xff] %v458
                %v460 = vld [vmem:[%s148 + $0xdd8] sm:$0xff]
                %461 = vst [vmem:[%s149 + $0x4d8] sm:$0xff] %v460
                %v462 = vld [vmem:[%s148 + $0xea0] sm:$0xff]
                %463 = vst [vmem:[%s149 + $0x4e0] sm:$0xff] %v462
                %v464 = vld [vmem:[%s148 + $0xea8] sm:$0xff]
                %465 = vst [vmem:[%s149 + $0x4e8] sm:$0xff] %v464
                %v466 = vld [vmem:[%s148 + $0xeb0] sm:$0xff]
                %467 = vst [vmem:[%s149 + $0x4f0] sm:$0xff] %v466
                %v468 = vld [vmem:[%s148 + $0xeb8] sm:$0xff]
                %469 = vst [vmem:[%s149 + $0x4f8] sm:$0xff] %v468
                %v470 = vld [vmem:[%s148 + $0xec0] sm:$0xff]
                %471 = vst [vmem:[%s149 + $0x500] sm:$0xff] %v470
                %v472 = vld [vmem:[%s148 + $0xec8] sm:$0xff]
                %473 = vst [vmem:[%s149 + $0x508] sm:$0xff] %v472
                %v474 = vld [vmem:[%s148 + $0xed0] sm:$0xff]
                %475 = vst [vmem:[%s149 + $0x510] sm:$0xff] %v474
                %v476 = vld [vmem:[%s148 + $0xed8] sm:$0xff]
                %477 = vst [vmem:[%s149 + $0x518] sm:$0xff] %v476
                %v478 = vld [vmem:[%s148 + $0xee0] sm:$0xff]
                %479 = vst [vmem:[%s149 + $0x520] sm:$0xff] %v478
                %v480 = vld [vmem:[%s148 + $0xee8] sm:$0xff]
                %481 = vst [vmem:[%s149 + $0x528] sm:$0xff] %v480
                %v482 = vld [vmem:[%s148 + $0xef0] sm:$0xff]
                %483 = vst [vmem:[%s149 + $0x530] sm:$0xff] %v482
                %v484 = vld [vmem:[%s148 + $0xef8] sm:$0xff]
                %485 = vst [vmem:[%s149 + $0x538] sm:$0xff] %v484
                %v486 = vld [vmem:[%s148 + $0xfc0] sm:$0xff]
                %487 = vst [vmem:[%s149 + $0x540] sm:$0xff] %v486
                %v488 = vld [vmem:[%s148 + $0xfc8] sm:$0xff]
                %489 = vst [vmem:[%s149 + $0x548] sm:$0xff] %v488
                %v490 = vld [vmem:[%s148 + $0xfd0] sm:$0xff]
                %491 = vst [vmem:[%s149 + $0x550] sm:$0xff] %v490
                %v492 = vld [vmem:[%s148 + $0xfd8] sm:$0xff]
                %493 = vst [vmem:[%s149 + $0x558] sm:$0xff] %v492
                %v494 = vld [vmem:[%s148 + $0xfe0] sm:$0xff]
                %495 = vst [vmem:[%s149 + $0x560] sm:$0xff] %v494
                %v496 = vld [vmem:[%s148 + $0xfe8] sm:$0xff]
                %497 = vst [vmem:[%s149 + $0x568] sm:$0xff] %v496
                %v498 = vld [vmem:[%s148 + $0xff0] sm:$0xff]
                %499 = vst [vmem:[%s149 + $0x570] sm:$0xff] %v498
                %v500 = vld [vmem:[%s148 + $0xff8] sm:$0xff]
                %501 = vst [vmem:[%s149 + $0x578] sm:$0xff] %v500
                %v502 = vld [vmem:[%s148 + $0x1000] sm:$0xff]
                %503 = vst [vmem:[%s149 + $0x580] sm:$0xff] %v502
                %v504 = vld [vmem:[%s148 + $0x1008] sm:$0xff]
                %505 = vst [vmem:[%s149 + $0x588] sm:$0xff] %v504
                %v506 = vld [vmem:[%s148 + $0x1010] sm:$0xff]
                %507 = vst [vmem:[%s149 + $0x590] sm:$0xff] %v506
                %v508 = vld [vmem:[%s148 + $0x1018] sm:$0xff]
                %509 = vst [vmem:[%s149 + $0x598] sm:$0xff] %v508
                %v510 = vld [vmem:[%s148 + $0x10e0] sm:$0xff]
                %511 = vst [vmem:[%s149 + $0x5a0] sm:$0xff] %v510
                %v512 = vld [vmem:[%s148 + $0x10e8] sm:$0xff]
                %513 = vst [vmem:[%s149 + $0x5a8] sm:$0xff] %v512
                %v514 = vld [vmem:[%s148 + $0x10f0] sm:$0xff]
                %515 = vst [vmem:[%s149 + $0x5b0] sm:$0xff] %v514
                %v516 = vld [vmem:[%s148 + $0x10f8] sm:$0xff]
                %517 = vst [vmem:[%s149 + $0x5b8] sm:$0xff] %v516
                %v518 = vld [vmem:[%s148 + $0x1100] sm:$0xff]
                %519 = vst [vmem:[%s149 + $0x5c0] sm:$0xff] %v518
                %v520 = vld [vmem:[%s148 + $0x1108] sm:$0xff]
                %521 = vst [vmem:[%s149 + $0x5c8] sm:$0xff] %v520
                %v522 = vld [vmem:[%s148 + $0x1110] sm:$0xff]
                %523 = vst [vmem:[%s149 + $0x5d0] sm:$0xff] %v522
                %v524 = vld [vmem:[%s148 + $0x1118] sm:$0xff]
                %525 = vst [vmem:[%s149 + $0x5d8] sm:$0xff] %v524
                %v526 = vld [vmem:[%s148 + $0x1120] sm:$0xff]
                %527 = vst [vmem:[%s149 + $0x5e0] sm:$0xff] %v526
                %v528 = vld [vmem:[%s148 + $0x1128] sm:$0xff]
                %529 = vst [vmem:[%s149 + $0x5e8] sm:$0xff] %v528
                %v530 = vld [vmem:[%s148 + $0x1130] sm:$0xff]
                %531 = vst [vmem:[%s149 + $0x5f0] sm:$0xff] %v530
                %v532 = vld [vmem:[%s148 + $0x1138] sm:$0xff]
                %533 = vst [vmem:[%s149 + $0x5f8] sm:$0xff] %v532
                %v534 = vld [vmem:[%s148 + $0x1200] sm:$0xff]
                %535 = vst [vmem:[%s149 + $0x600] sm:$0xff] %v534
                %v536 = vld [vmem:[%s148 + $0x1208] sm:$0xff]
                %537 = vst [vmem:[%s149 + $0x608] sm:$0xff] %v536
                %v538 = vld [vmem:[%s148 + $0x1210] sm:$0xff]
                %539 = vst [vmem:[%s149 + $0x610] sm:$0xff] %v538
                %v540 = vld [vmem:[%s148 + $0x1218] sm:$0xff]
                %541 = vst [vmem:[%s149 + $0x618] sm:$0xff] %v540
                %v542 = vld [vmem:[%s148 + $0x1220] sm:$0xff]
                %543 = vst [vmem:[%s149 + $0x620] sm:$0xff] %v542
                %v544 = vld [vmem:[%s148 + $0x1228] sm:$0xff]
                %545 = vst [vmem:[%s149 + $0x628] sm:$0xff] %v544
                %v546 = vld [vmem:[%s148 + $0x1230] sm:$0xff]
                %547 = vst [vmem:[%s149 + $0x630] sm:$0xff] %v546
                %v548 = vld [vmem:[%s148 + $0x1238] sm:$0xff]
                %549 = vst [vmem:[%s149 + $0x638] sm:$0xff] %v548
                %v550 = vld [vmem:[%s148 + $0x1240] sm:$0xff]
                %551 = vst [vmem:[%s149 + $0x640] sm:$0xff] %v550
                %v552 = vld [vmem:[%s148 + $0x1248] sm:$0xff]
                %553 = vst [vmem:[%s149 + $0x648] sm:$0xff] %v552
                %v554 = vld [vmem:[%s148 + $0x1250] sm:$0xff]
                %555 = vst [vmem:[%s149 + $0x650] sm:$0xff] %v554
                %v556 = vld [vmem:[%s148 + $0x1258] sm:$0xff]
                %557 = vst [vmem:[%s149 + $0x658] sm:$0xff] %v556
                %v558 = vld [vmem:[%s148 + $0x1320] sm:$0xff]
                %559 = vst [vmem:[%s149 + $0x660] sm:$0xff] %v558
                %v560 = vld [vmem:[%s148 + $0x1328] sm:$0xff]
                %561 = vst [vmem:[%s149 + $0x668] sm:$0xff] %v560
                %v562 = vld [vmem:[%s148 + $0x1330] sm:$0xff]
                %563 = vst [vmem:[%s149 + $0x670] sm:$0xff] %v562
                %v564 = vld [vmem:[%s148 + $0x1338] sm:$0xff]
                %565 = vst [vmem:[%s149 + $0x678] sm:$0xff] %v564
                %v566 = vld [vmem:[%s148 + $0x1340] sm:$0xff]
                %567 = vst [vmem:[%s149 + $0x680] sm:$0xff] %v566
                %v568 = vld [vmem:[%s148 + $0x1348] sm:$0xff]
                %569 = vst [vmem:[%s149 + $0x688] sm:$0xff] %v568
                %v570 = vld [vmem:[%s148 + $0x1350] sm:$0xff]
                %571 = vst [vmem:[%s149 + $0x690] sm:$0xff] %v570
                %v572 = vld [vmem:[%s148 + $0x1358] sm:$0xff]
                %573 = vst [vmem:[%s149 + $0x698] sm:$0xff] %v572
                %v574 = vld [vmem:[%s148 + $0x1360] sm:$0xff]
                %575 = vst [vmem:[%s149 + $0x6a0] sm:$0xff] %v574
                %v576 = vld [vmem:[%s148 + $0x1368] sm:$0xff]
                %577 = vst [vmem:[%s149 + $0x6a8] sm:$0xff] %v576
                %v578 = vld [vmem:[%s148 + $0x1370] sm:$0xff]
                %579 = vst [vmem:[%s149 + $0x6b0] sm:$0xff] %v578
                %v580 = vld [vmem:[%s148 + $0x1378] sm:$0xff]
                %581 = vst [vmem:[%s149 + $0x6b8] sm:$0xff] %v580
                %v582 = vld [vmem:[%s148 + $0x1440] sm:$0xff]
                %583 = vst [vmem:[%s149 + $0x6c0] sm:$0xff] %v582
                %v584 = vld [vmem:[%s148 + $0x1448] sm:$0xff]
                %585 = vst [vmem:[%s149 + $0x6c8] sm:$0xff] %v584
                %v586 = vld [vmem:[%s148 + $0x1450] sm:$0xff]
                %587 = vst [vmem:[%s149 + $0x6d0] sm:$0xff] %v586
                %v588 = vld [vmem:[%s148 + $0x1458] sm:$0xff]
                %589 = vst [vmem:[%s149 + $0x6d8] sm:$0xff] %v588
                %v590 = vld [vmem:[%s148 + $0x1460] sm:$0xff]
                %591 = vst [vmem:[%s149 + $0x6e0] sm:$0xff] %v590
                %v592 = vld [vmem:[%s148 + $0x1468] sm:$0xff]
                %593 = vst [vmem:[%s149 + $0x6e8] sm:$0xff] %v592
                %v594 = vld [vmem:[%s148 + $0x1470] sm:$0xff]
                %595 = vst [vmem:[%s149 + $0x6f0] sm:$0xff] %v594
                %v596 = vld [vmem:[%s148 + $0x1478] sm:$0xff]
                %597 = vst [vmem:[%s149 + $0x6f8] sm:$0xff] %v596
                %v598 = vld [vmem:[%s148 + $0x1480] sm:$0xff]
                %599 = vst [vmem:[%s149 + $0x700] sm:$0xff] %v598
                %v600 = vld [vmem:[%s148 + $0x1488] sm:$0xff]
                %601 = vst [vmem:[%s149 + $0x708] sm:$0xff] %v600
                %v602 = vld [vmem:[%s148 + $0x1490] sm:$0xff]
                %603 = vst [vmem:[%s149 + $0x710] sm:$0xff] %v602
                %v604 = vld [vmem:[%s148 + $0x1498] sm:$0xff]
                %605 = vst [vmem:[%s149 + $0x718] sm:$0xff] %v604
                %v606 = vld [vmem:[%s148 + $0x1560] sm:$0xff]
                %607 = vst [vmem:[%s149 + $0x720] sm:$0xff] %v606
                %v608 = vld [vmem:[%s148 + $0x1568] sm:$0xff]
                %609 = vst [vmem:[%s149 + $0x728] sm:$0xff] %v608
                %v610 = vld [vmem:[%s148 + $0x1570] sm:$0xff]
                %611 = vst [vmem:[%s149 + $0x730] sm:$0xff] %v610
                %v612 = vld [vmem:[%s148 + $0x1578] sm:$0xff]
                %613 = vst [vmem:[%s149 + $0x738] sm:$0xff] %v612
                %v614 = vld [vmem:[%s148 + $0x1580] sm:$0xff]
                %615 = vst [vmem:[%s149 + $0x740] sm:$0xff] %v614
                %v616 = vld [vmem:[%s148 + $0x1588] sm:$0xff]
                %617 = vst [vmem:[%s149 + $0x748] sm:$0xff] %v616
                %v618 = vld [vmem:[%s148 + $0x1590] sm:$0xff]
                %619 = vst [vmem:[%s149 + $0x750] sm:$0xff] %v618
                %v620 = vld [vmem:[%s148 + $0x1598] sm:$0xff]
                %621 = vst [vmem:[%s149 + $0x758] sm:$0xff] %v620
                %v622 = vld [vmem:[%s148 + $0x15a0] sm:$0xff]
                %623 = vst [vmem:[%s149 + $0x760] sm:$0xff] %v622
                %v624 = vld [vmem:[%s148 + $0x15a8] sm:$0xff]
                %625 = vst [vmem:[%s149 + $0x768] sm:$0xff] %v624
                %v626 = vld [vmem:[%s148 + $0x15b0] sm:$0xff]
                %627 = vst [vmem:[%s149 + $0x770] sm:$0xff] %v626
                %v628 = vld [vmem:[%s148 + $0x15b8] sm:$0xff]
                %629 = vst [vmem:[%s149 + $0x778] sm:$0xff] %v628
                %v630 = vld [vmem:[%s148 + $0x1680] sm:$0xff]
                %631 = vst [vmem:[%s149 + $0x780] sm:$0xff] %v630
                %v632 = vld [vmem:[%s148 + $0x1688] sm:$0xff]
                %633 = vst [vmem:[%s149 + $0x788] sm:$0xff] %v632
                %v634 = vld [vmem:[%s148 + $0x1690] sm:$0xff]
                %635 = vst [vmem:[%s149 + $0x790] sm:$0xff] %v634
                %v636 = vld [vmem:[%s148 + $0x1698] sm:$0xff]
                %637 = vst [vmem:[%s149 + $0x798] sm:$0xff] %v636
                %v638 = vld [vmem:[%s148 + $0x16a0] sm:$0xff]
                %639 = vst [vmem:[%s149 + $0x7a0] sm:$0xff] %v638
                %v640 = vld [vmem:[%s148 + $0x16a8] sm:$0xff]
                %641 = vst [vmem:[%s149 + $0x7a8] sm:$0xff] %v640
                %v642 = vld [vmem:[%s148 + $0x16b0] sm:$0xff]
                %643 = vst [vmem:[%s149 + $0x7b0] sm:$0xff] %v642
                %v644 = vld [vmem:[%s148 + $0x16b8] sm:$0xff]
                %645 = vst [vmem:[%s149 + $0x7b8] sm:$0xff] %v644
                %v646 = vld [vmem:[%s148 + $0x16c0] sm:$0xff]
                %647 = vst [vmem:[%s149 + $0x7c0] sm:$0xff] %v646
                %v648 = vld [vmem:[%s148 + $0x16c8] sm:$0xff]
                %649 = vst [vmem:[%s149 + $0x7c8] sm:$0xff] %v648
                %v650 = vld [vmem:[%s148 + $0x16d0] sm:$0xff]
                %651 = vst [vmem:[%s149 + $0x7d0] sm:$0xff] %v650
                %v652 = vld [vmem:[%s148 + $0x16d8] sm:$0xff]
                %653 = vst [vmem:[%s149 + $0x7d8] sm:$0xff] %v652
                %v654 = vld [vmem:[%s148 + $0x17a0] sm:$0xff]
                %655 = vst [vmem:[%s149 + $0x7e0] sm:$0xff] %v654
                %v656 = vld [vmem:[%s148 + $0x17a8] sm:$0xff]
                %657 = vst [vmem:[%s149 + $0x7e8] sm:$0xff] %v656
                %v658 = vld [vmem:[%s148 + $0x17b0] sm:$0xff]
                %659 = vst [vmem:[%s149 + $0x7f0] sm:$0xff] %v658
                %v660 = vld [vmem:[%s148 + $0x17b8] sm:$0xff]
                %661 = vst [vmem:[%s149 + $0x7f8] sm:$0xff] %v660
                %v662 = vld [vmem:[%s148 + $0x17c0] sm:$0xff]
                %663 = vst [vmem:[%s149 + $0x800] sm:$0xff] %v662
                %v664 = vld [vmem:[%s148 + $0x17c8] sm:$0xff]
                %665 = vst [vmem:[%s149 + $0x808] sm:$0xff] %v664
                %v666 = vld [vmem:[%s148 + $0x17d0] sm:$0xff]
                %667 = vst [vmem:[%s149 + $0x810] sm:$0xff] %v666
                %v668 = vld [vmem:[%s148 + $0x17d8] sm:$0xff]
                %669 = vst [vmem:[%s149 + $0x818] sm:$0xff] %v668
                %v670 = vld [vmem:[%s148 + $0x17e0] sm:$0xff]
                %671 = vst [vmem:[%s149 + $0x820] sm:$0xff] %v670
                %v672 = vld [vmem:[%s148 + $0x17e8] sm:$0xff]
                %673 = vst [vmem:[%s149 + $0x828] sm:$0xff] %v672
                %v674 = vld [vmem:[%s148 + $0x17f0] sm:$0xff]
                %675 = vst [vmem:[%s149 + $0x830] sm:$0xff] %v674
                %v676 = vld [vmem:[%s148 + $0x17f8] sm:$0xff]
                %677 = vst [vmem:[%s149 + $0x838] sm:$0xff] %v676
                %v678 = vld [vmem:[%s148 + $0x18c0] sm:$0xff]
                %679 = vst [vmem:[%s149 + $0x840] sm:$0xff] %v678
                %v680 = vld [vmem:[%s148 + $0x18c8] sm:$0xff]
                %681 = vst [vmem:[%s149 + $0x848] sm:$0xff] %v680
                %v682 = vld [vmem:[%s148 + $0x18d0] sm:$0xff]
                %683 = vst [vmem:[%s149 + $0x850] sm:$0xff] %v682
                %v684 = vld [vmem:[%s148 + $0x18d8] sm:$0xff]
                %685 = vst [vmem:[%s149 + $0x858] sm:$0xff] %v684
                %v686 = vld [vmem:[%s148 + $0x18e0] sm:$0xff]
                %687 = vst [vmem:[%s149 + $0x860] sm:$0xff] %v686
                %v688 = vld [vmem:[%s148 + $0x18e8] sm:$0xff]
                %689 = vst [vmem:[%s149 + $0x868] sm:$0xff] %v688
                %v690 = vld [vmem:[%s148 + $0x18f0] sm:$0xff]
                %691 = vst [vmem:[%s149 + $0x870] sm:$0xff] %v690
                %v692 = vld [vmem:[%s148 + $0x18f8] sm:$0xff]
                %693 = vst [vmem:[%s149 + $0x878] sm:$0xff] %v692
                %v694 = vld [vmem:[%s148 + $0x1900] sm:$0xff]
                %695 = vst [vmem:[%s149 + $0x880] sm:$0xff] %v694
                %v696 = vld [vmem:[%s148 + $0x1908] sm:$0xff]
                %697 = vst [vmem:[%s149 + $0x888] sm:$0xff] %v696
                %v698 = vld [vmem:[%s148 + $0x1910] sm:$0xff]
                %699 = vst [vmem:[%s149 + $0x890] sm:$0xff] %v698
                %v700 = vld [vmem:[%s148 + $0x1918] sm:$0xff]
                %701 = vst [vmem:[%s149 + $0x898] sm:$0xff] %v700
                %v702 = vld [vmem:[%s148 + $0x19e0] sm:$0xff]
                %703 = vst [vmem:[%s149 + $0x8a0] sm:$0xff] %v702
                %v704 = vld [vmem:[%s148 + $0x19e8] sm:$0xff]
                %705 = vst [vmem:[%s149 + $0x8a8] sm:$0xff] %v704
                %v706 = vld [vmem:[%s148 + $0x19f0] sm:$0xff]
                %707 = vst [vmem:[%s149 + $0x8b0] sm:$0xff] %v706
                %v708 = vld [vmem:[%s148 + $0x19f8] sm:$0xff]
                %709 = vst [vmem:[%s149 + $0x8b8] sm:$0xff] %v708
                %v710 = vld [vmem:[%s148 + $0x1a00] sm:$0xff]
                %711 = vst [vmem:[%s149 + $0x8c0] sm:$0xff] %v710
                %v712 = vld [vmem:[%s148 + $0x1a08] sm:$0xff]
                %713 = vst [vmem:[%s149 + $0x8c8] sm:$0xff] %v712
                %v714 = vld [vmem:[%s148 + $0x1a10] sm:$0xff]
                %715 = vst [vmem:[%s149 + $0x8d0] sm:$0xff] %v714
                %v716 = vld [vmem:[%s148 + $0x1a18] sm:$0xff]
                %717 = vst [vmem:[%s149 + $0x8d8] sm:$0xff] %v716
                %v718 = vld [vmem:[%s148 + $0x1a20] sm:$0xff]
                %719 = vst [vmem:[%s149 + $0x8e0] sm:$0xff] %v718
                %v720 = vld [vmem:[%s148 + $0x1a28] sm:$0xff]
                %721 = vst [vmem:[%s149 + $0x8e8] sm:$0xff] %v720
                %v722 = vld [vmem:[%s148 + $0x1a30] sm:$0xff]
                %723 = vst [vmem:[%s149 + $0x8f0] sm:$0xff] %v722
                %v724 = vld [vmem:[%s148 + $0x1a38] sm:$0xff]
                %725 = vst [vmem:[%s149 + $0x8f8] sm:$0xff] %v724
                %v726 = vld [vmem:[%s148 + $0x1b00] sm:$0xff]
                %727 = vst [vmem:[%s149 + $0x900] sm:$0xff] %v726
                %v728 = vld [vmem:[%s148 + $0x1b08] sm:$0xff]
                %729 = vst [vmem:[%s149 + $0x908] sm:$0xff] %v728
                %v730 = vld [vmem:[%s148 + $0x1b10] sm:$0xff]
                %731 = vst [vmem:[%s149 + $0x910] sm:$0xff] %v730
                %v732 = vld [vmem:[%s148 + $0x1b18] sm:$0xff]
                %733 = vst [vmem:[%s149 + $0x918] sm:$0xff] %v732
                %v734 = vld [vmem:[%s148 + $0x1b20] sm:$0xff]
                %735 = vst [vmem:[%s149 + $0x920] sm:$0xff] %v734
                %v736 = vld [vmem:[%s148 + $0x1b28] sm:$0xff]
                %737 = vst [vmem:[%s149 + $0x928] sm:$0xff] %v736
                %v738 = vld [vmem:[%s148 + $0x1b30] sm:$0xff]
                %739 = vst [vmem:[%s149 + $0x930] sm:$0xff] %v738
                %v740 = vld [vmem:[%s148 + $0x1b38] sm:$0xff]
                %741 = vst [vmem:[%s149 + $0x938] sm:$0xff] %v740
                %v742 = vld [vmem:[%s148 + $0x1b40] sm:$0xff]
                %743 = vst [vmem:[%s149 + $0x940] sm:$0xff] %v742
                %v744 = vld [vmem:[%s148 + $0x1b48] sm:$0xff]
                %745 = vst [vmem:[%s149 + $0x948] sm:$0xff] %v744
                %v746 = vld [vmem:[%s148 + $0x1b50] sm:$0xff]
                %747 = vst [vmem:[%s149 + $0x950] sm:$0xff] %v746
                %v748 = vld [vmem:[%s148 + $0x1b58] sm:$0xff]
                %749 = vst [vmem:[%s149 + $0x958] sm:$0xff] %v748
                %v750 = vld [vmem:[%s148 + $0x1c20] sm:$0xff]
                %751 = vst [vmem:[%s149 + $0x960] sm:$0xff] %v750
                %v752 = vld [vmem:[%s148 + $0x1c28] sm:$0xff]
                %753 = vst [vmem:[%s149 + $0x968] sm:$0xff] %v752
                %v754 = vld [vmem:[%s148 + $0x1c30] sm:$0xff]
                %755 = vst [vmem:[%s149 + $0x970] sm:$0xff] %v754
                %v756 = vld [vmem:[%s148 + $0x1c38] sm:$0xff]
                %757 = vst [vmem:[%s149 + $0x978] sm:$0xff] %v756
                %v758 = vld [vmem:[%s148 + $0x1c40] sm:$0xff]
                %759 = vst [vmem:[%s149 + $0x980] sm:$0xff] %v758
                %v760 = vld [vmem:[%s148 + $0x1c48] sm:$0xff]
                %761 = vst [vmem:[%s149 + $0x988] sm:$0xff] %v760
                %v762 = vld [vmem:[%s148 + $0x1c50] sm:$0xff]
                %763 = vst [vmem:[%s149 + $0x990] sm:$0xff] %v762
                %v764 = vld [vmem:[%s148 + $0x1c58] sm:$0xff]
                %765 = vst [vmem:[%s149 + $0x998] sm:$0xff] %v764
                %v766 = vld [vmem:[%s148 + $0x1c60] sm:$0xff]
                %767 = vst [vmem:[%s149 + $0x9a0] sm:$0xff] %v766
                %v768 = vld [vmem:[%s148 + $0x1c68] sm:$0xff]
                %769 = vst [vmem:[%s149 + $0x9a8] sm:$0xff] %v768
                %v770 = vld [vmem:[%s148 + $0x1c70] sm:$0xff]
                %771 = vst [vmem:[%s149 + $0x9b0] sm:$0xff] %v770
                %v772 = vld [vmem:[%s148 + $0x1c78] sm:$0xff]
                %773 = vst [vmem:[%s149 + $0x9b8] sm:$0xff] %v772
                %v774 = vld [vmem:[%s148 + $0x1d40] sm:$0xff]
                %775 = vst [vmem:[%s149 + $0x9c0] sm:$0xff] %v774
                %v776 = vld [vmem:[%s148 + $0x1d48] sm:$0xff]
                %777 = vst [vmem:[%s149 + $0x9c8] sm:$0xff] %v776
                %v778 = vld [vmem:[%s148 + $0x1d50] sm:$0xff]
                %779 = vst [vmem:[%s149 + $0x9d0] sm:$0xff] %v778
                %v780 = vld [vmem:[%s148 + $0x1d58] sm:$0xff]
                %781 = vst [vmem:[%s149 + $0x9d8] sm:$0xff] %v780
                %v782 = vld [vmem:[%s148 + $0x1d60] sm:$0xff]
                %783 = vst [vmem:[%s149 + $0x9e0] sm:$0xff] %v782
                %v784 = vld [vmem:[%s148 + $0x1d68] sm:$0xff]
                %785 = vst [vmem:[%s149 + $0x9e8] sm:$0xff] %v784
                %v786 = vld [vmem:[%s148 + $0x1d70] sm:$0xff]
                %787 = vst [vmem:[%s149 + $0x9f0] sm:$0xff] %v786
                %v788 = vld [vmem:[%s148 + $0x1d78] sm:$0xff]
                %789 = vst [vmem:[%s149 + $0x9f8] sm:$0xff] %v788
                %v790 = vld [vmem:[%s148 + $0x1d80] sm:$0xff]
                %791 = vst [vmem:[%s149 + $0xa00] sm:$0xff] %v790
                %v792 = vld [vmem:[%s148 + $0x1d88] sm:$0xff]
                %793 = vst [vmem:[%s149 + $0xa08] sm:$0xff] %v792
                %v794 = vld [vmem:[%s148 + $0x1d90] sm:$0xff]
                %795 = vst [vmem:[%s149 + $0xa10] sm:$0xff] %v794
                %v796 = vld [vmem:[%s148 + $0x1d98] sm:$0xff]
                %797 = vst [vmem:[%s149 + $0xa18] sm:$0xff] %v796
                %v798 = vld [vmem:[%s148 + $0x1e60] sm:$0xff]
                %799 = vst [vmem:[%s149 + $0xa20] sm:$0xff] %v798
                %v800 = vld [vmem:[%s148 + $0x1e68] sm:$0xff]
                %801 = vst [vmem:[%s149 + $0xa28] sm:$0xff] %v800
                %v802 = vld [vmem:[%s148 + $0x1e70] sm:$0xff]
                %803 = vst [vmem:[%s149 + $0xa30] sm:$0xff] %v802
                %v804 = vld [vmem:[%s148 + $0x1e78] sm:$0xff]
                %805 = vst [vmem:[%s149 + $0xa38] sm:$0xff] %v804
                %v806 = vld [vmem:[%s148 + $0x1e80] sm:$0xff]
                %807 = vst [vmem:[%s149 + $0xa40] sm:$0xff] %v806
                %v808 = vld [vmem:[%s148 + $0x1e88] sm:$0xff]
                %809 = vst [vmem:[%s149 + $0xa48] sm:$0xff] %v808
                %v810 = vld [vmem:[%s148 + $0x1e90] sm:$0xff]
                %811 = vst [vmem:[%s149 + $0xa50] sm:$0xff] %v810
                %v812 = vld [vmem:[%s148 + $0x1e98] sm:$0xff]
                %813 = vst [vmem:[%s149 + $0xa58] sm:$0xff] %v812
                %v814 = vld [vmem:[%s148 + $0x1ea0] sm:$0xff]
                %815 = vst [vmem:[%s149 + $0xa60] sm:$0xff] %v814
                %v816 = vld [vmem:[%s148 + $0x1ea8] sm:$0xff]
                %817 = vst [vmem:[%s149 + $0xa68] sm:$0xff] %v816
                %v818 = vld [vmem:[%s148 + $0x1eb0] sm:$0xff]
                %819 = vst [vmem:[%s149 + $0xa70] sm:$0xff] %v818
                %v820 = vld [vmem:[%s148 + $0x1eb8] sm:$0xff]
                %821 = vst [vmem:[%s149 + $0xa78] sm:$0xff] %v820
                %v822 = vld [vmem:[%s148 + $0x1f80] sm:$0xff]
                %823 = vst [vmem:[%s149 + $0xa80] sm:$0xff] %v822
                %v824 = vld [vmem:[%s148 + $0x1f88] sm:$0xff]
                %825 = vst [vmem:[%s149 + $0xa88] sm:$0xff] %v824
                %v826 = vld [vmem:[%s148 + $0x1f90] sm:$0xff]
                %827 = vst [vmem:[%s149 + $0xa90] sm:$0xff] %v826
                %v828 = vld [vmem:[%s148 + $0x1f98] sm:$0xff]
                %829 = vst [vmem:[%s149 + $0xa98] sm:$0xff] %v828
                %v830 = vld [vmem:[%s148 + $0x1fa0] sm:$0xff]
                %831 = vst [vmem:[%s149 + $0xaa0] sm:$0xff] %v830
                %v832 = vld [vmem:[%s148 + $0x1fa8] sm:$0xff]
                %833 = vst [vmem:[%s149 + $0xaa8] sm:$0xff] %v832
                %v834 = vld [vmem:[%s148 + $0x1fb0] sm:$0xff]
                %835 = vst [vmem:[%s149 + $0xab0] sm:$0xff] %v834
                %v836 = vld [vmem:[%s148 + $0x1fb8] sm:$0xff]
                %837 = vst [vmem:[%s149 + $0xab8] sm:$0xff] %v836
                %v838 = vld [vmem:[%s148 + $0x1fc0] sm:$0xff]
                %839 = vst [vmem:[%s149 + $0xac0] sm:$0xff] %v838
                %v840 = vld [vmem:[%s148 + $0x1fc8] sm:$0xff]
                %841 = vst [vmem:[%s149 + $0xac8] sm:$0xff] %v840
                %v842 = vld [vmem:[%s148 + $0x1fd0] sm:$0xff]
                %843 = vst [vmem:[%s149 + $0xad0] sm:$0xff] %v842
                %v844 = vld [vmem:[%s148 + $0x1fd8] sm:$0xff]
                %845 = vst [vmem:[%s149 + $0xad8] sm:$0xff] %v844
                %v846 = vld [vmem:[%s148 + $0x20a0] sm:$0xff]
                %847 = vst [vmem:[%s149 + $0xae0] sm:$0xff] %v846
                %v848 = vld [vmem:[%s148 + $0x20a8] sm:$0xff]
                %849 = vst [vmem:[%s149 + $0xae8] sm:$0xff] %v848
                %v850 = vld [vmem:[%s148 + $0x20b0] sm:$0xff]
                %851 = vst [vmem:[%s149 + $0xaf0] sm:$0xff] %v850
                %v852 = vld [vmem:[%s148 + $0x20b8] sm:$0xff]
                %853 = vst [vmem:[%s149 + $0xaf8] sm:$0xff] %v852
                %v854 = vld [vmem:[%s148 + $0x20c0] sm:$0xff]
                %855 = vst [vmem:[%s149 + $0xb00] sm:$0xff] %v854
                %v856 = vld [vmem:[%s148 + $0x20c8] sm:$0xff]
                %857 = vst [vmem:[%s149 + $0xb08] sm:$0xff] %v856
                %v858 = vld [vmem:[%s148 + $0x20d0] sm:$0xff]
                %859 = vst [vmem:[%s149 + $0xb10] sm:$0xff] %v858
                %v860 = vld [vmem:[%s148 + $0x20d8] sm:$0xff]
                %861 = vst [vmem:[%s149 + $0xb18] sm:$0xff] %v860
                %v862 = vld [vmem:[%s148 + $0x20e0] sm:$0xff]
                %863 = vst [vmem:[%s149 + $0xb20] sm:$0xff] %v862
                %v864 = vld [vmem:[%s148 + $0x20e8] sm:$0xff]
                %865 = vst [vmem:[%s149 + $0xb28] sm:$0xff] %v864
                %v866 = vld [vmem:[%s148 + $0x20f0] sm:$0xff]
                %867 = vst [vmem:[%s149 + $0xb30] sm:$0xff] %v866
                %v868 = vld [vmem:[%s148 + $0x20f8] sm:$0xff]
                %869 = vst [vmem:[%s149 + $0xb38] sm:$0xff] %v868
                %v870 = vld [vmem:[%s148 + $0x21c0] sm:$0xff]
                %871 = vst [vmem:[%s149 + $0xb40] sm:$0xff] %v870
                %v872 = vld [vmem:[%s148 + $0x21c8] sm:$0xff]
                %873 = vst [vmem:[%s149 + $0xb48] sm:$0xff] %v872
                %v874 = vld [vmem:[%s148 + $0x21d0] sm:$0xff]
                %875 = vst [vmem:[%s149 + $0xb50] sm:$0xff] %v874
                %v876 = vld [vmem:[%s148 + $0x21d8] sm:$0xff]
                %877 = vst [vmem:[%s149 + $0xb58] sm:$0xff] %v876
                %v878 = vld [vmem:[%s148 + $0x21e0] sm:$0xff]
                %879 = vst [vmem:[%s149 + $0xb60] sm:$0xff] %v878
                %v880 = vld [vmem:[%s148 + $0x21e8] sm:$0xff]
                %881 = vst [vmem:[%s149 + $0xb68] sm:$0xff] %v880
                %v882 = vld [vmem:[%s148 + $0x21f0] sm:$0xff]
                %883 = vst [vmem:[%s149 + $0xb70] sm:$0xff] %v882
                %v884 = vld [vmem:[%s148 + $0x21f8] sm:$0xff]
                %885 = vst [vmem:[%s149 + $0xb78] sm:$0xff] %v884
                %v886 = vld [vmem:[%s148 + $0x2200] sm:$0xff]
                %887 = vst [vmem:[%s149 + $0xb80] sm:$0xff] %v886
                %v888 = vld [vmem:[%s148 + $0x2208] sm:$0xff]
                %889 = vst [vmem:[%s149 + $0xb88] sm:$0xff] %v888
                %v890 = vld [vmem:[%s148 + $0x2210] sm:$0xff]
                %891 = vst [vmem:[%s149 + $0xb90] sm:$0xff] %v890
                %v892 = vld [vmem:[%s148 + $0x2218] sm:$0xff]
                %893 = vst [vmem:[%s149 + $0xb98] sm:$0xff] %v892
                %v894 = vld [vmem:[%s148 + $0x22e0] sm:$0xff]
                %895 = vst [vmem:[%s149 + $0xba0] sm:$0xff] %v894
                %v896 = vld [vmem:[%s148 + $0x22e8] sm:$0xff]
                %897 = vst [vmem:[%s149 + $0xba8] sm:$0xff] %v896
                %v898 = vld [vmem:[%s148 + $0x22f0] sm:$0xff]
                %899 = vst [vmem:[%s149 + $0xbb0] sm:$0xff] %v898
                %v900 = vld [vmem:[%s148 + $0x22f8] sm:$0xff]
                %901 = vst [vmem:[%s149 + $0xbb8] sm:$0xff] %v900
                %v902 = vld [vmem:[%s148 + $0x2300] sm:$0xff]
                %903 = vst [vmem:[%s149 + $0xbc0] sm:$0xff] %v902
                %v904 = vld [vmem:[%s148 + $0x2308] sm:$0xff]
                %905 = vst [vmem:[%s149 + $0xbc8] sm:$0xff] %v904
                %v906 = vld [vmem:[%s148 + $0x2310] sm:$0xff]
                %907 = vst [vmem:[%s149 + $0xbd0] sm:$0xff] %v906
                %v908 = vld [vmem:[%s148 + $0x2318] sm:$0xff]
                %909 = vst [vmem:[%s149 + $0xbd8] sm:$0xff] %v908
                %v910 = vld [vmem:[%s148 + $0x2320] sm:$0xff]
                %911 = vst [vmem:[%s149 + $0xbe0] sm:$0xff] %v910
                %v912 = vld [vmem:[%s148 + $0x2328] sm:$0xff]
                %913 = vst [vmem:[%s149 + $0xbe8] sm:$0xff] %v912
                %v914 = vld [vmem:[%s148 + $0x2330] sm:$0xff]
                %915 = vst [vmem:[%s149 + $0xbf0] sm:$0xff] %v914
                %v916 = vld [vmem:[%s148 + $0x2338] sm:$0xff]
                %917 = vst [vmem:[%s149 + $0xbf8] sm:$0xff] %v916
              $region41: #{dqn_forward.4} parent=35 // loop_footer
                %s147 = sadd.s32 1, %s143
              $region42: #{dqn_forward.4} parent=35 // loop_footer_branch
                %142 = sbr.rel target = $region38
              $region43: #{dqn_forward.4} parent=35 // loop_exit
                _
            $region36: #{dqn_forward.4} parent=31 // pred_fallthru
              _
            // Predicated region
            $region44: #{dqn_forward.4} parent=31 // pred_check
              _
            $region45: #{dqn_forward.4} parent=31 // pred_check_branch
              %919 = sbr.rel target = $region47
            $region46: #{dqn_forward.4} parent=31 // pred_region
              _
            $region47: #{dqn_forward.4} parent=31 // pred_fallthru
              _
          $region32: #{dqn_forward.4} parent=27 // pred_fallthru
            _
          %920 = vnop
        $region28: #{dqn_forward.4} parent=23 // pred_fallthru
          _
      $region24: #{dqn_forward.4} parent=5 // pred_fallthru
        _
      %p921 = scmp.le.s32.totalorder 1, %s9
      %p922 = scmp.lt.s32.totalorder %s9, 4
      %p923 = pnand %p921, %p922
      %p924 = pneg %p923
      // Predicated region
      $region48: #{dqn_forward.4} parent=5 // pred_check
        _
      $region49: #{dqn_forward.4} parent=5 // pred_check_branch
        %926 = sbr.rel (%p923) target = $region51
      $region50: #{dqn_forward.4} parent=5 // pred_region
        %s927 = ssub.s32 %s9, 1
        %s928 = sand.u32 %s22, 1
        %s929 = sand.u32 %s22, 1
        %s930 = smul.addr %s929, 3072
        %s931 = scalar_lea.vmem [#allocation2], %s930
        // Predicated region
        $region52: #{dqn_forward.4} parent=50 // pred_check
          %p932 = pneg %p35
        $region53: #{dqn_forward.4} parent=50 // pred_check_branch
          %934 = sbr.rel (%p932) target = $region55
        $region54: #{dqn_forward.4} parent=50 // pred_region
          _
        $region55: #{dqn_forward.4} parent=50 // pred_fallthru
          _
        %s935 = sand.u32 %s22, 1
        %s936 = sand.u32 %s22, 1
        %s937 = smul.addr %s936, 3072
        %s938 = scalar_lea.vmem [#allocation2], %s937
        %p939 = pneg %p35
        %p940 = pneg %p32
        %p941 = pneg %p56
        %p942 = pneg %p53
        %p943 = pneg %p77
        %p944 = pneg %p74
        %p945 = pneg %p103
        %p946 = pneg %p100
        %s947 = sand.u32 %s90, 1
        %s948 = sand.u32 %s90, 1
        %s949 = smul.addr %s948, 192
        %s950 = scalar_lea.vmem [#allocation3], %s949
        %s951 = smul.u32 12, %s14
        %s952 = smul.u32 12, %s14
        %v953 = vld [vmem:[%s1] sm:$0xff]
        %v954 = vld [vmem:[%s1 + $0x8] sm:$0xff]
        %v955 = vld [vmem:[%s931] sm:$0xff]
        %v956 = vld [vmem:[%s931 + $0x8] sm:$0xff]
        %v957 = vld [vmem:[%s931 + $0x10] sm:$0xff]
        %v958 = vld [vmem:[%s931 + $0x18] sm:$0xff]
        %v959 = vld [vmem:[%s931 + $0x20] sm:$0xff]
        %v960 = vld [vmem:[%s931 + $0x28] sm:$0xff]
        %v961 = vld [vmem:[%s931 + $0x30] sm:$0xff]
        %v962 = vld [vmem:[%s931 + $0x38] sm:$0xff]
        %v963 = vld [vmem:[%s931 + $0x40] sm:$0xff]
        %v964 = vld [vmem:[%s931 + $0x48] sm:$0xff]
        %v965 = vld [vmem:[%s931 + $0x50] sm:$0xff]
        %v966 = vld [vmem:[%s931 + $0x58] sm:$0xff]
        %v967 = vld [vmem:[%s931 + $0x60] sm:$0xff]
        %v968 = vld [vmem:[%s931 + $0x68] sm:$0xff]
        %v969 = vld [vmem:[%s931 + $0x70] sm:$0xff]
        %v970 = vld [vmem:[%s931 + $0x78] sm:$0xff]
        %v971 = vld [vmem:[%s931 + $0x80] sm:$0xff]
        %v972 = vld [vmem:[%s931 + $0x88] sm:$0xff]
        %v973 = vld [vmem:[%s931 + $0x90] sm:$0xff]
        %v974 = vld [vmem:[%s931 + $0x98] sm:$0xff]
        %v975 = vld [vmem:[%s931 + $0xa0] sm:$0xff]
        %v976 = vld [vmem:[%s931 + $0xa8] sm:$0xff]
        %v977 = vld [vmem:[%s931 + $0xb0] sm:$0xff]
        %v978 = vld [vmem:[%s931 + $0xb8] sm:$0xff]
        %v979 = vld [vmem:[%s931 + $0xc0] sm:$0xff]
        %v980 = vld [vmem:[%s931 + $0xc8] sm:$0xff]
        %v981 = vld [vmem:[%s931 + $0xd0] sm:$0xff]
        %v982 = vld [vmem:[%s931 + $0xd8] sm:$0xff]
        %v983 = vld [vmem:[%s931 + $0xe0] sm:$0xff]
        %v984 = vld [vmem:[%s931 + $0xe8] sm:$0xff]
        %v985 = vld [vmem:[%s931 + $0xf0] sm:$0xff]
        %v986 = vld [vmem:[%s931 + $0xf8] sm:$0xff]
        %v987 = vld [vmem:[%s931 + $0x100] sm:$0xff]
        %v988 = vld [vmem:[%s931 + $0x108] sm:$0xff]
        %v989 = vld [vmem:[%s931 + $0x110] sm:$0xff]
        %v990 = vld [vmem:[%s931 + $0x118] sm:$0xff]
        %v991 = vld [vmem:[%s931 + $0x120] sm:$0xff]
        %v992 = vld [vmem:[%s931 + $0x128] sm:$0xff]
        %v993 = vld [vmem:[%s931 + $0x130] sm:$0xff]
        %v994 = vld [vmem:[%s931 + $0x138] sm:$0xff]
        %v995 = vld [vmem:[%s931 + $0x140] sm:$0xff]
        %v996 = vld [vmem:[%s931 + $0x148] sm:$0xff]
        %v997 = vld [vmem:[%s931 + $0x150] sm:$0xff]
        %v998 = vld [vmem:[%s931 + $0x158] sm:$0xff]
        %v999 = vld [vmem:[%s931 + $0x160] sm:$0xff]
        %v1000 = vld [vmem:[%s931 + $0x168] sm:$0xff]
        %v1001 = vld [vmem:[%s931 + $0x170] sm:$0xff]
        %v1002 = vld [vmem:[%s931 + $0x178] sm:$0xff]
        %v1003 = vld [vmem:[%s931 + $0x180] sm:$0xff]
        %v1004 = vld [vmem:[%s931 + $0x188] sm:$0xff]
        %v1005 = vld [vmem:[%s931 + $0x190] sm:$0xff]
        %v1006 = vld [vmem:[%s931 + $0x198] sm:$0xff]
        %v1007 = vld [vmem:[%s931 + $0x1a0] sm:$0xff]
        %v1008 = vld [vmem:[%s931 + $0x1a8] sm:$0xff]
        %v1009 = vld [vmem:[%s931 + $0x1b0] sm:$0xff]
        %v1010 = vld [vmem:[%s931 + $0x1b8] sm:$0xff]
        %v1011 = vld [vmem:[%s931 + $0x1c0] sm:$0xff]
        %v1012 = vld [vmem:[%s931 + $0x1c8] sm:$0xff]
        %v1013 = vld [vmem:[%s931 + $0x1d0] sm:$0xff]
        %v1014 = vld [vmem:[%s931 + $0x1d8] sm:$0xff]
        %v1015 = vld [vmem:[%s931 + $0x1e0] sm:$0xff]
        %v1016 = vld [vmem:[%s931 + $0x1e8] sm:$0xff]
        %v1017 = vld [vmem:[%s931 + $0x1f0] sm:$0xff]
        %v1018 = vld [vmem:[%s931 + $0x1f8] sm:$0xff]
        %v1019 = vld [vmem:[%s931 + $0x200] sm:$0xff]
        %v1020 = vld [vmem:[%s931 + $0x208] sm:$0xff]
        %v1021 = vld [vmem:[%s931 + $0x210] sm:$0xff]
        %v1022 = vld [vmem:[%s931 + $0x218] sm:$0xff]
        %v1023 = vld [vmem:[%s931 + $0x220] sm:$0xff]
        %v1024 = vld [vmem:[%s931 + $0x228] sm:$0xff]
        %v1025 = vld [vmem:[%s931 + $0x230] sm:$0xff]
        %v1026 = vld [vmem:[%s931 + $0x238] sm:$0xff]
        %v1027 = vld [vmem:[%s931 + $0x240] sm:$0xff]
        %v1028 = vld [vmem:[%s931 + $0x248] sm:$0xff]
        %v1029 = vld [vmem:[%s931 + $0x250] sm:$0xff]
        %v1030 = vld [vmem:[%s931 + $0x258] sm:$0xff]
        %v1031 = vld [vmem:[%s931 + $0x260] sm:$0xff]
        %v1032 = vld [vmem:[%s931 + $0x268] sm:$0xff]
        %v1033 = vld [vmem:[%s931 + $0x270] sm:$0xff]
        %v1034 = vld [vmem:[%s931 + $0x278] sm:$0xff]
        %v1035 = vld [vmem:[%s931 + $0x280] sm:$0xff]
        %v1036 = vld [vmem:[%s931 + $0x288] sm:$0xff]
        %v1037 = vld [vmem:[%s931 + $0x290] sm:$0xff]
        %v1038 = vld [vmem:[%s931 + $0x298] sm:$0xff]
        %v1039 = vld [vmem:[%s931 + $0x2a0] sm:$0xff]
        %v1040 = vld [vmem:[%s931 + $0x2a8] sm:$0xff]
        %v1041 = vld [vmem:[%s931 + $0x2b0] sm:$0xff]
        %v1042 = vld [vmem:[%s931 + $0x2b8] sm:$0xff]
        %v1043 = vld [vmem:[%s931 + $0x2c0] sm:$0xff]
        %v1044 = vld [vmem:[%s931 + $0x2c8] sm:$0xff]
        %v1045 = vld [vmem:[%s931 + $0x2d0] sm:$0xff]
        %v1046 = vld [vmem:[%s931 + $0x2d8] sm:$0xff]
        %v1047 = vld [vmem:[%s931 + $0x2e0] sm:$0xff]
        %v1048 = vld [vmem:[%s931 + $0x2e8] sm:$0xff]
        %v1049 = vld [vmem:[%s931 + $0x2f0] sm:$0xff]
        %v1050 = vld [vmem:[%s931 + $0x2f8] sm:$0xff]
        %vm1051 = vcmask 523264
        %v1053 = vsel %vm1051, %v953, 0
        %v1056 = vsel %vm1051, %v954, 0
        %1058 = vmatprep.subr.mxu0 0.0
        %1059 = vmatpush1.msra.mxu0 0.0
        %1060 = vmatprep.subr.mxu0 0.0
        %1061 = vmatpush1.msra.mxu0 0.0
        %1062 = vmatprep.subr.mxu0 0.0
        %1063 = vmatpush1.msra.mxu0 0.0
        %1064 = vmatprep.subr.mxu0 0.0
        %1065 = vmatpush1.msra.mxu0 0.0
        %1066 = vmatprep.subr.mxu0 0.0
        %1067 = vmatpush1.msra.mxu0 0.0
        %1068 = vmatprep.subr.mxu0 0.0
        %1069 = vmatpush1.msra.mxu0 0.0
        %1070 = vmatprep.subr.mxu0 0.0
        %1071 = vmatpush1.msra.mxu0 0.0
        %1072 = vmatprep.subr.mxu0 0.0
        %1073 = vmatpush1.msra.mxu0 0.0
        %1074 = vmatprep.subr.mxu0 %v1040
        %1075 = vmatpush1.msra.mxu0 %v1039
        %1076 = vmatprep.subr.mxu0 %v1028
        %1077 = vmatpush1.msra.mxu0 %v1027
        %1078 = vmatprep.subr.mxu0 %v1016
        %1079 = vmatpush1.msra.mxu0 %v1015
        %1080 = vmatprep.subr.mxu0 %v1004
        %1081 = vmatpush1.msra.mxu0 %v1003
        %1082 = vmatprep.subr.mxu0 %v992
        %1083 = vmatpush1.msra.mxu0 %v991
        %1084 = vmatprep.subr.mxu0 %v980
        %1085 = vmatpush1.msra.mxu0 %v979
        %1086 = vmatprep.subr.mxu0 %v968
        %1087 = vmatpush1.msra.mxu0 %v967
        %1088 = vmatprep.subr.mxu0 %v956
        %1089 = vmatpush1.msra.mxu0 %v955
        %1090 = vmatprep.subr.mxu0 0.0
        %1091 = vmatpush2.msra.mxu0 0.0
        %1092 = vmatprep.subr.mxu0 0.0
        %1093 = vmatpush2.msra.mxu0 0.0
        %1094 = vmatprep.subr.mxu0 0.0
        %1095 = vmatpush2.msra.mxu0 0.0
        %1096 = vmatprep.subr.mxu0 0.0
        %1097 = vmatpush2.msra.mxu0 0.0
        %1098 = vmatprep.subr.mxu0 0.0
        %1099 = vmatpush2.msra.mxu0 0.0
        %1100 = vmatprep.subr.mxu0 0.0
        %1101 = vmatpush2.msra.mxu0 0.0
        %1102 = vmatprep.subr.mxu0 0.0
        %1103 = vmatpush2.msra.mxu0 0.0
        %1104 = vmatprep.subr.mxu0 0.0
        %1105 = vmatpush2.msra.mxu0 0.0
        %1106 = vmatprep.subr.mxu0 0.0
        %1107 = vmatpush2.msra.mxu0 0.0
        %1108 = vmatprep.subr.mxu0 0.0
        %1109 = vmatpush2.msra.mxu0 0.0
        %1110 = vmatprep.subr.mxu0 0.0
        %1111 = vmatpush2.msra.mxu0 0.0
        %1112 = vmatprep.subr.mxu0 0.0
        %1113 = vmatpush2.msra.mxu0 0.0
        %1114 = vmatprep.subr.mxu0 0.0
        %1115 = vmatpush2.msra.mxu0 0.0
        %1116 = vmatprep.subr.mxu0 0.0
        %1117 = vmatpush2.msra.mxu0 0.0
        %1118 = vmatprep.subr.mxu0 0.0
        %1119 = vmatpush2.msra.mxu0 0.0
        %1120 = vmatprep.subr.mxu0 0.0
        %1121 = vmatpush2.msra.mxu0 0.0
        %1122 = vmatprep.mubr.f32.mxu0 0.0
        %1123 = vmatmul.mubr.f32.gmra.mxu0 %v1053
        %v1124 = vpop.f32.mrf.mxu0
        %v1125 = vadd.f32 0.0, %v1124
        %v1126 = vpop.f32.mrf.mxu0
        %v1127 = vadd.f32 0.0, %v1126
        %1128 = vmatprep.mubr.f32.mxu0 0.0
        %1129 = vmatmul.mubr.f32.gmra.mxu0 %v1056
        %v1130 = vpop.f32.mrf.mxu0
        %v1131 = vadd.f32 0.0, %v1130
        %v1132 = vpop.f32.mrf.mxu0
        %v1133 = vadd.f32 0.0, %v1132
        %1134 = vdwg.mxu0
        %1135 = vmatprep.subr.mxu0 0.0
        %1136 = vmatpush1.msra.mxu0 0.0
        %1137 = vmatprep.subr.mxu0 0.0
        %1138 = vmatpush1.msra.mxu0 0.0
        %1139 = vmatprep.subr.mxu0 0.0
        %1140 = vmatpush1.msra.mxu0 0.0
        %1141 = vmatprep.subr.mxu0 0.0
        %1142 = vmatpush1.msra.mxu0 0.0
        %1143 = vmatprep.subr.mxu0 0.0
        %1144 = vmatpush1.msra.mxu0 0.0
        %1145 = vmatprep.subr.mxu0 0.0
        %1146 = vmatpush1.msra.mxu0 0.0
        %1147 = vmatprep.subr.mxu0 0.0
        %1148 = vmatpush1.msra.mxu0 0.0
        %1149 = vmatprep.subr.mxu0 0.0
        %1150 = vmatpush1.msra.mxu0 0.0
        %1151 = vmatprep.subr.mxu0 %v1042
        %1152 = vmatpush1.msra.mxu0 %v1041
        %1153 = vmatprep.subr.mxu0 %v1030
        %1154 = vmatpush1.msra.mxu0 %v1029
        %1155 = vmatprep.subr.mxu0 %v1018
        %1156 = vmatpush1.msra.mxu0 %v1017
        %1157 = vmatprep.subr.mxu0 %v1006
        %1158 = vmatpush1.msra.mxu0 %v1005
        %1159 = vmatprep.subr.mxu0 %v994
        %1160 = vmatpush1.msra.mxu0 %v993
        %1161 = vmatprep.subr.mxu0 %v982
        %1162 = vmatpush1.msra.mxu0 %v981
        %1163 = vmatprep.subr.mxu0 %v970
        %1164 = vmatpush1.msra.mxu0 %v969
        %1165 = vmatprep.subr.mxu0 %v958
        %1166 = vmatpush1.msra.mxu0 %v957
        %1167 = vmatprep.subr.mxu0 0.0
        %1168 = vmatpush2.msra.mxu0 0.0
        %1169 = vmatprep.subr.mxu0 0.0
        %1170 = vmatpush2.msra.mxu0 0.0
        %1171 = vmatprep.subr.mxu0 0.0
        %1172 = vmatpush2.msra.mxu0 0.0
        %1173 = vmatprep.subr.mxu0 0.0
        %1174 = vmatpush2.msra.mxu0 0.0
        %1175 = vmatprep.subr.mxu0 0.0
        %1176 = vmatpush2.msra.mxu0 0.0
        %1177 = vmatprep.subr.mxu0 0.0
        %1178 = vmatpush2.msra.mxu0 0.0
        %1179 = vmatprep.subr.mxu0 0.0
        %1180 = vmatpush2.msra.mxu0 0.0
        %1181 = vmatprep.subr.mxu0 0.0
        %1182 = vmatpush2.msra.mxu0 0.0
        %1183 = vmatprep.subr.mxu0 0.0
        %1184 = vmatpush2.msra.mxu0 0.0
        %1185 = vmatprep.subr.mxu0 0.0
        %1186 = vmatpush2.msra.mxu0 0.0
        %1187 = vmatprep.subr.mxu0 0.0
        %1188 = vmatpush2.msra.mxu0 0.0
        %1189 = vmatprep.subr.mxu0 0.0
        %1190 = vmatpush2.msra.mxu0 0.0
        %1191 = vmatprep.subr.mxu0 0.0
        %1192 = vmatpush2.msra.mxu0 0.0
        %1193 = vmatprep.subr.mxu0 0.0
        %1194 = vmatpush2.msra.mxu0 0.0
        %1195 = vmatprep.subr.mxu0 0.0
        %1196 = vmatpush2.msra.mxu0 0.0
        %1197 = vmatprep.subr.mxu0 0.0
        %1198 = vmatpush2.msra.mxu0 0.0
        %1199 = vmatprep.mubr.f32.mxu0 0.0
        %1200 = vmatmul.mubr.f32.gmra.mxu0 %v1053
        %v1201 = vpop.f32.mrf.mxu0
        %v1202 = vadd.f32 0.0, %v1201
        %v1203 = vpop.f32.mrf.mxu0
        %v1204 = vadd.f32 0.0, %v1203
        %1205 = vmatprep.mubr.f32.mxu0 0.0
        %1206 = vmatmul.mubr.f32.gmra.mxu0 %v1056
        %v1207 = vpop.f32.mrf.mxu0
        %v1208 = vadd.f32 0.0, %v1207
        %v1209 = vpop.f32.mrf.mxu0
        %v1210 = vadd.f32 0.0, %v1209
        %1211 = vdwg.mxu0
        %1212 = vmatprep.subr.mxu0 0.0
        %1213 = vmatpush1.msra.mxu0 0.0
        %1214 = vmatprep.subr.mxu0 0.0
        %1215 = vmatpush1.msra.mxu0 0.0
        %1216 = vmatprep.subr.mxu0 0.0
        %1217 = vmatpush1.msra.mxu0 0.0
        %1218 = vmatprep.subr.mxu0 0.0
        %1219 = vmatpush1.msra.mxu0 0.0
        %1220 = vmatprep.subr.mxu0 0.0
        %1221 = vmatpush1.msra.mxu0 0.0
        %1222 = vmatprep.subr.mxu0 0.0
        %1223 = vmatpush1.msra.mxu0 0.0
        %1224 = vmatprep.subr.mxu0 0.0
        %1225 = vmatpush1.msra.mxu0 0.0
        %1226 = vmatprep.subr.mxu0 0.0
        %1227 = vmatpush1.msra.mxu0 0.0
        %1228 = vmatprep.subr.mxu0 %v1044
        %1229 = vmatpush1.msra.mxu0 %v1043
        %1230 = vmatprep.subr.mxu0 %v1032
        %1231 = vmatpush1.msra.mxu0 %v1031
        %1232 = vmatprep.subr.mxu0 %v1020
        %1233 = vmatpush1.msra.mxu0 %v1019
        %1234 = vmatprep.subr.mxu0 %v1008
        %1235 = vmatpush1.msra.mxu0 %v1007
        %1236 = vmatprep.subr.mxu0 %v996
        %1237 = vmatpush1.msra.mxu0 %v995
        %1238 = vmatprep.subr.mxu0 %v984
        %1239 = vmatpush1.msra.mxu0 %v983
        %1240 = vmatprep.subr.mxu0 %v972
        %1241 = vmatpush1.msra.mxu0 %v971
        %1242 = vmatprep.subr.mxu0 %v960
        %1243 = vmatpush1.msra.mxu0 %v959
        %1244 = vmatprep.subr.mxu0 0.0
        %1245 = vmatpush2.msra.mxu0 0.0
        %1246 = vmatprep.subr.mxu0 0.0
        %1247 = vmatpush2.msra.mxu0 0.0
        %1248 = vmatprep.subr.mxu0 0.0
        %1249 = vmatpush2.msra.mxu0 0.0
        %1250 = vmatprep.subr.mxu0 0.0
        %1251 = vmatpush2.msra.mxu0 0.0
        %1252 = vmatprep.subr.mxu0 0.0
        %1253 = vmatpush2.msra.mxu0 0.0
        %1254 = vmatprep.subr.mxu0 0.0
        %1255 = vmatpush2.msra.mxu0 0.0
        %1256 = vmatprep.subr.mxu0 0.0
        %1257 = vmatpush2.msra.mxu0 0.0
        %1258 = vmatprep.subr.mxu0 0.0
        %1259 = vmatpush2.msra.mxu0 0.0
        %1260 = vmatprep.subr.mxu0 0.0
        %1261 = vmatpush2.msra.mxu0 0.0
        %1262 = vmatprep.subr.mxu0 0.0
        %1263 = vmatpush2.msra.mxu0 0.0
        %1264 = vmatprep.subr.mxu0 0.0
        %1265 = vmatpush2.msra.mxu0 0.0
        %1266 = vmatprep.subr.mxu0 0.0
        %1267 = vmatpush2.msra.mxu0 0.0
        %1268 = vmatprep.subr.mxu0 0.0
        %1269 = vmatpush2.msra.mxu0 0.0
        %1270 = vmatprep.subr.mxu0 0.0
        %1271 = vmatpush2.msra.mxu0 0.0
        %1272 = vmatprep.subr.mxu0 0.0
        %1273 = vmatpush2.msra.mxu0 0.0
        %1274 = vmatprep.subr.mxu0 0.0
        %1275 = vmatpush2.msra.mxu0 0.0
        %1276 = vmatprep.mubr.f32.mxu0 0.0
        %1277 = vmatmul.mubr.f32.gmra.mxu0 %v1053
        %v1278 = vpop.f32.mrf.mxu0
        %v1279 = vadd.f32 0.0, %v1278
        %v1280 = vpop.f32.mrf.mxu0
        %v1281 = vadd.f32 0.0, %v1280
        %1282 = vmatprep.mubr.f32.mxu0 0.0
        %1283 = vmatmul.mubr.f32.gmra.mxu0 %v1056
        %v1284 = vpop.f32.mrf.mxu0
        %v1285 = vadd.f32 0.0, %v1284
        %v1286 = vpop.f32.mrf.mxu0
        %v1287 = vadd.f32 0.0, %v1286
        %1288 = vdwg.mxu0
        %1289 = vmatprep.subr.mxu0 0.0
        %1290 = vmatpush1.msra.mxu0 0.0
        %1291 = vmatprep.subr.mxu0 0.0
        %1292 = vmatpush1.msra.mxu0 0.0
        %1293 = vmatprep.subr.mxu0 0.0
        %1294 = vmatpush1.msra.mxu0 0.0
        %1295 = vmatprep.subr.mxu0 0.0
        %1296 = vmatpush1.msra.mxu0 0.0
        %1297 = vmatprep.subr.mxu0 0.0
        %1298 = vmatpush1.msra.mxu0 0.0
        %1299 = vmatprep.subr.mxu0 0.0
        %1300 = vmatpush1.msra.mxu0 0.0
        %1301 = vmatprep.subr.mxu0 0.0
        %1302 = vmatpush1.msra.mxu0 0.0
        %1303 = vmatprep.subr.mxu0 0.0
        %1304 = vmatpush1.msra.mxu0 0.0
        %1305 = vmatprep.subr.mxu0 %v1046
        %1306 = vmatpush1.msra.mxu0 %v1045
        %1307 = vmatprep.subr.mxu0 %v1034
        %1308 = vmatpush1.msra.mxu0 %v1033
        %1309 = vmatprep.subr.mxu0 %v1022
        %1310 = vmatpush1.msra.mxu0 %v1021
        %1311 = vmatprep.subr.mxu0 %v1010
        %1312 = vmatpush1.msra.mxu0 %v1009
        %1313 = vmatprep.subr.mxu0 %v998
        %1314 = vmatpush1.msra.mxu0 %v997
        %1315 = vmatprep.subr.mxu0 %v986
        %1316 = vmatpush1.msra.mxu0 %v985
        %1317 = vmatprep.subr.mxu0 %v974
        %1318 = vmatpush1.msra.mxu0 %v973
        %1319 = vmatprep.subr.mxu0 %v962
        %1320 = vmatpush1.msra.mxu0 %v961
        %1321 = vmatprep.subr.mxu0 0.0
        %1322 = vmatpush2.msra.mxu0 0.0
        %1323 = vmatprep.subr.mxu0 0.0
        %1324 = vmatpush2.msra.mxu0 0.0
        %1325 = vmatprep.subr.mxu0 0.0
        %1326 = vmatpush2.msra.mxu0 0.0
        %1327 = vmatprep.subr.mxu0 0.0
        %1328 = vmatpush2.msra.mxu0 0.0
        %1329 = vmatprep.subr.mxu0 0.0
        %1330 = vmatpush2.msra.mxu0 0.0
        %1331 = vmatprep.subr.mxu0 0.0
        %1332 = vmatpush2.msra.mxu0 0.0
        %1333 = vmatprep.subr.mxu0 0.0
        %1334 = vmatpush2.msra.mxu0 0.0
        %1335 = vmatprep.subr.mxu0 0.0
        %1336 = vmatpush2.msra.mxu0 0.0
        %1337 = vmatprep.subr.mxu0 0.0
        %1338 = vmatpush2.msra.mxu0 0.0
        %1339 = vmatprep.subr.mxu0 0.0
        %1340 = vmatpush2.msra.mxu0 0.0
        %1341 = vmatprep.subr.mxu0 0.0
        %1342 = vmatpush2.msra.mxu0 0.0
        %1343 = vmatprep.subr.mxu0 0.0
        %1344 = vmatpush2.msra.mxu0 0.0
        %1345 = vmatprep.subr.mxu0 0.0
        %1346 = vmatpush2.msra.mxu0 0.0
        %1347 = vmatprep.subr.mxu0 0.0
        %1348 = vmatpush2.msra.mxu0 0.0
        %1349 = vmatprep.subr.mxu0 0.0
        %1350 = vmatpush2.msra.mxu0 0.0
        %1351 = vmatprep.subr.mxu0 0.0
        %1352 = vmatpush2.msra.mxu0 0.0
        %1353 = vmatprep.mubr.f32.mxu0 0.0
        %1354 = vmatmul.mubr.f32.gmra.mxu0 %v1053
        %v1355 = vpop.f32.mrf.mxu0
        %v1356 = vadd.f32 0.0, %v1355
        %v1357 = vpop.f32.mrf.mxu0
        %v1358 = vadd.f32 0.0, %v1357
        %1359 = vmatprep.mubr.f32.mxu0 0.0
        %1360 = vmatmul.mubr.f32.gmra.mxu0 %v1056
        %v1361 = vpop.f32.mrf.mxu0
        %v1362 = vadd.f32 0.0, %v1361
        %v1363 = vpop.f32.mrf.mxu0
        %v1364 = vadd.f32 0.0, %v1363
        %1365 = vdwg.mxu0
        %1366 = vmatprep.subr.mxu0 0.0
        %1367 = vmatpush1.msra.mxu0 0.0
        %1368 = vmatprep.subr.mxu0 0.0
        %1369 = vmatpush1.msra.mxu0 0.0
        %1370 = vmatprep.subr.mxu0 0.0
        %1371 = vmatpush1.msra.mxu0 0.0
        %1372 = vmatprep.subr.mxu0 0.0
        %1373 = vmatpush1.msra.mxu0 0.0
        %1374 = vmatprep.subr.mxu0 0.0
        %1375 = vmatpush1.msra.mxu0 0.0
        %1376 = vmatprep.subr.mxu0 0.0
        %1377 = vmatpush1.msra.mxu0 0.0
        %1378 = vmatprep.subr.mxu0 0.0
        %1379 = vmatpush1.msra.mxu0 0.0
        %1380 = vmatprep.subr.mxu0 0.0
        %1381 = vmatpush1.msra.mxu0 0.0
        %1382 = vmatprep.subr.mxu0 %v1048
        %1383 = vmatpush1.msra.mxu0 %v1047
        %1384 = vmatprep.subr.mxu0 %v1036
        %1385 = vmatpush1.msra.mxu0 %v1035
        %1386 = vmatprep.subr.mxu0 %v1024
        %1387 = vmatpush1.msra.mxu0 %v1023
        %1388 = vmatprep.subr.mxu0 %v1012
        %1389 = vmatpush1.msra.mxu0 %v1011
        %1390 = vmatprep.subr.mxu0 %v1000
        %1391 = vmatpush1.msra.mxu0 %v999
        %1392 = vmatprep.subr.mxu0 %v988
        %1393 = vmatpush1.msra.mxu0 %v987
        %1394 = vmatprep.subr.mxu0 %v976
        %1395 = vmatpush1.msra.mxu0 %v975
        %1396 = vmatprep.subr.mxu0 %v964
        %1397 = vmatpush1.msra.mxu0 %v963
        %1398 = vmatprep.subr.mxu0 0.0
        %1399 = vmatpush2.msra.mxu0 0.0
        %1400 = vmatprep.subr.mxu0 0.0
        %1401 = vmatpush2.msra.mxu0 0.0
        %1402 = vmatprep.subr.mxu0 0.0
        %1403 = vmatpush2.msra.mxu0 0.0
        %1404 = vmatprep.subr.mxu0 0.0
        %1405 = vmatpush2.msra.mxu0 0.0
        %1406 = vmatprep.subr.mxu0 0.0
        %1407 = vmatpush2.msra.mxu0 0.0
        %1408 = vmatprep.subr.mxu0 0.0
        %1409 = vmatpush2.msra.mxu0 0.0
        %1410 = vmatprep.subr.mxu0 0.0
        %1411 = vmatpush2.msra.mxu0 0.0
        %1412 = vmatprep.subr.mxu0 0.0
        %1413 = vmatpush2.msra.mxu0 0.0
        %1414 = vmatprep.subr.mxu0 0.0
        %1415 = vmatpush2.msra.mxu0 0.0
        %1416 = vmatprep.subr.mxu0 0.0
        %1417 = vmatpush2.msra.mxu0 0.0
        %1418 = vmatprep.subr.mxu0 0.0
        %1419 = vmatpush2.msra.mxu0 0.0
        %1420 = vmatprep.subr.mxu0 0.0
        %1421 = vmatpush2.msra.mxu0 0.0
        %1422 = vmatprep.subr.mxu0 0.0
        %1423 = vmatpush2.msra.mxu0 0.0
        %1424 = vmatprep.subr.mxu0 0.0
        %1425 = vmatpush2.msra.mxu0 0.0
        %1426 = vmatprep.subr.mxu0 0.0
        %1427 = vmatpush2.msra.mxu0 0.0
        %1428 = vmatprep.subr.mxu0 0.0
        %1429 = vmatpush2.msra.mxu0 0.0
        %1430 = vmatprep.mubr.f32.mxu0 0.0
        %1431 = vmatmul.mubr.f32.gmra.mxu0 %v1053
        %v1432 = vpop.f32.mrf.mxu0
        %v1433 = vadd.f32 0.0, %v1432
        %v1434 = vpop.f32.mrf.mxu0
        %v1435 = vadd.f32 0.0, %v1434
        %1436 = vmatprep.mubr.f32.mxu0 0.0
        %1437 = vmatmul.mubr.f32.gmra.mxu0 %v1056
        %v1438 = vpop.f32.mrf.mxu0
        %v1439 = vadd.f32 0.0, %v1438
        %v1440 = vpop.f32.mrf.mxu0
        %v1441 = vadd.f32 0.0, %v1440
        %1442 = vdwg.mxu0
        %1443 = vmatprep.subr.mxu0 0.0
        %1444 = vmatpush1.msra.mxu0 0.0
        %1445 = vmatprep.subr.mxu0 0.0
        %1446 = vmatpush1.msra.mxu0 0.0
        %1447 = vmatprep.subr.mxu0 0.0
        %1448 = vmatpush1.msra.mxu0 0.0
        %1449 = vmatprep.subr.mxu0 0.0
        %1450 = vmatpush1.msra.mxu0 0.0
        %1451 = vmatprep.subr.mxu0 0.0
        %1452 = vmatpush1.msra.mxu0 0.0
        %1453 = vmatprep.subr.mxu0 0.0
        %1454 = vmatpush1.msra.mxu0 0.0
        %1455 = vmatprep.subr.mxu0 0.0
        %1456 = vmatpush1.msra.mxu0 0.0
        %1457 = vmatprep.subr.mxu0 0.0
        %1458 = vmatpush1.msra.mxu0 0.0
        %1459 = vmatprep.subr.mxu0 %v1050
        %1460 = vmatpush1.msra.mxu0 %v1049
        %1461 = vmatprep.subr.mxu0 %v1038
        %1462 = vmatpush1.msra.mxu0 %v1037
        %1463 = vmatprep.subr.mxu0 %v1026
        %1464 = vmatpush1.msra.mxu0 %v1025
        %1465 = vmatprep.subr.mxu0 %v1014
        %1466 = vmatpush1.msra.mxu0 %v1013
        %1467 = vmatprep.subr.mxu0 %v1002
        %1468 = vmatpush1.msra.mxu0 %v1001
        %1469 = vmatprep.subr.mxu0 %v990
        %1470 = vmatpush1.msra.mxu0 %v989
        %1471 = vmatprep.subr.mxu0 %v978
        %1472 = vmatpush1.msra.mxu0 %v977
        %1473 = vmatprep.subr.mxu0 %v966
        %1474 = vmatpush1.msra.mxu0 %v965
        %1475 = vmatprep.subr.mxu0 0.0
        %1476 = vmatpush2.msra.mxu0 0.0
        %1477 = vmatprep.subr.mxu0 0.0
        %1478 = vmatpush2.msra.mxu0 0.0
        %1479 = vmatprep.subr.mxu0 0.0
        %1480 = vmatpush2.msra.mxu0 0.0
        %1481 = vmatprep.subr.mxu0 0.0
        %1482 = vmatpush2.msra.mxu0 0.0
        %1483 = vmatprep.subr.mxu0 0.0
        %1484 = vmatpush2.msra.mxu0 0.0
        %1485 = vmatprep.subr.mxu0 0.0
        %1486 = vmatpush2.msra.mxu0 0.0
        %1487 = vmatprep.subr.mxu0 0.0
        %1488 = vmatpush2.msra.mxu0 0.0
        %1489 = vmatprep.subr.mxu0 0.0
        %1490 = vmatpush2.msra.mxu0 0.0
        %1491 = vmatprep.subr.mxu0 0.0
        %1492 = vmatpush2.msra.mxu0 0.0
        %1493 = vmatprep.subr.mxu0 0.0
        %1494 = vmatpush2.msra.mxu0 0.0
        %1495 = vmatprep.subr.mxu0 0.0
        %1496 = vmatpush2.msra.mxu0 0.0
        %1497 = vmatprep.subr.mxu0 0.0
        %1498 = vmatpush2.msra.mxu0 0.0
        %1499 = vmatprep.subr.mxu0 0.0
        %1500 = vmatpush2.msra.mxu0 0.0
        %1501 = vmatprep.subr.mxu0 0.0
        %1502 = vmatpush2.msra.mxu0 0.0
        %1503 = vmatprep.subr.mxu0 0.0
        %1504 = vmatpush2.msra.mxu0 0.0
        %1505 = vmatprep.subr.mxu0 0.0
        %1506 = vmatpush2.msra.mxu0 0.0
        %1507 = vmatprep.mubr.f32.mxu0 0.0
        %1508 = vmatmul.mubr.f32.gmra.mxu0 %v1053
        %v1509 = vpop.f32.mrf.mxu0
        %v1510 = vadd.f32 0.0, %v1509
        %v1511 = vpop.f32.mrf.mxu0
        %v1512 = vadd.f32 0.0, %v1511
        %1513 = vmatprep.mubr.f32.mxu0 0.0
        %1514 = vmatmul.mubr.f32.gmra.mxu0 %v1056
        %v1515 = vpop.f32.mrf.mxu0
        %v1516 = vadd.f32 0.0, %v1515
        %v1517 = vpop.f32.mrf.mxu0
        %v1518 = vadd.f32 0.0, %v1517
        %1519 = vdwg.mxu0
        %s1520 = scalar_lea.vmem %s931, 768 [#allocation2]
        %v1521 = vld [vmem:[%s1520] sm:$0xff]
        %v1522 = vld [vmem:[%s1520 + $0x8] sm:$0xff]
        %v1523 = vld [vmem:[%s1520 + $0x10] sm:$0xff]
        %v1524 = vld [vmem:[%s1520 + $0x18] sm:$0xff]
        %v1525 = vld [vmem:[%s1520 + $0x20] sm:$0xff]
        %v1526 = vld [vmem:[%s1520 + $0x28] sm:$0xff]
        %v1527 = vld [vmem:[%s1520 + $0x30] sm:$0xff]
        %v1528 = vld [vmem:[%s1520 + $0x38] sm:$0xff]
        %v1529 = vld [vmem:[%s1520 + $0x40] sm:$0xff]
        %v1530 = vld [vmem:[%s1520 + $0x48] sm:$0xff]
        %v1531 = vld [vmem:[%s1520 + $0x50] sm:$0xff]
        %v1532 = vld [vmem:[%s1520 + $0x58] sm:$0xff]
        %v1533 = vld [vmem:[%s1520 + $0x60] sm:$0xff]
        %v1534 = vld [vmem:[%s1520 + $0x68] sm:$0xff]
        %v1535 = vld [vmem:[%s1520 + $0x70] sm:$0xff]
        %v1536 = vld [vmem:[%s1520 + $0x78] sm:$0xff]
        %v1537 = vld [vmem:[%s1520 + $0x80] sm:$0xff]
        %v1538 = vld [vmem:[%s1520 + $0x88] sm:$0xff]
        %v1539 = vld [vmem:[%s1520 + $0x90] sm:$0xff]
        %v1540 = vld [vmem:[%s1520 + $0x98] sm:$0xff]
        %v1541 = vld [vmem:[%s1520 + $0xa0] sm:$0xff]
        %v1542 = vld [vmem:[%s1520 + $0xa8] sm:$0xff]
        %v1543 = vld [vmem:[%s1520 + $0xb0] sm:$0xff]
        %v1544 = vld [vmem:[%s1520 + $0xb8] sm:$0xff]
        %v1545 = vld [vmem:[%s1520 + $0xc0] sm:$0xff]
        %v1546 = vld [vmem:[%s1520 + $0xc8] sm:$0xff]
        %v1547 = vld [vmem:[%s1520 + $0xd0] sm:$0xff]
        %v1548 = vld [vmem:[%s1520 + $0xd8] sm:$0xff]
        %v1549 = vld [vmem:[%s1520 + $0xe0] sm:$0xff]
        %v1550 = vld [vmem:[%s1520 + $0xe8] sm:$0xff]
        %v1551 = vld [vmem:[%s1520 + $0xf0] sm:$0xff]
        %v1552 = vld [vmem:[%s1520 + $0xf8] sm:$0xff]
        %v1553 = vld [vmem:[%s1520 + $0x100] sm:$0xff]
        %v1554 = vld [vmem:[%s1520 + $0x108] sm:$0xff]
        %v1555 = vld [vmem:[%s1520 + $0x110] sm:$0xff]
        %v1556 = vld [vmem:[%s1520 + $0x118] sm:$0xff]
        %v1557 = vld [vmem:[%s1520 + $0x120] sm:$0xff]
        %v1558 = vld [vmem:[%s1520 + $0x128] sm:$0xff]
        %v1559 = vld [vmem:[%s1520 + $0x130] sm:$0xff]
        %v1560 = vld [vmem:[%s1520 + $0x138] sm:$0xff]
        %v1561 = vld [vmem:[%s1520 + $0x140] sm:$0xff]
        %v1562 = vld [vmem:[%s1520 + $0x148] sm:$0xff]
        %v1563 = vld [vmem:[%s1520 + $0x150] sm:$0xff]
        %v1564 = vld [vmem:[%s1520 + $0x158] sm:$0xff]
        %v1565 = vld [vmem:[%s1520 + $0x160] sm:$0xff]
        %v1566 = vld [vmem:[%s1520 + $0x168] sm:$0xff]
        %v1567 = vld [vmem:[%s1520 + $0x170] sm:$0xff]
        %v1568 = vld [vmem:[%s1520 + $0x178] sm:$0xff]
        %v1569 = vld [vmem:[%s1520 + $0x180] sm:$0xff]
        %v1570 = vld [vmem:[%s1520 + $0x188] sm:$0xff]
        %v1571 = vld [vmem:[%s1520 + $0x190] sm:$0xff]
        %v1572 = vld [vmem:[%s1520 + $0x198] sm:$0xff]
        %v1573 = vld [vmem:[%s1520 + $0x1a0] sm:$0xff]
        %v1574 = vld [vmem:[%s1520 + $0x1a8] sm:$0xff]
        %v1575 = vld [vmem:[%s1520 + $0x1b0] sm:$0xff]
        %v1576 = vld [vmem:[%s1520 + $0x1b8] sm:$0xff]
        %v1577 = vld [vmem:[%s1520 + $0x1c0] sm:$0xff]
        %v1578 = vld [vmem:[%s1520 + $0x1c8] sm:$0xff]
        %v1579 = vld [vmem:[%s1520 + $0x1d0] sm:$0xff]
        %v1580 = vld [vmem:[%s1520 + $0x1d8] sm:$0xff]
        %v1581 = vld [vmem:[%s1520 + $0x1e0] sm:$0xff]
        %v1582 = vld [vmem:[%s1520 + $0x1e8] sm:$0xff]
        %v1583 = vld [vmem:[%s1520 + $0x1f0] sm:$0xff]
        %v1584 = vld [vmem:[%s1520 + $0x1f8] sm:$0xff]
        %v1585 = vld [vmem:[%s1520 + $0x200] sm:$0xff]
        %v1586 = vld [vmem:[%s1520 + $0x208] sm:$0xff]
        %v1587 = vld [vmem:[%s1520 + $0x210] sm:$0xff]
        %v1588 = vld [vmem:[%s1520 + $0x218] sm:$0xff]
        %v1589 = vld [vmem:[%s1520 + $0x220] sm:$0xff]
        %v1590 = vld [vmem:[%s1520 + $0x228] sm:$0xff]
        %v1591 = vld [vmem:[%s1520 + $0x230] sm:$0xff]
        %v1592 = vld [vmem:[%s1520 + $0x238] sm:$0xff]
        %v1593 = vld [vmem:[%s1520 + $0x240] sm:$0xff]
        %v1594 = vld [vmem:[%s1520 + $0x248] sm:$0xff]
        %v1595 = vld [vmem:[%s1520 + $0x250] sm:$0xff]
        %v1596 = vld [vmem:[%s1520 + $0x258] sm:$0xff]
        %v1597 = vld [vmem:[%s1520 + $0x260] sm:$0xff]
        %v1598 = vld [vmem:[%s1520 + $0x268] sm:$0xff]
        %v1599 = vld [vmem:[%s1520 + $0x270] sm:$0xff]
        %v1600 = vld [vmem:[%s1520 + $0x278] sm:$0xff]
        %v1601 = vld [vmem:[%s1520 + $0x280] sm:$0xff]
        %v1602 = vld [vmem:[%s1520 + $0x288] sm:$0xff]
        %v1603 = vld [vmem:[%s1520 + $0x290] sm:$0xff]
        %v1604 = vld [vmem:[%s1520 + $0x298] sm:$0xff]
        %v1605 = vld [vmem:[%s1520 + $0x2a0] sm:$0xff]
        %v1606 = vld [vmem:[%s1520 + $0x2a8] sm:$0xff]
        %v1607 = vld [vmem:[%s1520 + $0x2b0] sm:$0xff]
        %v1608 = vld [vmem:[%s1520 + $0x2b8] sm:$0xff]
        %v1609 = vld [vmem:[%s1520 + $0x2c0] sm:$0xff]
        %v1610 = vld [vmem:[%s1520 + $0x2c8] sm:$0xff]
        %v1611 = vld [vmem:[%s1520 + $0x2d0] sm:$0xff]
        %v1612 = vld [vmem:[%s1520 + $0x2d8] sm:$0xff]
        %v1613 = vld [vmem:[%s1520 + $0x2e0] sm:$0xff]
        %v1614 = vld [vmem:[%s1520 + $0x2e8] sm:$0xff]
        %v1615 = vld [vmem:[%s1520 + $0x2f0] sm:$0xff]
        %v1616 = vld [vmem:[%s1520 + $0x2f8] sm:$0xff]
        %1617 = vmatprep.subr.mxu0 0.0
        %1618 = vmatpush1.msra.mxu0 0.0
        %1619 = vmatprep.subr.mxu0 0.0
        %1620 = vmatpush1.msra.mxu0 0.0
        %1621 = vmatprep.subr.mxu0 0.0
        %1622 = vmatpush1.msra.mxu0 0.0
        %1623 = vmatprep.subr.mxu0 0.0
        %1624 = vmatpush1.msra.mxu0 0.0
        %1625 = vmatprep.subr.mxu0 0.0
        %1626 = vmatpush1.msra.mxu0 0.0
        %1627 = vmatprep.subr.mxu0 0.0
        %1628 = vmatpush1.msra.mxu0 0.0
        %1629 = vmatprep.subr.mxu0 0.0
        %1630 = vmatpush1.msra.mxu0 0.0
        %1631 = vmatprep.subr.mxu0 0.0
        %1632 = vmatpush1.msra.mxu0 0.0
        %1633 = vmatprep.subr.mxu0 %v1606
        %1634 = vmatpush1.msra.mxu0 %v1605
        %1635 = vmatprep.subr.mxu0 %v1594
        %1636 = vmatpush1.msra.mxu0 %v1593
        %1637 = vmatprep.subr.mxu0 %v1582
        %1638 = vmatpush1.msra.mxu0 %v1581
        %1639 = vmatprep.subr.mxu0 %v1570
        %1640 = vmatpush1.msra.mxu0 %v1569
        %1641 = vmatprep.subr.mxu0 %v1558
        %1642 = vmatpush1.msra.mxu0 %v1557
        %1643 = vmatprep.subr.mxu0 %v1546
        %1644 = vmatpush1.msra.mxu0 %v1545
        %1645 = vmatprep.subr.mxu0 %v1534
        %1646 = vmatpush1.msra.mxu0 %v1533
        %1647 = vmatprep.subr.mxu0 %v1522
        %1648 = vmatpush1.msra.mxu0 %v1521
        %1649 = vmatprep.subr.mxu0 0.0
        %1650 = vmatpush2.msra.mxu0 0.0
        %1651 = vmatprep.subr.mxu0 0.0
        %1652 = vmatpush2.msra.mxu0 0.0
        %1653 = vmatprep.subr.mxu0 0.0
        %1654 = vmatpush2.msra.mxu0 0.0
        %1655 = vmatprep.subr.mxu0 0.0
        %1656 = vmatpush2.msra.mxu0 0.0
        %1657 = vmatprep.subr.mxu0 0.0
        %1658 = vmatpush2.msra.mxu0 0.0
        %1659 = vmatprep.subr.mxu0 0.0
        %1660 = vmatpush2.msra.mxu0 0.0
        %1661 = vmatprep.subr.mxu0 0.0
        %1662 = vmatpush2.msra.mxu0 0.0
        %1663 = vmatprep.subr.mxu0 0.0
        %1664 = vmatpush2.msra.mxu0 0.0
        %1665 = vmatprep.subr.mxu0 0.0
        %1666 = vmatpush2.msra.mxu0 0.0
        %1667 = vmatprep.subr.mxu0 0.0
        %1668 = vmatpush2.msra.mxu0 0.0
        %1669 = vmatprep.subr.mxu0 0.0
        %1670 = vmatpush2.msra.mxu0 0.0
        %1671 = vmatprep.subr.mxu0 0.0
        %1672 = vmatpush2.msra.mxu0 0.0
        %1673 = vmatprep.subr.mxu0 0.0
        %1674 = vmatpush2.msra.mxu0 0.0
        %1675 = vmatprep.subr.mxu0 0.0
        %1676 = vmatpush2.msra.mxu0 0.0
        %1677 = vmatprep.subr.mxu0 0.0
        %1678 = vmatpush2.msra.mxu0 0.0
        %1679 = vmatprep.subr.mxu0 0.0
        %1680 = vmatpush2.msra.mxu0 0.0
        %1681 = vmatprep.mubr.f32.mxu0 0.0
        %1682 = vmatmul.mubr.f32.gmra.mxu0 %v1053
        %v1683 = vpop.f32.mrf.mxu0
        %v1684 = vadd.f32 0.0, %v1683
        %v1685 = vpop.f32.mrf.mxu0
        %v1686 = vadd.f32 0.0, %v1685
        %1687 = vmatprep.mubr.f32.mxu0 0.0
        %1688 = vmatmul.mubr.f32.gmra.mxu0 %v1056
        %v1689 = vpop.f32.mrf.mxu0
        %v1690 = vadd.f32 0.0, %v1689
        %v1691 = vpop.f32.mrf.mxu0
        %v1692 = vadd.f32 0.0, %v1691
        %1693 = vdwg.mxu0
        %1694 = vmatprep.subr.mxu0 0.0
        %1695 = vmatpush1.msra.mxu0 0.0
        %1696 = vmatprep.subr.mxu0 0.0
        %1697 = vmatpush1.msra.mxu0 0.0
        %1698 = vmatprep.subr.mxu0 0.0
        %1699 = vmatpush1.msra.mxu0 0.0
        %1700 = vmatprep.subr.mxu0 0.0
        %1701 = vmatpush1.msra.mxu0 0.0
        %1702 = vmatprep.subr.mxu0 0.0
        %1703 = vmatpush1.msra.mxu0 0.0
        %1704 = vmatprep.subr.mxu0 0.0
        %1705 = vmatpush1.msra.mxu0 0.0
        %1706 = vmatprep.subr.mxu0 0.0
        %1707 = vmatpush1.msra.mxu0 0.0
        %1708 = vmatprep.subr.mxu0 0.0
        %1709 = vmatpush1.msra.mxu0 0.0
        %1710 = vmatprep.subr.mxu0 %v1608
        %1711 = vmatpush1.msra.mxu0 %v1607
        %1712 = vmatprep.subr.mxu0 %v1596
        %1713 = vmatpush1.msra.mxu0 %v1595
        %1714 = vmatprep.subr.mxu0 %v1584
        %1715 = vmatpush1.msra.mxu0 %v1583
        %1716 = vmatprep.subr.mxu0 %v1572
        %1717 = vmatpush1.msra.mxu0 %v1571
        %1718 = vmatprep.subr.mxu0 %v1560
        %1719 = vmatpush1.msra.mxu0 %v1559
        %1720 = vmatprep.subr.mxu0 %v1548
        %1721 = vmatpush1.msra.mxu0 %v1547
        %1722 = vmatprep.subr.mxu0 %v1536
        %1723 = vmatpush1.msra.mxu0 %v1535
        %1724 = vmatprep.subr.mxu0 %v1524
        %1725 = vmatpush1.msra.mxu0 %v1523
        %1726 = vmatprep.subr.mxu0 0.0
        %1727 = vmatpush2.msra.mxu0 0.0
        %1728 = vmatprep.subr.mxu0 0.0
        %1729 = vmatpush2.msra.mxu0 0.0
        %1730 = vmatprep.subr.mxu0 0.0
        %1731 = vmatpush2.msra.mxu0 0.0
        %1732 = vmatprep.subr.mxu0 0.0
        %1733 = vmatpush2.msra.mxu0 0.0
        %1734 = vmatprep.subr.mxu0 0.0
        %1735 = vmatpush2.msra.mxu0 0.0
        %1736 = vmatprep.subr.mxu0 0.0
        %1737 = vmatpush2.msra.mxu0 0.0
        %1738 = vmatprep.subr.mxu0 0.0
        %1739 = vmatpush2.msra.mxu0 0.0
        %1740 = vmatprep.subr.mxu0 0.0
        %1741 = vmatpush2.msra.mxu0 0.0
        %1742 = vmatprep.subr.mxu0 0.0
        %1743 = vmatpush2.msra.mxu0 0.0
        %1744 = vmatprep.subr.mxu0 0.0
        %1745 = vmatpush2.msra.mxu0 0.0
        %1746 = vmatprep.subr.mxu0 0.0
        %1747 = vmatpush2.msra.mxu0 0.0
        %1748 = vmatprep.subr.mxu0 0.0
        %1749 = vmatpush2.msra.mxu0 0.0
        %1750 = vmatprep.subr.mxu0 0.0
        %1751 = vmatpush2.msra.mxu0 0.0
        %1752 = vmatprep.subr.mxu0 0.0
        %1753 = vmatpush2.msra.mxu0 0.0
        %1754 = vmatprep.subr.mxu0 0.0
        %1755 = vmatpush2.msra.mxu0 0.0
        %1756 = vmatprep.subr.mxu0 0.0
        %1757 = vmatpush2.msra.mxu0 0.0
        %1758 = vmatprep.mubr.f32.mxu0 0.0
        %1759 = vmatmul.mubr.f32.gmra.mxu0 %v1053
        %v1760 = vpop.f32.mrf.mxu0
        %v1761 = vadd.f32 0.0, %v1760
        %v1762 = vpop.f32.mrf.mxu0
        %v1763 = vadd.f32 0.0, %v1762
        %1764 = vmatprep.mubr.f32.mxu0 0.0
        %1765 = vmatmul.mubr.f32.gmra.mxu0 %v1056
        %v1766 = vpop.f32.mrf.mxu0
        %v1767 = vadd.f32 0.0, %v1766
        %v1768 = vpop.f32.mrf.mxu0
        %v1769 = vadd.f32 0.0, %v1768
        %1770 = vdwg.mxu0
        %1771 = vmatprep.subr.mxu0 0.0
        %1772 = vmatpush1.msra.mxu0 0.0
        %1773 = vmatprep.subr.mxu0 0.0
        %1774 = vmatpush1.msra.mxu0 0.0
        %1775 = vmatprep.subr.mxu0 0.0
        %1776 = vmatpush1.msra.mxu0 0.0
        %1777 = vmatprep.subr.mxu0 0.0
        %1778 = vmatpush1.msra.mxu0 0.0
        %1779 = vmatprep.subr.mxu0 0.0
        %1780 = vmatpush1.msra.mxu0 0.0
        %1781 = vmatprep.subr.mxu0 0.0
        %1782 = vmatpush1.msra.mxu0 0.0
        %1783 = vmatprep.subr.mxu0 0.0
        %1784 = vmatpush1.msra.mxu0 0.0
        %1785 = vmatprep.subr.mxu0 0.0
        %1786 = vmatpush1.msra.mxu0 0.0
        %1787 = vmatprep.subr.mxu0 %v1610
        %1788 = vmatpush1.msra.mxu0 %v1609
        %1789 = vmatprep.subr.mxu0 %v1598
        %1790 = vmatpush1.msra.mxu0 %v1597
        %1791 = vmatprep.subr.mxu0 %v1586
        %1792 = vmatpush1.msra.mxu0 %v1585
        %1793 = vmatprep.subr.mxu0 %v1574
        %1794 = vmatpush1.msra.mxu0 %v1573
        %1795 = vmatprep.subr.mxu0 %v1562
        %1796 = vmatpush1.msra.mxu0 %v1561
        %1797 = vmatprep.subr.mxu0 %v1550
        %1798 = vmatpush1.msra.mxu0 %v1549
        %1799 = vmatprep.subr.mxu0 %v1538
        %1800 = vmatpush1.msra.mxu0 %v1537
        %1801 = vmatprep.subr.mxu0 %v1526
        %1802 = vmatpush1.msra.mxu0 %v1525
        %1803 = vmatprep.subr.mxu0 0.0
        %1804 = vmatpush2.msra.mxu0 0.0
        %1805 = vmatprep.subr.mxu0 0.0
        %1806 = vmatpush2.msra.mxu0 0.0
        %1807 = vmatprep.subr.mxu0 0.0
        %1808 = vmatpush2.msra.mxu0 0.0
        %1809 = vmatprep.subr.mxu0 0.0
        %1810 = vmatpush2.msra.mxu0 0.0
        %1811 = vmatprep.subr.mxu0 0.0
        %1812 = vmatpush2.msra.mxu0 0.0
        %1813 = vmatprep.subr.mxu0 0.0
        %1814 = vmatpush2.msra.mxu0 0.0
        %1815 = vmatprep.subr.mxu0 0.0
        %1816 = vmatpush2.msra.mxu0 0.0
        %1817 = vmatprep.subr.mxu0 0.0
        %1818 = vmatpush2.msra.mxu0 0.0
        %1819 = vmatprep.subr.mxu0 0.0
        %1820 = vmatpush2.msra.mxu0 0.0
        %1821 = vmatprep.subr.mxu0 0.0
        %1822 = vmatpush2.msra.mxu0 0.0
        %1823 = vmatprep.subr.mxu0 0.0
        %1824 = vmatpush2.msra.mxu0 0.0
        %1825 = vmatprep.subr.mxu0 0.0
        %1826 = vmatpush2.msra.mxu0 0.0
        %1827 = vmatprep.subr.mxu0 0.0
        %1828 = vmatpush2.msra.mxu0 0.0
        %1829 = vmatprep.subr.mxu0 0.0
        %1830 = vmatpush2.msra.mxu0 0.0
        %1831 = vmatprep.subr.mxu0 0.0
        %1832 = vmatpush2.msra.mxu0 0.0
        %1833 = vmatprep.subr.mxu0 0.0
        %1834 = vmatpush2.msra.mxu0 0.0
        %1835 = vmatprep.mubr.f32.mxu0 0.0
        %1836 = vmatmul.mubr.f32.gmra.mxu0 %v1053
        %v1837 = vpop.f32.mrf.mxu0
        %v1838 = vadd.f32 0.0, %v1837
        %v1839 = vpop.f32.mrf.mxu0
        %v1840 = vadd.f32 0.0, %v1839
        %1841 = vmatprep.mubr.f32.mxu0 0.0
        %1842 = vmatmul.mubr.f32.gmra.mxu0 %v1056
        %v1843 = vpop.f32.mrf.mxu0
        %v1844 = vadd.f32 0.0, %v1843
        %v1845 = vpop.f32.mrf.mxu0
        %v1846 = vadd.f32 0.0, %v1845
        %1847 = vdwg.mxu0
        %1848 = vmatprep.subr.mxu0 0.0
        %1849 = vmatpush1.msra.mxu0 0.0
        %1850 = vmatprep.subr.mxu0 0.0
        %1851 = vmatpush1.msra.mxu0 0.0
        %1852 = vmatprep.subr.mxu0 0.0
        %1853 = vmatpush1.msra.mxu0 0.0
        %1854 = vmatprep.subr.mxu0 0.0
        %1855 = vmatpush1.msra.mxu0 0.0
        %1856 = vmatprep.subr.mxu0 0.0
        %1857 = vmatpush1.msra.mxu0 0.0
        %1858 = vmatprep.subr.mxu0 0.0
        %1859 = vmatpush1.msra.mxu0 0.0
        %1860 = vmatprep.subr.mxu0 0.0
        %1861 = vmatpush1.msra.mxu0 0.0
        %1862 = vmatprep.subr.mxu0 0.0
        %1863 = vmatpush1.msra.mxu0 0.0
        %1864 = vmatprep.subr.mxu0 %v1612
        %1865 = vmatpush1.msra.mxu0 %v1611
        %1866 = vmatprep.subr.mxu0 %v1600
        %1867 = vmatpush1.msra.mxu0 %v1599
        %1868 = vmatprep.subr.mxu0 %v1588
        %1869 = vmatpush1.msra.mxu0 %v1587
        %1870 = vmatprep.subr.mxu0 %v1576
        %1871 = vmatpush1.msra.mxu0 %v1575
        %1872 = vmatprep.subr.mxu0 %v1564
        %1873 = vmatpush1.msra.mxu0 %v1563
        %1874 = vmatprep.subr.mxu0 %v1552
        %1875 = vmatpush1.msra.mxu0 %v1551
        %1876 = vmatprep.subr.mxu0 %v1540
        %1877 = vmatpush1.msra.mxu0 %v1539
        %1878 = vmatprep.subr.mxu0 %v1528
        %1879 = vmatpush1.msra.mxu0 %v1527
        %1880 = vmatprep.subr.mxu0 0.0
        %1881 = vmatpush2.msra.mxu0 0.0
        %1882 = vmatprep.subr.mxu0 0.0
        %1883 = vmatpush2.msra.mxu0 0.0
        %1884 = vmatprep.subr.mxu0 0.0
        %1885 = vmatpush2.msra.mxu0 0.0
        %1886 = vmatprep.subr.mxu0 0.0
        %1887 = vmatpush2.msra.mxu0 0.0
        %1888 = vmatprep.subr.mxu0 0.0
        %1889 = vmatpush2.msra.mxu0 0.0
        %1890 = vmatprep.subr.mxu0 0.0
        %1891 = vmatpush2.msra.mxu0 0.0
        %1892 = vmatprep.subr.mxu0 0.0
        %1893 = vmatpush2.msra.mxu0 0.0
        %1894 = vmatprep.subr.mxu0 0.0
        %1895 = vmatpush2.msra.mxu0 0.0
        %1896 = vmatprep.subr.mxu0 0.0
        %1897 = vmatpush2.msra.mxu0 0.0
        %1898 = vmatprep.subr.mxu0 0.0
        %1899 = vmatpush2.msra.mxu0 0.0
        %1900 = vmatprep.subr.mxu0 0.0
        %1901 = vmatpush2.msra.mxu0 0.0
        %1902 = vmatprep.subr.mxu0 0.0
        %1903 = vmatpush2.msra.mxu0 0.0
        %1904 = vmatprep.subr.mxu0 0.0
        %1905 = vmatpush2.msra.mxu0 0.0
        %1906 = vmatprep.subr.mxu0 0.0
        %1907 = vmatpush2.msra.mxu0 0.0
        %1908 = vmatprep.subr.mxu0 0.0
        %1909 = vmatpush2.msra.mxu0 0.0
        %1910 = vmatprep.subr.mxu0 0.0
        %1911 = vmatpush2.msra.mxu0 0.0
        %1912 = vmatprep.mubr.f32.mxu0 0.0
        %1913 = vmatmul.mubr.f32.gmra.mxu0 %v1053
        %v1914 = vpop.f32.mrf.mxu0
        %v1915 = vadd.f32 0.0, %v1914
        %v1916 = vpop.f32.mrf.mxu0
        %v1917 = vadd.f32 0.0, %v1916
        %1918 = vmatprep.mubr.f32.mxu0 0.0
        %1919 = vmatmul.mubr.f32.gmra.mxu0 %v1056
        %v1920 = vpop.f32.mrf.mxu0
        %v1921 = vadd.f32 0.0, %v1920
        %v1922 = vpop.f32.mrf.mxu0
        %v1923 = vadd.f32 0.0, %v1922
        %1924 = vdwg.mxu0
        %1925 = vmatprep.subr.mxu0 0.0
        %1926 = vmatpush1.msra.mxu0 0.0
        %1927 = vmatprep.subr.mxu0 0.0
        %1928 = vmatpush1.msra.mxu0 0.0
        %1929 = vmatprep.subr.mxu0 0.0
        %1930 = vmatpush1.msra.mxu0 0.0
        %1931 = vmatprep.subr.mxu0 0.0
        %1932 = vmatpush1.msra.mxu0 0.0
        %1933 = vmatprep.subr.mxu0 0.0
        %1934 = vmatpush1.msra.mxu0 0.0
        %1935 = vmatprep.subr.mxu0 0.0
        %1936 = vmatpush1.msra.mxu0 0.0
        %1937 = vmatprep.subr.mxu0 0.0
        %1938 = vmatpush1.msra.mxu0 0.0
        %1939 = vmatprep.subr.mxu0 0.0
        %1940 = vmatpush1.msra.mxu0 0.0
        %1941 = vmatprep.subr.mxu0 %v1614
        %1942 = vmatpush1.msra.mxu0 %v1613
        %1943 = vmatprep.subr.mxu0 %v1602
        %1944 = vmatpush1.msra.mxu0 %v1601
        %1945 = vmatprep.subr.mxu0 %v1590
        %1946 = vmatpush1.msra.mxu0 %v1589
        %1947 = vmatprep.subr.mxu0 %v1578
        %1948 = vmatpush1.msra.mxu0 %v1577
        %1949 = vmatprep.subr.mxu0 %v1566
        %1950 = vmatpush1.msra.mxu0 %v1565
        %1951 = vmatprep.subr.mxu0 %v1554
        %1952 = vmatpush1.msra.mxu0 %v1553
        %1953 = vmatprep.subr.mxu0 %v1542
        %1954 = vmatpush1.msra.mxu0 %v1541
        %1955 = vmatprep.subr.mxu0 %v1530
        %1956 = vmatpush1.msra.mxu0 %v1529
        %1957 = vmatprep.subr.mxu0 0.0
        %1958 = vmatpush2.msra.mxu0 0.0
        %1959 = vmatprep.subr.mxu0 0.0
        %1960 = vmatpush2.msra.mxu0 0.0
        %1961 = vmatprep.subr.mxu0 0.0
        %1962 = vmatpush2.msra.mxu0 0.0
        %1963 = vmatprep.subr.mxu0 0.0
        %1964 = vmatpush2.msra.mxu0 0.0
        %1965 = vmatprep.subr.mxu0 0.0
        %1966 = vmatpush2.msra.mxu0 0.0
        %1967 = vmatprep.subr.mxu0 0.0
        %1968 = vmatpush2.msra.mxu0 0.0
        %1969 = vmatprep.subr.mxu0 0.0
        %1970 = vmatpush2.msra.mxu0 0.0
        %1971 = vmatprep.subr.mxu0 0.0
        %1972 = vmatpush2.msra.mxu0 0.0
        %1973 = vmatprep.subr.mxu0 0.0
        %1974 = vmatpush2.msra.mxu0 0.0
        %1975 = vmatprep.subr.mxu0 0.0
        %1976 = vmatpush2.msra.mxu0 0.0
        %1977 = vmatprep.subr.mxu0 0.0
        %1978 = vmatpush2.msra.mxu0 0.0
        %1979 = vmatprep.subr.mxu0 0.0
        %1980 = vmatpush2.msra.mxu0 0.0
        %1981 = vmatprep.subr.mxu0 0.0
        %1982 = vmatpush2.msra.mxu0 0.0
        %1983 = vmatprep.subr.mxu0 0.0
        %1984 = vmatpush2.msra.mxu0 0.0
        %1985 = vmatprep.subr.mxu0 0.0
        %1986 = vmatpush2.msra.mxu0 0.0
        %1987 = vmatprep.subr.mxu0 0.0
        %1988 = vmatpush2.msra.mxu0 0.0
        %1989 = vmatprep.mubr.f32.mxu0 0.0
        %1990 = vmatmul.mubr.f32.gmra.mxu0 %v1053
        %v1991 = vpop.f32.mrf.mxu0
        %v1992 = vadd.f32 0.0, %v1991
        %v1993 = vpop.f32.mrf.mxu0
        %v1994 = vadd.f32 0.0, %v1993
        %1995 = vmatprep.mubr.f32.mxu0 0.0
        %1996 = vmatmul.mubr.f32.gmra.mxu0 %v1056
        %v1997 = vpop.f32.mrf.mxu0
        %v1998 = vadd.f32 0.0, %v1997
        %v1999 = vpop.f32.mrf.mxu0
        %v2000 = vadd.f32 0.0, %v1999
        %2001 = vdwg.mxu0
        %2002 = vmatprep.subr.mxu0 0.0
        %2003 = vmatpush1.msra.mxu0 0.0
        %2004 = vmatprep.subr.mxu0 0.0
        %2005 = vmatpush1.msra.mxu0 0.0
        %2006 = vmatprep.subr.mxu0 0.0
        %2007 = vmatpush1.msra.mxu0 0.0
        %2008 = vmatprep.subr.mxu0 0.0
        %2009 = vmatpush1.msra.mxu0 0.0
        %2010 = vmatprep.subr.mxu0 0.0
        %2011 = vmatpush1.msra.mxu0 0.0
        %2012 = vmatprep.subr.mxu0 0.0
        %2013 = vmatpush1.msra.mxu0 0.0
        %2014 = vmatprep.subr.mxu0 0.0
        %2015 = vmatpush1.msra.mxu0 0.0
        %2016 = vmatprep.subr.mxu0 0.0
        %2017 = vmatpush1.msra.mxu0 0.0
        %2018 = vmatprep.subr.mxu0 %v1616
        %2019 = vmatpush1.msra.mxu0 %v1615
        %2020 = vmatprep.subr.mxu0 %v1604
        %2021 = vmatpush1.msra.mxu0 %v1603
        %2022 = vmatprep.subr.mxu0 %v1592
        %2023 = vmatpush1.msra.mxu0 %v1591
        %2024 = vmatprep.subr.mxu0 %v1580
        %2025 = vmatpush1.msra.mxu0 %v1579
        %2026 = vmatprep.subr.mxu0 %v1568
        %2027 = vmatpush1.msra.mxu0 %v1567
        %2028 = vmatprep.subr.mxu0 %v1556
        %2029 = vmatpush1.msra.mxu0 %v1555
        %2030 = vmatprep.subr.mxu0 %v1544
        %2031 = vmatpush1.msra.mxu0 %v1543
        %2032 = vmatprep.subr.mxu0 %v1532
        %2033 = vmatpush1.msra.mxu0 %v1531
        %2034 = vmatprep.subr.mxu0 0.0
        %2035 = vmatpush2.msra.mxu0 0.0
        %2036 = vmatprep.subr.mxu0 0.0
        %2037 = vmatpush2.msra.mxu0 0.0
        %2038 = vmatprep.subr.mxu0 0.0
        %2039 = vmatpush2.msra.mxu0 0.0
        %2040 = vmatprep.subr.mxu0 0.0
        %2041 = vmatpush2.msra.mxu0 0.0
        %2042 = vmatprep.subr.mxu0 0.0
        %2043 = vmatpush2.msra.mxu0 0.0
        %2044 = vmatprep.subr.mxu0 0.0
        %2045 = vmatpush2.msra.mxu0 0.0
        %2046 = vmatprep.subr.mxu0 0.0
        %2047 = vmatpush2.msra.mxu0 0.0
        %2048 = vmatprep.subr.mxu0 0.0
        %2049 = vmatpush2.msra.mxu0 0.0
        %2050 = vmatprep.subr.mxu0 0.0
        %2051 = vmatpush2.msra.mxu0 0.0
        %2052 = vmatprep.subr.mxu0 0.0
        %2053 = vmatpush2.msra.mxu0 0.0
        %2054 = vmatprep.subr.mxu0 0.0
        %2055 = vmatpush2.msra.mxu0 0.0
        %2056 = vmatprep.subr.mxu0 0.0
        %2057 = vmatpush2.msra.mxu0 0.0
        %2058 = vmatprep.subr.mxu0 0.0
        %2059 = vmatpush2.msra.mxu0 0.0
        %2060 = vmatprep.subr.mxu0 0.0
        %2061 = vmatpush2.msra.mxu0 0.0
        %2062 = vmatprep.subr.mxu0 0.0
        %2063 = vmatpush2.msra.mxu0 0.0
        %2064 = vmatprep.subr.mxu0 0.0
        %2065 = vmatpush2.msra.mxu0 0.0
        %2066 = vmatprep.mubr.f32.mxu0 0.0
        %2067 = vmatmul.mubr.f32.gmra.mxu0 %v1053
        %v2068 = vpop.f32.mrf.mxu0
        %v2069 = vadd.f32 0.0, %v2068
        %v2070 = vpop.f32.mrf.mxu0
        %v2071 = vadd.f32 0.0, %v2070
        %2072 = vmatprep.mubr.f32.mxu0 0.0
        %2073 = vmatmul.mubr.f32.gmra.mxu0 %v1056
        %v2074 = vpop.f32.mrf.mxu0
        %v2075 = vadd.f32 0.0, %v2074
        %v2076 = vpop.f32.mrf.mxu0
        %v2077 = vadd.f32 0.0, %v2076
        %2078 = vdwg.mxu0
        %s2079 = scalar_lea.vmem %s931, 1536 [#allocation2]
        %v2080 = vld [vmem:[%s2079] sm:$0xff]
        %v2081 = vld [vmem:[%s2079 + $0x8] sm:$0xff]
        %v2082 = vld [vmem:[%s2079 + $0x10] sm:$0xff]
        %v2083 = vld [vmem:[%s2079 + $0x18] sm:$0xff]
        %v2084 = vld [vmem:[%s2079 + $0x20] sm:$0xff]
        %v2085 = vld [vmem:[%s2079 + $0x28] sm:$0xff]
        %v2086 = vld [vmem:[%s2079 + $0x30] sm:$0xff]
        %v2087 = vld [vmem:[%s2079 + $0x38] sm:$0xff]
        %v2088 = vld [vmem:[%s2079 + $0x40] sm:$0xff]
        %v2089 = vld [vmem:[%s2079 + $0x48] sm:$0xff]
        %v2090 = vld [vmem:[%s2079 + $0x50] sm:$0xff]
        %v2091 = vld [vmem:[%s2079 + $0x58] sm:$0xff]
        %v2092 = vld [vmem:[%s2079 + $0x60] sm:$0xff]
        %v2093 = vld [vmem:[%s2079 + $0x68] sm:$0xff]
        %v2094 = vld [vmem:[%s2079 + $0x70] sm:$0xff]
        %v2095 = vld [vmem:[%s2079 + $0x78] sm:$0xff]
        %v2096 = vld [vmem:[%s2079 + $0x80] sm:$0xff]
        %v2097 = vld [vmem:[%s2079 + $0x88] sm:$0xff]
        %v2098 = vld [vmem:[%s2079 + $0x90] sm:$0xff]
        %v2099 = vld [vmem:[%s2079 + $0x98] sm:$0xff]
        %v2100 = vld [vmem:[%s2079 + $0xa0] sm:$0xff]
        %v2101 = vld [vmem:[%s2079 + $0xa8] sm:$0xff]
        %v2102 = vld [vmem:[%s2079 + $0xb0] sm:$0xff]
        %v2103 = vld [vmem:[%s2079 + $0xb8] sm:$0xff]
        %v2104 = vld [vmem:[%s2079 + $0xc0] sm:$0xff]
        %v2105 = vld [vmem:[%s2079 + $0xc8] sm:$0xff]
        %v2106 = vld [vmem:[%s2079 + $0xd0] sm:$0xff]
        %v2107 = vld [vmem:[%s2079 + $0xd8] sm:$0xff]
        %v2108 = vld [vmem:[%s2079 + $0xe0] sm:$0xff]
        %v2109 = vld [vmem:[%s2079 + $0xe8] sm:$0xff]
        %v2110 = vld [vmem:[%s2079 + $0xf0] sm:$0xff]
        %v2111 = vld [vmem:[%s2079 + $0xf8] sm:$0xff]
        %v2112 = vld [vmem:[%s2079 + $0x100] sm:$0xff]
        %v2113 = vld [vmem:[%s2079 + $0x108] sm:$0xff]
        %v2114 = vld [vmem:[%s2079 + $0x110] sm:$0xff]
        %v2115 = vld [vmem:[%s2079 + $0x118] sm:$0xff]
        %v2116 = vld [vmem:[%s2079 + $0x120] sm:$0xff]
        %v2117 = vld [vmem:[%s2079 + $0x128] sm:$0xff]
        %v2118 = vld [vmem:[%s2079 + $0x130] sm:$0xff]
        %v2119 = vld [vmem:[%s2079 + $0x138] sm:$0xff]
        %v2120 = vld [vmem:[%s2079 + $0x140] sm:$0xff]
        %v2121 = vld [vmem:[%s2079 + $0x148] sm:$0xff]
        %v2122 = vld [vmem:[%s2079 + $0x150] sm:$0xff]
        %v2123 = vld [vmem:[%s2079 + $0x158] sm:$0xff]
        %v2124 = vld [vmem:[%s2079 + $0x160] sm:$0xff]
        %v2125 = vld [vmem:[%s2079 + $0x168] sm:$0xff]
        %v2126 = vld [vmem:[%s2079 + $0x170] sm:$0xff]
        %v2127 = vld [vmem:[%s2079 + $0x178] sm:$0xff]
        %v2128 = vld [vmem:[%s2079 + $0x180] sm:$0xff]
        %v2129 = vld [vmem:[%s2079 + $0x188] sm:$0xff]
        %v2130 = vld [vmem:[%s2079 + $0x190] sm:$0xff]
        %v2131 = vld [vmem:[%s2079 + $0x198] sm:$0xff]
        %v2132 = vld [vmem:[%s2079 + $0x1a0] sm:$0xff]
        %v2133 = vld [vmem:[%s2079 + $0x1a8] sm:$0xff]
        %v2134 = vld [vmem:[%s2079 + $0x1b0] sm:$0xff]
        %v2135 = vld [vmem:[%s2079 + $0x1b8] sm:$0xff]
        %v2136 = vld [vmem:[%s2079 + $0x1c0] sm:$0xff]
        %v2137 = vld [vmem:[%s2079 + $0x1c8] sm:$0xff]
        %v2138 = vld [vmem:[%s2079 + $0x1d0] sm:$0xff]
        %v2139 = vld [vmem:[%s2079 + $0x1d8] sm:$0xff]
        %v2140 = vld [vmem:[%s2079 + $0x1e0] sm:$0xff]
        %v2141 = vld [vmem:[%s2079 + $0x1e8] sm:$0xff]
        %v2142 = vld [vmem:[%s2079 + $0x1f0] sm:$0xff]
        %v2143 = vld [vmem:[%s2079 + $0x1f8] sm:$0xff]
        %v2144 = vld [vmem:[%s2079 + $0x200] sm:$0xff]
        %v2145 = vld [vmem:[%s2079 + $0x208] sm:$0xff]
        %v2146 = vld [vmem:[%s2079 + $0x210] sm:$0xff]
        %v2147 = vld [vmem:[%s2079 + $0x218] sm:$0xff]
        %v2148 = vld [vmem:[%s2079 + $0x220] sm:$0xff]
        %v2149 = vld [vmem:[%s2079 + $0x228] sm:$0xff]
        %v2150 = vld [vmem:[%s2079 + $0x230] sm:$0xff]
        %v2151 = vld [vmem:[%s2079 + $0x238] sm:$0xff]
        %v2152 = vld [vmem:[%s2079 + $0x240] sm:$0xff]
        %v2153 = vld [vmem:[%s2079 + $0x248] sm:$0xff]
        %v2154 = vld [vmem:[%s2079 + $0x250] sm:$0xff]
        %v2155 = vld [vmem:[%s2079 + $0x258] sm:$0xff]
        %v2156 = vld [vmem:[%s2079 + $0x260] sm:$0xff]
        %v2157 = vld [vmem:[%s2079 + $0x268] sm:$0xff]
        %v2158 = vld [vmem:[%s2079 + $0x270] sm:$0xff]
        %v2159 = vld [vmem:[%s2079 + $0x278] sm:$0xff]
        %v2160 = vld [vmem:[%s2079 + $0x280] sm:$0xff]
        %v2161 = vld [vmem:[%s2079 + $0x288] sm:$0xff]
        %v2162 = vld [vmem:[%s2079 + $0x290] sm:$0xff]
        %v2163 = vld [vmem:[%s2079 + $0x298] sm:$0xff]
        %v2164 = vld [vmem:[%s2079 + $0x2a0] sm:$0xff]
        %v2165 = vld [vmem:[%s2079 + $0x2a8] sm:$0xff]
        %v2166 = vld [vmem:[%s2079 + $0x2b0] sm:$0xff]
        %v2167 = vld [vmem:[%s2079 + $0x2b8] sm:$0xff]
        %v2168 = vld [vmem:[%s2079 + $0x2c0] sm:$0xff]
        %v2169 = vld [vmem:[%s2079 + $0x2c8] sm:$0xff]
        %v2170 = vld [vmem:[%s2079 + $0x2d0] sm:$0xff]
        %v2171 = vld [vmem:[%s2079 + $0x2d8] sm:$0xff]
        %v2172 = vld [vmem:[%s2079 + $0x2e0] sm:$0xff]
        %v2173 = vld [vmem:[%s2079 + $0x2e8] sm:$0xff]
        %v2174 = vld [vmem:[%s2079 + $0x2f0] sm:$0xff]
        %v2175 = vld [vmem:[%s2079 + $0x2f8] sm:$0xff]
        %2176 = vmatprep.subr.mxu0 0.0
        %2177 = vmatpush1.msra.mxu0 0.0
        %2178 = vmatprep.subr.mxu0 0.0
        %2179 = vmatpush1.msra.mxu0 0.0
        %2180 = vmatprep.subr.mxu0 0.0
        %2181 = vmatpush1.msra.mxu0 0.0
        %2182 = vmatprep.subr.mxu0 0.0
        %2183 = vmatpush1.msra.mxu0 0.0
        %2184 = vmatprep.subr.mxu0 0.0
        %2185 = vmatpush1.msra.mxu0 0.0
        %2186 = vmatprep.subr.mxu0 0.0
        %2187 = vmatpush1.msra.mxu0 0.0
        %2188 = vmatprep.subr.mxu0 0.0
        %2189 = vmatpush1.msra.mxu0 0.0
        %2190 = vmatprep.subr.mxu0 0.0
        %2191 = vmatpush1.msra.mxu0 0.0
        %2192 = vmatprep.subr.mxu0 %v2165
        %2193 = vmatpush1.msra.mxu0 %v2164
        %2194 = vmatprep.subr.mxu0 %v2153
        %2195 = vmatpush1.msra.mxu0 %v2152
        %2196 = vmatprep.subr.mxu0 %v2141
        %2197 = vmatpush1.msra.mxu0 %v2140
        %2198 = vmatprep.subr.mxu0 %v2129
        %2199 = vmatpush1.msra.mxu0 %v2128
        %2200 = vmatprep.subr.mxu0 %v2117
        %2201 = vmatpush1.msra.mxu0 %v2116
        %2202 = vmatprep.subr.mxu0 %v2105
        %2203 = vmatpush1.msra.mxu0 %v2104
        %2204 = vmatprep.subr.mxu0 %v2093
        %2205 = vmatpush1.msra.mxu0 %v2092
        %2206 = vmatprep.subr.mxu0 %v2081
        %2207 = vmatpush1.msra.mxu0 %v2080
        %2208 = vmatprep.subr.mxu0 0.0
        %2209 = vmatpush2.msra.mxu0 0.0
        %2210 = vmatprep.subr.mxu0 0.0
        %2211 = vmatpush2.msra.mxu0 0.0
        %2212 = vmatprep.subr.mxu0 0.0
        %2213 = vmatpush2.msra.mxu0 0.0
        %2214 = vmatprep.subr.mxu0 0.0
        %2215 = vmatpush2.msra.mxu0 0.0
        %2216 = vmatprep.subr.mxu0 0.0
        %2217 = vmatpush2.msra.mxu0 0.0
        %2218 = vmatprep.subr.mxu0 0.0
        %2219 = vmatpush2.msra.mxu0 0.0
        %2220 = vmatprep.subr.mxu0 0.0
        %2221 = vmatpush2.msra.mxu0 0.0
        %2222 = vmatprep.subr.mxu0 0.0
        %2223 = vmatpush2.msra.mxu0 0.0
        %2224 = vmatprep.subr.mxu0 0.0
        %2225 = vmatpush2.msra.mxu0 0.0
        %2226 = vmatprep.subr.mxu0 0.0
        %2227 = vmatpush2.msra.mxu0 0.0
        %2228 = vmatprep.subr.mxu0 0.0
        %2229 = vmatpush2.msra.mxu0 0.0
        %2230 = vmatprep.subr.mxu0 0.0
        %2231 = vmatpush2.msra.mxu0 0.0
        %2232 = vmatprep.subr.mxu0 0.0
        %2233 = vmatpush2.msra.mxu0 0.0
        %2234 = vmatprep.subr.mxu0 0.0
        %2235 = vmatpush2.msra.mxu0 0.0
        %2236 = vmatprep.subr.mxu0 0.0
        %2237 = vmatpush2.msra.mxu0 0.0
        %2238 = vmatprep.subr.mxu0 0.0
        %2239 = vmatpush2.msra.mxu0 0.0
        %2240 = vmatprep.mubr.f32.mxu0 0.0
        %2241 = vmatmul.mubr.f32.gmra.mxu0 %v1053
        %v2242 = vpop.f32.mrf.mxu0
        %v2243 = vadd.f32 0.0, %v2242
        %v2244 = vpop.f32.mrf.mxu0
        %v2245 = vadd.f32 0.0, %v2244
        %2246 = vmatprep.mubr.f32.mxu0 0.0
        %2247 = vmatmul.mubr.f32.gmra.mxu0 %v1056
        %v2248 = vpop.f32.mrf.mxu0
        %v2249 = vadd.f32 0.0, %v2248
        %v2250 = vpop.f32.mrf.mxu0
        %v2251 = vadd.f32 0.0, %v2250
        %2252 = vdwg.mxu0
        %2253 = vmatprep.subr.mxu0 0.0
        %2254 = vmatpush1.msra.mxu0 0.0
        %2255 = vmatprep.subr.mxu0 0.0
        %2256 = vmatpush1.msra.mxu0 0.0
        %2257 = vmatprep.subr.mxu0 0.0
        %2258 = vmatpush1.msra.mxu0 0.0
        %2259 = vmatprep.subr.mxu0 0.0
        %2260 = vmatpush1.msra.mxu0 0.0
        %2261 = vmatprep.subr.mxu0 0.0
        %2262 = vmatpush1.msra.mxu0 0.0
        %2263 = vmatprep.subr.mxu0 0.0
        %2264 = vmatpush1.msra.mxu0 0.0
        %2265 = vmatprep.subr.mxu0 0.0
        %2266 = vmatpush1.msra.mxu0 0.0
        %2267 = vmatprep.subr.mxu0 0.0
        %2268 = vmatpush1.msra.mxu0 0.0
        %2269 = vmatprep.subr.mxu0 %v2167
        %2270 = vmatpush1.msra.mxu0 %v2166
        %2271 = vmatprep.subr.mxu0 %v2155
        %2272 = vmatpush1.msra.mxu0 %v2154
        %2273 = vmatprep.subr.mxu0 %v2143
        %2274 = vmatpush1.msra.mxu0 %v2142
        %2275 = vmatprep.subr.mxu0 %v2131
        %2276 = vmatpush1.msra.mxu0 %v2130
        %2277 = vmatprep.subr.mxu0 %v2119
        %2278 = vmatpush1.msra.mxu0 %v2118
        %2279 = vmatprep.subr.mxu0 %v2107
        %2280 = vmatpush1.msra.mxu0 %v2106
        %2281 = vmatprep.subr.mxu0 %v2095
        %2282 = vmatpush1.msra.mxu0 %v2094
        %2283 = vmatprep.subr.mxu0 %v2083
        %2284 = vmatpush1.msra.mxu0 %v2082
        %2285 = vmatprep.subr.mxu0 0.0
        %2286 = vmatpush2.msra.mxu0 0.0
        %2287 = vmatprep.subr.mxu0 0.0
        %2288 = vmatpush2.msra.mxu0 0.0
        %2289 = vmatprep.subr.mxu0 0.0
        %2290 = vmatpush2.msra.mxu0 0.0
        %2291 = vmatprep.subr.mxu0 0.0
        %2292 = vmatpush2.msra.mxu0 0.0
        %2293 = vmatprep.subr.mxu0 0.0
        %2294 = vmatpush2.msra.mxu0 0.0
        %2295 = vmatprep.subr.mxu0 0.0
        %2296 = vmatpush2.msra.mxu0 0.0
        %2297 = vmatprep.subr.mxu0 0.0
        %2298 = vmatpush2.msra.mxu0 0.0
        %2299 = vmatprep.subr.mxu0 0.0
        %2300 = vmatpush2.msra.mxu0 0.0
        %2301 = vmatprep.subr.mxu0 0.0
        %2302 = vmatpush2.msra.mxu0 0.0
        %2303 = vmatprep.subr.mxu0 0.0
        %2304 = vmatpush2.msra.mxu0 0.0
        %2305 = vmatprep.subr.mxu0 0.0
        %2306 = vmatpush2.msra.mxu0 0.0
        %2307 = vmatprep.subr.mxu0 0.0
        %2308 = vmatpush2.msra.mxu0 0.0
        %2309 = vmatprep.subr.mxu0 0.0
        %2310 = vmatpush2.msra.mxu0 0.0
        %2311 = vmatprep.subr.mxu0 0.0
        %2312 = vmatpush2.msra.mxu0 0.0
        %2313 = vmatprep.subr.mxu0 0.0
        %2314 = vmatpush2.msra.mxu0 0.0
        %2315 = vmatprep.subr.mxu0 0.0
        %2316 = vmatpush2.msra.mxu0 0.0
        %2317 = vmatprep.mubr.f32.mxu0 0.0
        %2318 = vmatmul.mubr.f32.gmra.mxu0 %v1053
        %v2319 = vpop.f32.mrf.mxu0
        %v2320 = vadd.f32 0.0, %v2319
        %v2321 = vpop.f32.mrf.mxu0
        %v2322 = vadd.f32 0.0, %v2321
        %2323 = vmatprep.mubr.f32.mxu0 0.0
        %2324 = vmatmul.mubr.f32.gmra.mxu0 %v1056
        %v2325 = vpop.f32.mrf.mxu0
        %v2326 = vadd.f32 0.0, %v2325
        %v2327 = vpop.f32.mrf.mxu0
        %v2328 = vadd.f32 0.0, %v2327
        %2329 = vdwg.mxu0
        %2330 = vmatprep.subr.mxu0 0.0
        %2331 = vmatpush1.msra.mxu0 0.0
        %2332 = vmatprep.subr.mxu0 0.0
        %2333 = vmatpush1.msra.mxu0 0.0
        %2334 = vmatprep.subr.mxu0 0.0
        %2335 = vmatpush1.msra.mxu0 0.0
        %2336 = vmatprep.subr.mxu0 0.0
        %2337 = vmatpush1.msra.mxu0 0.0
        %2338 = vmatprep.subr.mxu0 0.0
        %2339 = vmatpush1.msra.mxu0 0.0
        %2340 = vmatprep.subr.mxu0 0.0
        %2341 = vmatpush1.msra.mxu0 0.0
        %2342 = vmatprep.subr.mxu0 0.0
        %2343 = vmatpush1.msra.mxu0 0.0
        %2344 = vmatprep.subr.mxu0 0.0
        %2345 = vmatpush1.msra.mxu0 0.0
        %2346 = vmatprep.subr.mxu0 %v2169
        %2347 = vmatpush1.msra.mxu0 %v2168
        %2348 = vmatprep.subr.mxu0 %v2157
        %2349 = vmatpush1.msra.mxu0 %v2156
        %2350 = vmatprep.subr.mxu0 %v2145
        %2351 = vmatpush1.msra.mxu0 %v2144
        %2352 = vmatprep.subr.mxu0 %v2133
        %2353 = vmatpush1.msra.mxu0 %v2132
        %2354 = vmatprep.subr.mxu0 %v2121
        %2355 = vmatpush1.msra.mxu0 %v2120
        %2356 = vmatprep.subr.mxu0 %v2109
        %2357 = vmatpush1.msra.mxu0 %v2108
        %2358 = vmatprep.subr.mxu0 %v2097
        %2359 = vmatpush1.msra.mxu0 %v2096
        %2360 = vmatprep.subr.mxu0 %v2085
        %2361 = vmatpush1.msra.mxu0 %v2084
        %2362 = vmatprep.subr.mxu0 0.0
        %2363 = vmatpush2.msra.mxu0 0.0
        %2364 = vmatprep.subr.mxu0 0.0
        %2365 = vmatpush2.msra.mxu0 0.0
        %2366 = vmatprep.subr.mxu0 0.0
        %2367 = vmatpush2.msra.mxu0 0.0
        %2368 = vmatprep.subr.mxu0 0.0
        %2369 = vmatpush2.msra.mxu0 0.0
        %2370 = vmatprep.subr.mxu0 0.0
        %2371 = vmatpush2.msra.mxu0 0.0
        %2372 = vmatprep.subr.mxu0 0.0
        %2373 = vmatpush2.msra.mxu0 0.0
        %2374 = vmatprep.subr.mxu0 0.0
        %2375 = vmatpush2.msra.mxu0 0.0
        %2376 = vmatprep.subr.mxu0 0.0
        %2377 = vmatpush2.msra.mxu0 0.0
        %2378 = vmatprep.subr.mxu0 0.0
        %2379 = vmatpush2.msra.mxu0 0.0
        %2380 = vmatprep.subr.mxu0 0.0
        %2381 = vmatpush2.msra.mxu0 0.0
        %2382 = vmatprep.subr.mxu0 0.0
        %2383 = vmatpush2.msra.mxu0 0.0
        %2384 = vmatprep.subr.mxu0 0.0
        %2385 = vmatpush2.msra.mxu0 0.0
        %2386 = vmatprep.subr.mxu0 0.0
        %2387 = vmatpush2.msra.mxu0 0.0
        %2388 = vmatprep.subr.mxu0 0.0
        %2389 = vmatpush2.msra.mxu0 0.0
        %2390 = vmatprep.subr.mxu0 0.0
        %2391 = vmatpush2.msra.mxu0 0.0
        %2392 = vmatprep.subr.mxu0 0.0
        %2393 = vmatpush2.msra.mxu0 0.0
        %2394 = vmatprep.mubr.f32.mxu0 0.0
        %2395 = vmatmul.mubr.f32.gmra.mxu0 %v1053
        %v2396 = vpop.f32.mrf.mxu0
        %v2397 = vadd.f32 0.0, %v2396
        %v2398 = vpop.f32.mrf.mxu0
        %v2399 = vadd.f32 0.0, %v2398
        %2400 = vmatprep.mubr.f32.mxu0 0.0
        %2401 = vmatmul.mubr.f32.gmra.mxu0 %v1056
        %v2402 = vpop.f32.mrf.mxu0
        %v2403 = vadd.f32 0.0, %v2402
        %v2404 = vpop.f32.mrf.mxu0
        %v2405 = vadd.f32 0.0, %v2404
        %2406 = vdwg.mxu0
        %2407 = vmatprep.subr.mxu0 0.0
        %2408 = vmatpush1.msra.mxu0 0.0
        %2409 = vmatprep.subr.mxu0 0.0
        %2410 = vmatpush1.msra.mxu0 0.0
        %2411 = vmatprep.subr.mxu0 0.0
        %2412 = vmatpush1.msra.mxu0 0.0
        %2413 = vmatprep.subr.mxu0 0.0
        %2414 = vmatpush1.msra.mxu0 0.0
        %2415 = vmatprep.subr.mxu0 0.0
        %2416 = vmatpush1.msra.mxu0 0.0
        %2417 = vmatprep.subr.mxu0 0.0
        %2418 = vmatpush1.msra.mxu0 0.0
        %2419 = vmatprep.subr.mxu0 0.0
        %2420 = vmatpush1.msra.mxu0 0.0
        %2421 = vmatprep.subr.mxu0 0.0
        %2422 = vmatpush1.msra.mxu0 0.0
        %2423 = vmatprep.subr.mxu0 %v2171
        %2424 = vmatpush1.msra.mxu0 %v2170
        %2425 = vmatprep.subr.mxu0 %v2159
        %2426 = vmatpush1.msra.mxu0 %v2158
        %2427 = vmatprep.subr.mxu0 %v2147
        %2428 = vmatpush1.msra.mxu0 %v2146
        %2429 = vmatprep.subr.mxu0 %v2135
        %2430 = vmatpush1.msra.mxu0 %v2134
        %2431 = vmatprep.subr.mxu0 %v2123
        %2432 = vmatpush1.msra.mxu0 %v2122
        %2433 = vmatprep.subr.mxu0 %v2111
        %2434 = vmatpush1.msra.mxu0 %v2110
        %2435 = vmatprep.subr.mxu0 %v2099
        %2436 = vmatpush1.msra.mxu0 %v2098
        %2437 = vmatprep.subr.mxu0 %v2087
        %2438 = vmatpush1.msra.mxu0 %v2086
        %2439 = vmatprep.subr.mxu0 0.0
        %2440 = vmatpush2.msra.mxu0 0.0
        %2441 = vmatprep.subr.mxu0 0.0
        %2442 = vmatpush2.msra.mxu0 0.0
        %2443 = vmatprep.subr.mxu0 0.0
        %2444 = vmatpush2.msra.mxu0 0.0
        %2445 = vmatprep.subr.mxu0 0.0
        %2446 = vmatpush2.msra.mxu0 0.0
        %2447 = vmatprep.subr.mxu0 0.0
        %2448 = vmatpush2.msra.mxu0 0.0
        %2449 = vmatprep.subr.mxu0 0.0
        %2450 = vmatpush2.msra.mxu0 0.0
        %2451 = vmatprep.subr.mxu0 0.0
        %2452 = vmatpush2.msra.mxu0 0.0
        %2453 = vmatprep.subr.mxu0 0.0
        %2454 = vmatpush2.msra.mxu0 0.0
        %2455 = vmatprep.subr.mxu0 0.0
        %2456 = vmatpush2.msra.mxu0 0.0
        %2457 = vmatprep.subr.mxu0 0.0
        %2458 = vmatpush2.msra.mxu0 0.0
        %2459 = vmatprep.subr.mxu0 0.0
        %2460 = vmatpush2.msra.mxu0 0.0
        %2461 = vmatprep.subr.mxu0 0.0
        %2462 = vmatpush2.msra.mxu0 0.0
        %2463 = vmatprep.subr.mxu0 0.0
        %2464 = vmatpush2.msra.mxu0 0.0
        %2465 = vmatprep.subr.mxu0 0.0
        %2466 = vmatpush2.msra.mxu0 0.0
        %2467 = vmatprep.subr.mxu0 0.0
        %2468 = vmatpush2.msra.mxu0 0.0
        %2469 = vmatprep.subr.mxu0 0.0
        %2470 = vmatpush2.msra.mxu0 0.0
        %2471 = vmatprep.mubr.f32.mxu0 0.0
        %2472 = vmatmul.mubr.f32.gmra.mxu0 %v1053
        %v2473 = vpop.f32.mrf.mxu0
        %v2474 = vadd.f32 0.0, %v2473
        %v2475 = vpop.f32.mrf.mxu0
        %v2476 = vadd.f32 0.0, %v2475
        %2477 = vmatprep.mubr.f32.mxu0 0.0
        %2478 = vmatmul.mubr.f32.gmra.mxu0 %v1056
        %v2479 = vpop.f32.mrf.mxu0
        %v2480 = vadd.f32 0.0, %v2479
        %v2481 = vpop.f32.mrf.mxu0
        %v2482 = vadd.f32 0.0, %v2481
        %2483 = vdwg.mxu0
        %2484 = vmatprep.subr.mxu0 0.0
        %2485 = vmatpush1.msra.mxu0 0.0
        %2486 = vmatprep.subr.mxu0 0.0
        %2487 = vmatpush1.msra.mxu0 0.0
        %2488 = vmatprep.subr.mxu0 0.0
        %2489 = vmatpush1.msra.mxu0 0.0
        %2490 = vmatprep.subr.mxu0 0.0
        %2491 = vmatpush1.msra.mxu0 0.0
        %2492 = vmatprep.subr.mxu0 0.0
        %2493 = vmatpush1.msra.mxu0 0.0
        %2494 = vmatprep.subr.mxu0 0.0
        %2495 = vmatpush1.msra.mxu0 0.0
        %2496 = vmatprep.subr.mxu0 0.0
        %2497 = vmatpush1.msra.mxu0 0.0
        %2498 = vmatprep.subr.mxu0 0.0
        %2499 = vmatpush1.msra.mxu0 0.0
        %2500 = vmatprep.subr.mxu0 %v2173
        %2501 = vmatpush1.msra.mxu0 %v2172
        %2502 = vmatprep.subr.mxu0 %v2161
        %2503 = vmatpush1.msra.mxu0 %v2160
        %2504 = vmatprep.subr.mxu0 %v2149
        %2505 = vmatpush1.msra.mxu0 %v2148
        %2506 = vmatprep.subr.mxu0 %v2137
        %2507 = vmatpush1.msra.mxu0 %v2136
        %2508 = vmatprep.subr.mxu0 %v2125
        %2509 = vmatpush1.msra.mxu0 %v2124
        %2510 = vmatprep.subr.mxu0 %v2113
        %2511 = vmatpush1.msra.mxu0 %v2112
        %2512 = vmatprep.subr.mxu0 %v2101
        %2513 = vmatpush1.msra.mxu0 %v2100
        %2514 = vmatprep.subr.mxu0 %v2089
        %2515 = vmatpush1.msra.mxu0 %v2088
        %2516 = vmatprep.subr.mxu0 0.0
        %2517 = vmatpush2.msra.mxu0 0.0
        %2518 = vmatprep.subr.mxu0 0.0
        %2519 = vmatpush2.msra.mxu0 0.0
        %2520 = vmatprep.subr.mxu0 0.0
        %2521 = vmatpush2.msra.mxu0 0.0
        %2522 = vmatprep.subr.mxu0 0.0
        %2523 = vmatpush2.msra.mxu0 0.0
        %2524 = vmatprep.subr.mxu0 0.0
        %2525 = vmatpush2.msra.mxu0 0.0
        %2526 = vmatprep.subr.mxu0 0.0
        %2527 = vmatpush2.msra.mxu0 0.0
        %2528 = vmatprep.subr.mxu0 0.0
        %2529 = vmatpush2.msra.mxu0 0.0
        %2530 = vmatprep.subr.mxu0 0.0
        %2531 = vmatpush2.msra.mxu0 0.0
        %2532 = vmatprep.subr.mxu0 0.0
        %2533 = vmatpush2.msra.mxu0 0.0
        %2534 = vmatprep.subr.mxu0 0.0
        %2535 = vmatpush2.msra.mxu0 0.0
        %2536 = vmatprep.subr.mxu0 0.0
        %2537 = vmatpush2.msra.mxu0 0.0
        %2538 = vmatprep.subr.mxu0 0.0
        %2539 = vmatpush2.msra.mxu0 0.0
        %2540 = vmatprep.subr.mxu0 0.0
        %2541 = vmatpush2.msra.mxu0 0.0
        %2542 = vmatprep.subr.mxu0 0.0
        %2543 = vmatpush2.msra.mxu0 0.0
        %2544 = vmatprep.subr.mxu0 0.0
        %2545 = vmatpush2.msra.mxu0 0.0
        %2546 = vmatprep.subr.mxu0 0.0
        %2547 = vmatpush2.msra.mxu0 0.0
        %2548 = vmatprep.mubr.f32.mxu0 0.0
        %2549 = vmatmul.mubr.f32.gmra.mxu0 %v1053
        %v2550 = vpop.f32.mrf.mxu0
        %v2551 = vadd.f32 0.0, %v2550
        %v2552 = vpop.f32.mrf.mxu0
        %v2553 = vadd.f32 0.0, %v2552
        %2554 = vmatprep.mubr.f32.mxu0 0.0
        %2555 = vmatmul.mubr.f32.gmra.mxu0 %v1056
        %v2556 = vpop.f32.mrf.mxu0
        %v2557 = vadd.f32 0.0, %v2556
        %v2558 = vpop.f32.mrf.mxu0
        %v2559 = vadd.f32 0.0, %v2558
        %2560 = vdwg.mxu0
        %2561 = vmatprep.subr.mxu0 0.0
        %2562 = vmatpush1.msra.mxu0 0.0
        %2563 = vmatprep.subr.mxu0 0.0
        %2564 = vmatpush1.msra.mxu0 0.0
        %2565 = vmatprep.subr.mxu0 0.0
        %2566 = vmatpush1.msra.mxu0 0.0
        %2567 = vmatprep.subr.mxu0 0.0
        %2568 = vmatpush1.msra.mxu0 0.0
        %2569 = vmatprep.subr.mxu0 0.0
        %2570 = vmatpush1.msra.mxu0 0.0
        %2571 = vmatprep.subr.mxu0 0.0
        %2572 = vmatpush1.msra.mxu0 0.0
        %2573 = vmatprep.subr.mxu0 0.0
        %2574 = vmatpush1.msra.mxu0 0.0
        %2575 = vmatprep.subr.mxu0 0.0
        %2576 = vmatpush1.msra.mxu0 0.0
        %2577 = vmatprep.subr.mxu0 %v2175
        %2578 = vmatpush1.msra.mxu0 %v2174
        %2579 = vmatprep.subr.mxu0 %v2163
        %2580 = vmatpush1.msra.mxu0 %v2162
        %2581 = vmatprep.subr.mxu0 %v2151
        %2582 = vmatpush1.msra.mxu0 %v2150
        %2583 = vmatprep.subr.mxu0 %v2139
        %2584 = vmatpush1.msra.mxu0 %v2138
        %2585 = vmatprep.subr.mxu0 %v2127
        %2586 = vmatpush1.msra.mxu0 %v2126
        %2587 = vmatprep.subr.mxu0 %v2115
        %2588 = vmatpush1.msra.mxu0 %v2114
        %2589 = vmatprep.subr.mxu0 %v2103
        %2590 = vmatpush1.msra.mxu0 %v2102
        %2591 = vmatprep.subr.mxu0 %v2091
        %2592 = vmatpush1.msra.mxu0 %v2090
        %2593 = vmatprep.subr.mxu0 0.0
        %2594 = vmatpush2.msra.mxu0 0.0
        %2595 = vmatprep.subr.mxu0 0.0
        %2596 = vmatpush2.msra.mxu0 0.0
        %2597 = vmatprep.subr.mxu0 0.0
        %2598 = vmatpush2.msra.mxu0 0.0
        %2599 = vmatprep.subr.mxu0 0.0
        %2600 = vmatpush2.msra.mxu0 0.0
        %2601 = vmatprep.subr.mxu0 0.0
        %2602 = vmatpush2.msra.mxu0 0.0
        %2603 = vmatprep.subr.mxu0 0.0
        %2604 = vmatpush2.msra.mxu0 0.0
        %2605 = vmatprep.subr.mxu0 0.0
        %2606 = vmatpush2.msra.mxu0 0.0
        %2607 = vmatprep.subr.mxu0 0.0
        %2608 = vmatpush2.msra.mxu0 0.0
        %2609 = vmatprep.subr.mxu0 0.0
        %2610 = vmatpush2.msra.mxu0 0.0
        %2611 = vmatprep.subr.mxu0 0.0
        %2612 = vmatpush2.msra.mxu0 0.0
        %2613 = vmatprep.subr.mxu0 0.0
        %2614 = vmatpush2.msra.mxu0 0.0
        %2615 = vmatprep.subr.mxu0 0.0
        %2616 = vmatpush2.msra.mxu0 0.0
        %2617 = vmatprep.subr.mxu0 0.0
        %2618 = vmatpush2.msra.mxu0 0.0
        %2619 = vmatprep.subr.mxu0 0.0
        %2620 = vmatpush2.msra.mxu0 0.0
        %2621 = vmatprep.subr.mxu0 0.0
        %2622 = vmatpush2.msra.mxu0 0.0
        %2623 = vmatprep.subr.mxu0 0.0
        %2624 = vmatpush2.msra.mxu0 0.0
        %2625 = vmatprep.mubr.f32.mxu0 0.0
        %2626 = vmatmul.mubr.f32.gmra.mxu0 %v1053
        %v2627 = vpop.f32.mrf.mxu0
        %v2628 = vadd.f32 0.0, %v2627
        %v2629 = vpop.f32.mrf.mxu0
        %v2630 = vadd.f32 0.0, %v2629
        %2631 = vmatprep.mubr.f32.mxu0 0.0
        %2632 = vmatmul.mubr.f32.gmra.mxu0 %v1056
        %v2633 = vpop.f32.mrf.mxu0
        %v2634 = vadd.f32 0.0, %v2633
        %v2635 = vpop.f32.mrf.mxu0
        %v2636 = vadd.f32 0.0, %v2635
        %2637 = vdwg.mxu0
        %s2638 = scalar_lea.vmem %s931, 2304 [#allocation2]
        %v2639 = vld [vmem:[%s2638] sm:$0xff]
        %v2640 = vld [vmem:[%s2638 + $0x8] sm:$0xff]
        %v2641 = vld [vmem:[%s2638 + $0x10] sm:$0xff]
        %v2642 = vld [vmem:[%s2638 + $0x18] sm:$0xff]
        %v2643 = vld [vmem:[%s2638 + $0x20] sm:$0xff]
        %v2644 = vld [vmem:[%s2638 + $0x28] sm:$0xff]
        %v2645 = vld [vmem:[%s2638 + $0x30] sm:$0xff]
        %v2646 = vld [vmem:[%s2638 + $0x38] sm:$0xff]
        %v2647 = vld [vmem:[%s2638 + $0x40] sm:$0xff]
        %v2648 = vld [vmem:[%s2638 + $0x48] sm:$0xff]
        %v2649 = vld [vmem:[%s2638 + $0x50] sm:$0xff]
        %v2650 = vld [vmem:[%s2638 + $0x58] sm:$0xff]
        %v2651 = vld [vmem:[%s2638 + $0x60] sm:$0xff]
        %v2652 = vld [vmem:[%s2638 + $0x68] sm:$0xff]
        %v2653 = vld [vmem:[%s2638 + $0x70] sm:$0xff]
        %v2654 = vld [vmem:[%s2638 + $0x78] sm:$0xff]
        %v2655 = vld [vmem:[%s2638 + $0x80] sm:$0xff]
        %v2656 = vld [vmem:[%s2638 + $0x88] sm:$0xff]
        %v2657 = vld [vmem:[%s2638 + $0x90] sm:$0xff]
        %v2658 = vld [vmem:[%s2638 + $0x98] sm:$0xff]
        %v2659 = vld [vmem:[%s2638 + $0xa0] sm:$0xff]
        %v2660 = vld [vmem:[%s2638 + $0xa8] sm:$0xff]
        %v2661 = vld [vmem:[%s2638 + $0xb0] sm:$0xff]
        %v2662 = vld [vmem:[%s2638 + $0xb8] sm:$0xff]
        %v2663 = vld [vmem:[%s2638 + $0xc0] sm:$0xff]
        %v2664 = vld [vmem:[%s2638 + $0xc8] sm:$0xff]
        %v2665 = vld [vmem:[%s2638 + $0xd0] sm:$0xff]
        %v2666 = vld [vmem:[%s2638 + $0xd8] sm:$0xff]
        %v2667 = vld [vmem:[%s2638 + $0xe0] sm:$0xff]
        %v2668 = vld [vmem:[%s2638 + $0xe8] sm:$0xff]
        %v2669 = vld [vmem:[%s2638 + $0xf0] sm:$0xff]
        %v2670 = vld [vmem:[%s2638 + $0xf8] sm:$0xff]
        %v2671 = vld [vmem:[%s2638 + $0x100] sm:$0xff]
        %v2672 = vld [vmem:[%s2638 + $0x108] sm:$0xff]
        %v2673 = vld [vmem:[%s2638 + $0x110] sm:$0xff]
        %v2674 = vld [vmem:[%s2638 + $0x118] sm:$0xff]
        %v2675 = vld [vmem:[%s2638 + $0x120] sm:$0xff]
        %v2676 = vld [vmem:[%s2638 + $0x128] sm:$0xff]
        %v2677 = vld [vmem:[%s2638 + $0x130] sm:$0xff]
        %v2678 = vld [vmem:[%s2638 + $0x138] sm:$0xff]
        %v2679 = vld [vmem:[%s2638 + $0x140] sm:$0xff]
        %v2680 = vld [vmem:[%s2638 + $0x148] sm:$0xff]
        %v2681 = vld [vmem:[%s2638 + $0x150] sm:$0xff]
        %v2682 = vld [vmem:[%s2638 + $0x158] sm:$0xff]
        %v2683 = vld [vmem:[%s2638 + $0x160] sm:$0xff]
        %v2684 = vld [vmem:[%s2638 + $0x168] sm:$0xff]
        %v2685 = vld [vmem:[%s2638 + $0x170] sm:$0xff]
        %v2686 = vld [vmem:[%s2638 + $0x178] sm:$0xff]
        %v2687 = vld [vmem:[%s2638 + $0x180] sm:$0xff]
        %v2688 = vld [vmem:[%s2638 + $0x188] sm:$0xff]
        %v2689 = vld [vmem:[%s2638 + $0x190] sm:$0xff]
        %v2690 = vld [vmem:[%s2638 + $0x198] sm:$0xff]
        %v2691 = vld [vmem:[%s2638 + $0x1a0] sm:$0xff]
        %v2692 = vld [vmem:[%s2638 + $0x1a8] sm:$0xff]
        %v2693 = vld [vmem:[%s2638 + $0x1b0] sm:$0xff]
        %v2694 = vld [vmem:[%s2638 + $0x1b8] sm:$0xff]
        %v2695 = vld [vmem:[%s2638 + $0x1c0] sm:$0xff]
        %v2696 = vld [vmem:[%s2638 + $0x1c8] sm:$0xff]
        %v2697 = vld [vmem:[%s2638 + $0x1d0] sm:$0xff]
        %v2698 = vld [vmem:[%s2638 + $0x1d8] sm:$0xff]
        %v2699 = vld [vmem:[%s2638 + $0x1e0] sm:$0xff]
        %v2700 = vld [vmem:[%s2638 + $0x1e8] sm:$0xff]
        %v2701 = vld [vmem:[%s2638 + $0x1f0] sm:$0xff]
        %v2702 = vld [vmem:[%s2638 + $0x1f8] sm:$0xff]
        %v2703 = vld [vmem:[%s2638 + $0x200] sm:$0xff]
        %v2704 = vld [vmem:[%s2638 + $0x208] sm:$0xff]
        %v2705 = vld [vmem:[%s2638 + $0x210] sm:$0xff]
        %v2706 = vld [vmem:[%s2638 + $0x218] sm:$0xff]
        %v2707 = vld [vmem:[%s2638 + $0x220] sm:$0xff]
        %v2708 = vld [vmem:[%s2638 + $0x228] sm:$0xff]
        %v2709 = vld [vmem:[%s2638 + $0x230] sm:$0xff]
        %v2710 = vld [vmem:[%s2638 + $0x238] sm:$0xff]
        %v2711 = vld [vmem:[%s2638 + $0x240] sm:$0xff]
        %v2712 = vld [vmem:[%s2638 + $0x248] sm:$0xff]
        %v2713 = vld [vmem:[%s2638 + $0x250] sm:$0xff]
        %v2714 = vld [vmem:[%s2638 + $0x258] sm:$0xff]
        %v2715 = vld [vmem:[%s2638 + $0x260] sm:$0xff]
        %v2716 = vld [vmem:[%s2638 + $0x268] sm:$0xff]
        %v2717 = vld [vmem:[%s2638 + $0x270] sm:$0xff]
        %v2718 = vld [vmem:[%s2638 + $0x278] sm:$0xff]
        %v2719 = vld [vmem:[%s2638 + $0x280] sm:$0xff]
        %v2720 = vld [vmem:[%s2638 + $0x288] sm:$0xff]
        %v2721 = vld [vmem:[%s2638 + $0x290] sm:$0xff]
        %v2722 = vld [vmem:[%s2638 + $0x298] sm:$0xff]
        %v2723 = vld [vmem:[%s2638 + $0x2a0] sm:$0xff]
        %v2724 = vld [vmem:[%s2638 + $0x2a8] sm:$0xff]
        %v2725 = vld [vmem:[%s2638 + $0x2b0] sm:$0xff]
        %v2726 = vld [vmem:[%s2638 + $0x2b8] sm:$0xff]
        %v2727 = vld [vmem:[%s2638 + $0x2c0] sm:$0xff]
        %v2728 = vld [vmem:[%s2638 + $0x2c8] sm:$0xff]
        %v2729 = vld [vmem:[%s2638 + $0x2d0] sm:$0xff]
        %v2730 = vld [vmem:[%s2638 + $0x2d8] sm:$0xff]
        %v2731 = vld [vmem:[%s2638 + $0x2e0] sm:$0xff]
        %v2732 = vld [vmem:[%s2638 + $0x2e8] sm:$0xff]
        %v2733 = vld [vmem:[%s2638 + $0x2f0] sm:$0xff]
        %v2734 = vld [vmem:[%s2638 + $0x2f8] sm:$0xff]
        %2735 = vmatprep.subr.mxu0 0.0
        %2736 = vmatpush1.msra.mxu0 0.0
        %2737 = vmatprep.subr.mxu0 0.0
        %2738 = vmatpush1.msra.mxu0 0.0
        %2739 = vmatprep.subr.mxu0 0.0
        %2740 = vmatpush1.msra.mxu0 0.0
        %2741 = vmatprep.subr.mxu0 0.0
        %2742 = vmatpush1.msra.mxu0 0.0
        %2743 = vmatprep.subr.mxu0 0.0
        %2744 = vmatpush1.msra.mxu0 0.0
        %2745 = vmatprep.subr.mxu0 0.0
        %2746 = vmatpush1.msra.mxu0 0.0
        %2747 = vmatprep.subr.mxu0 0.0
        %2748 = vmatpush1.msra.mxu0 0.0
        %2749 = vmatprep.subr.mxu0 0.0
        %2750 = vmatpush1.msra.mxu0 0.0
        %2751 = vmatprep.subr.mxu0 %v2724
        %2752 = vmatpush1.msra.mxu0 %v2723
        %2753 = vmatprep.subr.mxu0 %v2712
        %2754 = vmatpush1.msra.mxu0 %v2711
        %2755 = vmatprep.subr.mxu0 %v2700
        %2756 = vmatpush1.msra.mxu0 %v2699
        %2757 = vmatprep.subr.mxu0 %v2688
        %2758 = vmatpush1.msra.mxu0 %v2687
        %2759 = vmatprep.subr.mxu0 %v2676
        %2760 = vmatpush1.msra.mxu0 %v2675
        %2761 = vmatprep.subr.mxu0 %v2664
        %2762 = vmatpush1.msra.mxu0 %v2663
        %2763 = vmatprep.subr.mxu0 %v2652
        %2764 = vmatpush1.msra.mxu0 %v2651
        %2765 = vmatprep.subr.mxu0 %v2640
        %2766 = vmatpush1.msra.mxu0 %v2639
        %2767 = vmatprep.subr.mxu0 0.0
        %2768 = vmatpush2.msra.mxu0 0.0
        %2769 = vmatprep.subr.mxu0 0.0
        %2770 = vmatpush2.msra.mxu0 0.0
        %2771 = vmatprep.subr.mxu0 0.0
        %2772 = vmatpush2.msra.mxu0 0.0
        %2773 = vmatprep.subr.mxu0 0.0
        %2774 = vmatpush2.msra.mxu0 0.0
        %2775 = vmatprep.subr.mxu0 0.0
        %2776 = vmatpush2.msra.mxu0 0.0
        %2777 = vmatprep.subr.mxu0 0.0
        %2778 = vmatpush2.msra.mxu0 0.0
        %2779 = vmatprep.subr.mxu0 0.0
        %2780 = vmatpush2.msra.mxu0 0.0
        %2781 = vmatprep.subr.mxu0 0.0
        %2782 = vmatpush2.msra.mxu0 0.0
        %2783 = vmatprep.subr.mxu0 0.0
        %2784 = vmatpush2.msra.mxu0 0.0
        %2785 = vmatprep.subr.mxu0 0.0
        %2786 = vmatpush2.msra.mxu0 0.0
        %2787 = vmatprep.subr.mxu0 0.0
        %2788 = vmatpush2.msra.mxu0 0.0
        %2789 = vmatprep.subr.mxu0 0.0
        %2790 = vmatpush2.msra.mxu0 0.0
        %2791 = vmatprep.subr.mxu0 0.0
        %2792 = vmatpush2.msra.mxu0 0.0
        %2793 = vmatprep.subr.mxu0 0.0
        %2794 = vmatpush2.msra.mxu0 0.0
        %2795 = vmatprep.subr.mxu0 0.0
        %2796 = vmatpush2.msra.mxu0 0.0
        %2797 = vmatprep.subr.mxu0 0.0
        %2798 = vmatpush2.msra.mxu0 0.0
        %2799 = vmatprep.mubr.f32.mxu0 0.0
        %2800 = vmatmul.mubr.f32.gmra.mxu0 %v1053
        %v2801 = vpop.f32.mrf.mxu0
        %v2802 = vadd.f32 0.0, %v2801
        %v2803 = vpop.f32.mrf.mxu0
        %v2804 = vadd.f32 0.0, %v2803
        %2805 = vmatprep.mubr.f32.mxu0 0.0
        %2806 = vmatmul.mubr.f32.gmra.mxu0 %v1056
        %v2807 = vpop.f32.mrf.mxu0
        %v2808 = vadd.f32 0.0, %v2807
        %v2809 = vpop.f32.mrf.mxu0
        %v2810 = vadd.f32 0.0, %v2809
        %2811 = vdwg.mxu0
        %2812 = vmatprep.subr.mxu0 0.0
        %2813 = vmatpush1.msra.mxu0 0.0
        %2814 = vmatprep.subr.mxu0 0.0
        %2815 = vmatpush1.msra.mxu0 0.0
        %2816 = vmatprep.subr.mxu0 0.0
        %2817 = vmatpush1.msra.mxu0 0.0
        %2818 = vmatprep.subr.mxu0 0.0
        %2819 = vmatpush1.msra.mxu0 0.0
        %2820 = vmatprep.subr.mxu0 0.0
        %2821 = vmatpush1.msra.mxu0 0.0
        %2822 = vmatprep.subr.mxu0 0.0
        %2823 = vmatpush1.msra.mxu0 0.0
        %2824 = vmatprep.subr.mxu0 0.0
        %2825 = vmatpush1.msra.mxu0 0.0
        %2826 = vmatprep.subr.mxu0 0.0
        %2827 = vmatpush1.msra.mxu0 0.0
        %2828 = vmatprep.subr.mxu0 %v2726
        %2829 = vmatpush1.msra.mxu0 %v2725
        %2830 = vmatprep.subr.mxu0 %v2714
        %2831 = vmatpush1.msra.mxu0 %v2713
        %2832 = vmatprep.subr.mxu0 %v2702
        %2833 = vmatpush1.msra.mxu0 %v2701
        %2834 = vmatprep.subr.mxu0 %v2690
        %2835 = vmatpush1.msra.mxu0 %v2689
        %2836 = vmatprep.subr.mxu0 %v2678
        %2837 = vmatpush1.msra.mxu0 %v2677
        %2838 = vmatprep.subr.mxu0 %v2666
        %2839 = vmatpush1.msra.mxu0 %v2665
        %2840 = vmatprep.subr.mxu0 %v2654
        %2841 = vmatpush1.msra.mxu0 %v2653
        %2842 = vmatprep.subr.mxu0 %v2642
        %2843 = vmatpush1.msra.mxu0 %v2641
        %2844 = vmatprep.subr.mxu0 0.0
        %2845 = vmatpush2.msra.mxu0 0.0
        %2846 = vmatprep.subr.mxu0 0.0
        %2847 = vmatpush2.msra.mxu0 0.0
        %2848 = vmatprep.subr.mxu0 0.0
        %2849 = vmatpush2.msra.mxu0 0.0
        %2850 = vmatprep.subr.mxu0 0.0
        %2851 = vmatpush2.msra.mxu0 0.0
        %2852 = vmatprep.subr.mxu0 0.0
        %2853 = vmatpush2.msra.mxu0 0.0
        %2854 = vmatprep.subr.mxu0 0.0
        %2855 = vmatpush2.msra.mxu0 0.0
        %2856 = vmatprep.subr.mxu0 0.0
        %2857 = vmatpush2.msra.mxu0 0.0
        %2858 = vmatprep.subr.mxu0 0.0
        %2859 = vmatpush2.msra.mxu0 0.0
        %2860 = vmatprep.subr.mxu0 0.0
        %2861 = vmatpush2.msra.mxu0 0.0
        %2862 = vmatprep.subr.mxu0 0.0
        %2863 = vmatpush2.msra.mxu0 0.0
        %2864 = vmatprep.subr.mxu0 0.0
        %2865 = vmatpush2.msra.mxu0 0.0
        %2866 = vmatprep.subr.mxu0 0.0
        %2867 = vmatpush2.msra.mxu0 0.0
        %2868 = vmatprep.subr.mxu0 0.0
        %2869 = vmatpush2.msra.mxu0 0.0
        %2870 = vmatprep.subr.mxu0 0.0
        %2871 = vmatpush2.msra.mxu0 0.0
        %2872 = vmatprep.subr.mxu0 0.0
        %2873 = vmatpush2.msra.mxu0 0.0
        %2874 = vmatprep.subr.mxu0 0.0
        %2875 = vmatpush2.msra.mxu0 0.0
        %2876 = vmatprep.mubr.f32.mxu0 0.0
        %2877 = vmatmul.mubr.f32.gmra.mxu0 %v1053
        %v2878 = vpop.f32.mrf.mxu0
        %v2879 = vadd.f32 0.0, %v2878
        %v2880 = vpop.f32.mrf.mxu0
        %v2881 = vadd.f32 0.0, %v2880
        %2882 = vmatprep.mubr.f32.mxu0 0.0
        %2883 = vmatmul.mubr.f32.gmra.mxu0 %v1056
        %v2884 = vpop.f32.mrf.mxu0
        %v2885 = vadd.f32 0.0, %v2884
        %v2886 = vpop.f32.mrf.mxu0
        %v2887 = vadd.f32 0.0, %v2886
        %2888 = vdwg.mxu0
        %2889 = vmatprep.subr.mxu0 0.0
        %2890 = vmatpush1.msra.mxu0 0.0
        %2891 = vmatprep.subr.mxu0 0.0
        %2892 = vmatpush1.msra.mxu0 0.0
        %2893 = vmatprep.subr.mxu0 0.0
        %2894 = vmatpush1.msra.mxu0 0.0
        %2895 = vmatprep.subr.mxu0 0.0
        %2896 = vmatpush1.msra.mxu0 0.0
        %2897 = vmatprep.subr.mxu0 0.0
        %2898 = vmatpush1.msra.mxu0 0.0
        %2899 = vmatprep.subr.mxu0 0.0
        %2900 = vmatpush1.msra.mxu0 0.0
        %2901 = vmatprep.subr.mxu0 0.0
        %2902 = vmatpush1.msra.mxu0 0.0
        %2903 = vmatprep.subr.mxu0 0.0
        %2904 = vmatpush1.msra.mxu0 0.0
        %2905 = vmatprep.subr.mxu0 %v2728
        %2906 = vmatpush1.msra.mxu0 %v2727
        %2907 = vmatprep.subr.mxu0 %v2716
        %2908 = vmatpush1.msra.mxu0 %v2715
        %2909 = vmatprep.subr.mxu0 %v2704
        %2910 = vmatpush1.msra.mxu0 %v2703
        %2911 = vmatprep.subr.mxu0 %v2692
        %2912 = vmatpush1.msra.mxu0 %v2691
        %2913 = vmatprep.subr.mxu0 %v2680
        %2914 = vmatpush1.msra.mxu0 %v2679
        %2915 = vmatprep.subr.mxu0 %v2668
        %2916 = vmatpush1.msra.mxu0 %v2667
        %2917 = vmatprep.subr.mxu0 %v2656
        %2918 = vmatpush1.msra.mxu0 %v2655
        %2919 = vmatprep.subr.mxu0 %v2644
        %2920 = vmatpush1.msra.mxu0 %v2643
        %2921 = vmatprep.subr.mxu0 0.0
        %2922 = vmatpush2.msra.mxu0 0.0
        %2923 = vmatprep.subr.mxu0 0.0
        %2924 = vmatpush2.msra.mxu0 0.0
        %2925 = vmatprep.subr.mxu0 0.0
        %2926 = vmatpush2.msra.mxu0 0.0
        %2927 = vmatprep.subr.mxu0 0.0
        %2928 = vmatpush2.msra.mxu0 0.0
        %2929 = vmatprep.subr.mxu0 0.0
        %2930 = vmatpush2.msra.mxu0 0.0
        %2931 = vmatprep.subr.mxu0 0.0
        %2932 = vmatpush2.msra.mxu0 0.0
        %2933 = vmatprep.subr.mxu0 0.0
        %2934 = vmatpush2.msra.mxu0 0.0
        %2935 = vmatprep.subr.mxu0 0.0
        %2936 = vmatpush2.msra.mxu0 0.0
        %2937 = vmatprep.subr.mxu0 0.0
        %2938 = vmatpush2.msra.mxu0 0.0
        %2939 = vmatprep.subr.mxu0 0.0
        %2940 = vmatpush2.msra.mxu0 0.0
        %2941 = vmatprep.subr.mxu0 0.0
        %2942 = vmatpush2.msra.mxu0 0.0
        %2943 = vmatprep.subr.mxu0 0.0
        %2944 = vmatpush2.msra.mxu0 0.0
        %2945 = vmatprep.subr.mxu0 0.0
        %2946 = vmatpush2.msra.mxu0 0.0
        %2947 = vmatprep.subr.mxu0 0.0
        %2948 = vmatpush2.msra.mxu0 0.0
        %2949 = vmatprep.subr.mxu0 0.0
        %2950 = vmatpush2.msra.mxu0 0.0
        %2951 = vmatprep.subr.mxu0 0.0
        %2952 = vmatpush2.msra.mxu0 0.0
        %2953 = vmatprep.mubr.f32.mxu0 0.0
        %2954 = vmatmul.mubr.f32.gmra.mxu0 %v1053
        %v2955 = vpop.f32.mrf.mxu0
        %v2956 = vadd.f32 0.0, %v2955
        %v2957 = vpop.f32.mrf.mxu0
        %v2958 = vadd.f32 0.0, %v2957
        %2959 = vmatprep.mubr.f32.mxu0 0.0
        %2960 = vmatmul.mubr.f32.gmra.mxu0 %v1056
        %v2961 = vpop.f32.mrf.mxu0
        %v2962 = vadd.f32 0.0, %v2961
        %v2963 = vpop.f32.mrf.mxu0
        %v2964 = vadd.f32 0.0, %v2963
        %2965 = vdwg.mxu0
        %2966 = vmatprep.subr.mxu0 0.0
        %2967 = vmatpush1.msra.mxu0 0.0
        %2968 = vmatprep.subr.mxu0 0.0
        %2969 = vmatpush1.msra.mxu0 0.0
        %2970 = vmatprep.subr.mxu0 0.0
        %2971 = vmatpush1.msra.mxu0 0.0
        %2972 = vmatprep.subr.mxu0 0.0
        %2973 = vmatpush1.msra.mxu0 0.0
        %2974 = vmatprep.subr.mxu0 0.0
        %2975 = vmatpush1.msra.mxu0 0.0
        %2976 = vmatprep.subr.mxu0 0.0
        %2977 = vmatpush1.msra.mxu0 0.0
        %2978 = vmatprep.subr.mxu0 0.0
        %2979 = vmatpush1.msra.mxu0 0.0
        %2980 = vmatprep.subr.mxu0 0.0
        %2981 = vmatpush1.msra.mxu0 0.0
        %2982 = vmatprep.subr.mxu0 %v2730
        %2983 = vmatpush1.msra.mxu0 %v2729
        %2984 = vmatprep.subr.mxu0 %v2718
        %2985 = vmatpush1.msra.mxu0 %v2717
        %2986 = vmatprep.subr.mxu0 %v2706
        %2987 = vmatpush1.msra.mxu0 %v2705
        %2988 = vmatprep.subr.mxu0 %v2694
        %2989 = vmatpush1.msra.mxu0 %v2693
        %2990 = vmatprep.subr.mxu0 %v2682
        %2991 = vmatpush1.msra.mxu0 %v2681
        %2992 = vmatprep.subr.mxu0 %v2670
        %2993 = vmatpush1.msra.mxu0 %v2669
        %2994 = vmatprep.subr.mxu0 %v2658
        %2995 = vmatpush1.msra.mxu0 %v2657
        %2996 = vmatprep.subr.mxu0 %v2646
        %2997 = vmatpush1.msra.mxu0 %v2645
        %2998 = vmatprep.subr.mxu0 0.0
        %2999 = vmatpush2.msra.mxu0 0.0
        %3000 = vmatprep.subr.mxu0 0.0
        %3001 = vmatpush2.msra.mxu0 0.0
        %3002 = vmatprep.subr.mxu0 0.0
        %3003 = vmatpush2.msra.mxu0 0.0
        %3004 = vmatprep.subr.mxu0 0.0
        %3005 = vmatpush2.msra.mxu0 0.0
        %3006 = vmatprep.subr.mxu0 0.0
        %3007 = vmatpush2.msra.mxu0 0.0
        %3008 = vmatprep.subr.mxu0 0.0
        %3009 = vmatpush2.msra.mxu0 0.0
        %3010 = vmatprep.subr.mxu0 0.0
        %3011 = vmatpush2.msra.mxu0 0.0
        %3012 = vmatprep.subr.mxu0 0.0
        %3013 = vmatpush2.msra.mxu0 0.0
        %3014 = vmatprep.subr.mxu0 0.0
        %3015 = vmatpush2.msra.mxu0 0.0
        %3016 = vmatprep.subr.mxu0 0.0
        %3017 = vmatpush2.msra.mxu0 0.0
        %3018 = vmatprep.subr.mxu0 0.0
        %3019 = vmatpush2.msra.mxu0 0.0
        %3020 = vmatprep.subr.mxu0 0.0
        %3021 = vmatpush2.msra.mxu0 0.0
        %3022 = vmatprep.subr.mxu0 0.0
        %3023 = vmatpush2.msra.mxu0 0.0
        %3024 = vmatprep.subr.mxu0 0.0
        %3025 = vmatpush2.msra.mxu0 0.0
        %3026 = vmatprep.subr.mxu0 0.0
        %3027 = vmatpush2.msra.mxu0 0.0
        %3028 = vmatprep.subr.mxu0 0.0
        %3029 = vmatpush2.msra.mxu0 0.0
        %3030 = vmatprep.mubr.f32.mxu0 0.0
        %3031 = vmatmul.mubr.f32.gmra.mxu0 %v1053
        %v3032 = vpop.f32.mrf.mxu0
        %v3033 = vadd.f32 0.0, %v3032
        %v3034 = vpop.f32.mrf.mxu0
        %v3035 = vadd.f32 0.0, %v3034
        %3036 = vmatprep.mubr.f32.mxu0 0.0
        %3037 = vmatmul.mubr.f32.gmra.mxu0 %v1056
        %v3038 = vpop.f32.mrf.mxu0
        %v3039 = vadd.f32 0.0, %v3038
        %v3040 = vpop.f32.mrf.mxu0
        %v3041 = vadd.f32 0.0, %v3040
        %3042 = vdwg.mxu0
        %3043 = vmatprep.subr.mxu0 0.0
        %3044 = vmatpush1.msra.mxu0 0.0
        %3045 = vmatprep.subr.mxu0 0.0
        %3046 = vmatpush1.msra.mxu0 0.0
        %3047 = vmatprep.subr.mxu0 0.0
        %3048 = vmatpush1.msra.mxu0 0.0
        %3049 = vmatprep.subr.mxu0 0.0
        %3050 = vmatpush1.msra.mxu0 0.0
        %3051 = vmatprep.subr.mxu0 0.0
        %3052 = vmatpush1.msra.mxu0 0.0
        %3053 = vmatprep.subr.mxu0 0.0
        %3054 = vmatpush1.msra.mxu0 0.0
        %3055 = vmatprep.subr.mxu0 0.0
        %3056 = vmatpush1.msra.mxu0 0.0
        %3057 = vmatprep.subr.mxu0 0.0
        %3058 = vmatpush1.msra.mxu0 0.0
        %3059 = vmatprep.subr.mxu0 %v2732
        %3060 = vmatpush1.msra.mxu0 %v2731
        %3061 = vmatprep.subr.mxu0 %v2720
        %3062 = vmatpush1.msra.mxu0 %v2719
        %3063 = vmatprep.subr.mxu0 %v2708
        %3064 = vmatpush1.msra.mxu0 %v2707
        %3065 = vmatprep.subr.mxu0 %v2696
        %3066 = vmatpush1.msra.mxu0 %v2695
        %3067 = vmatprep.subr.mxu0 %v2684
        %3068 = vmatpush1.msra.mxu0 %v2683
        %3069 = vmatprep.subr.mxu0 %v2672
        %3070 = vmatpush1.msra.mxu0 %v2671
        %3071 = vmatprep.subr.mxu0 %v2660
        %3072 = vmatpush1.msra.mxu0 %v2659
        %3073 = vmatprep.subr.mxu0 %v2648
        %3074 = vmatpush1.msra.mxu0 %v2647
        %3075 = vmatprep.subr.mxu0 0.0
        %3076 = vmatpush2.msra.mxu0 0.0
        %3077 = vmatprep.subr.mxu0 0.0
        %3078 = vmatpush2.msra.mxu0 0.0
        %3079 = vmatprep.subr.mxu0 0.0
        %3080 = vmatpush2.msra.mxu0 0.0
        %3081 = vmatprep.subr.mxu0 0.0
        %3082 = vmatpush2.msra.mxu0 0.0
        %3083 = vmatprep.subr.mxu0 0.0
        %3084 = vmatpush2.msra.mxu0 0.0
        %3085 = vmatprep.subr.mxu0 0.0
        %3086 = vmatpush2.msra.mxu0 0.0
        %3087 = vmatprep.subr.mxu0 0.0
        %3088 = vmatpush2.msra.mxu0 0.0
        %3089 = vmatprep.subr.mxu0 0.0
        %3090 = vmatpush2.msra.mxu0 0.0
        %3091 = vmatprep.subr.mxu0 0.0
        %3092 = vmatpush2.msra.mxu0 0.0
        %3093 = vmatprep.subr.mxu0 0.0
        %3094 = vmatpush2.msra.mxu0 0.0
        %3095 = vmatprep.subr.mxu0 0.0
        %3096 = vmatpush2.msra.mxu0 0.0
        %3097 = vmatprep.subr.mxu0 0.0
        %3098 = vmatpush2.msra.mxu0 0.0
        %3099 = vmatprep.subr.mxu0 0.0
        %3100 = vmatpush2.msra.mxu0 0.0
        %3101 = vmatprep.subr.mxu0 0.0
        %3102 = vmatpush2.msra.mxu0 0.0
        %3103 = vmatprep.subr.mxu0 0.0
        %3104 = vmatpush2.msra.mxu0 0.0
        %3105 = vmatprep.subr.mxu0 0.0
        %3106 = vmatpush2.msra.mxu0 0.0
        %3107 = vmatprep.mubr.f32.mxu0 0.0
        %3108 = vmatmul.mubr.f32.gmra.mxu0 %v1053
        %v3109 = vpop.f32.mrf.mxu0
        %v3110 = vadd.f32 0.0, %v3109
        %v3111 = vpop.f32.mrf.mxu0
        %v3112 = vadd.f32 0.0, %v3111
        %3113 = vmatprep.mubr.f32.mxu0 0.0
        %3114 = vmatmul.mubr.f32.gmra.mxu0 %v1056
        %v3115 = vpop.f32.mrf.mxu0
        %v3116 = vadd.f32 0.0, %v3115
        %v3117 = vpop.f32.mrf.mxu0
        %v3118 = vadd.f32 0.0, %v3117
        %3119 = vdwg.mxu0
        %3120 = vmatprep.subr.mxu0 0.0
        %3121 = vmatpush1.msra.mxu0 0.0
        %3122 = vmatprep.subr.mxu0 0.0
        %3123 = vmatpush1.msra.mxu0 0.0
        %3124 = vmatprep.subr.mxu0 0.0
        %3125 = vmatpush1.msra.mxu0 0.0
        %3126 = vmatprep.subr.mxu0 0.0
        %3127 = vmatpush1.msra.mxu0 0.0
        %3128 = vmatprep.subr.mxu0 0.0
        %3129 = vmatpush1.msra.mxu0 0.0
        %3130 = vmatprep.subr.mxu0 0.0
        %3131 = vmatpush1.msra.mxu0 0.0
        %3132 = vmatprep.subr.mxu0 0.0
        %3133 = vmatpush1.msra.mxu0 0.0
        %3134 = vmatprep.subr.mxu0 0.0
        %3135 = vmatpush1.msra.mxu0 0.0
        %3136 = vmatprep.subr.mxu0 %v2734
        %3137 = vmatpush1.msra.mxu0 %v2733
        %3138 = vmatprep.subr.mxu0 %v2722
        %3139 = vmatpush1.msra.mxu0 %v2721
        %3140 = vmatprep.subr.mxu0 %v2710
        %3141 = vmatpush1.msra.mxu0 %v2709
        %3142 = vmatprep.subr.mxu0 %v2698
        %3143 = vmatpush1.msra.mxu0 %v2697
        %3144 = vmatprep.subr.mxu0 %v2686
        %3145 = vmatpush1.msra.mxu0 %v2685
        %3146 = vmatprep.subr.mxu0 %v2674
        %3147 = vmatpush1.msra.mxu0 %v2673
        %3148 = vmatprep.subr.mxu0 %v2662
        %3149 = vmatpush1.msra.mxu0 %v2661
        %3150 = vmatprep.subr.mxu0 %v2650
        %3151 = vmatpush1.msra.mxu0 %v2649
        %3152 = vmatprep.subr.mxu0 0.0
        %3153 = vmatpush2.msra.mxu0 0.0
        %3154 = vmatprep.subr.mxu0 0.0
        %3155 = vmatpush2.msra.mxu0 0.0
        %3156 = vmatprep.subr.mxu0 0.0
        %3157 = vmatpush2.msra.mxu0 0.0
        %3158 = vmatprep.subr.mxu0 0.0
        %3159 = vmatpush2.msra.mxu0 0.0
        %3160 = vmatprep.subr.mxu0 0.0
        %3161 = vmatpush2.msra.mxu0 0.0
        %3162 = vmatprep.subr.mxu0 0.0
        %3163 = vmatpush2.msra.mxu0 0.0
        %3164 = vmatprep.subr.mxu0 0.0
        %3165 = vmatpush2.msra.mxu0 0.0
        %3166 = vmatprep.subr.mxu0 0.0
        %3167 = vmatpush2.msra.mxu0 0.0
        %3168 = vmatprep.subr.mxu0 0.0
        %3169 = vmatpush2.msra.mxu0 0.0
        %3170 = vmatprep.subr.mxu0 0.0
        %3171 = vmatpush2.msra.mxu0 0.0
        %3172 = vmatprep.subr.mxu0 0.0
        %3173 = vmatpush2.msra.mxu0 0.0
        %3174 = vmatprep.subr.mxu0 0.0
        %3175 = vmatpush2.msra.mxu0 0.0
        %3176 = vmatprep.subr.mxu0 0.0
        %3177 = vmatpush2.msra.mxu0 0.0
        %3178 = vmatprep.subr.mxu0 0.0
        %3179 = vmatpush2.msra.mxu0 0.0
        %3180 = vmatprep.subr.mxu0 0.0
        %3181 = vmatpush2.msra.mxu0 0.0
        %3182 = vmatprep.subr.mxu0 0.0
        %3183 = vmatpush2.msra.mxu0 0.0
        %3184 = vmatprep.mubr.f32.mxu0 0.0
        %3185 = vmatmul.mubr.f32.gmra.mxu0 %v1053
        %v3186 = vpop.f32.mrf.mxu0
        %v3187 = vadd.f32 0.0, %v3186
        %v3188 = vpop.f32.mrf.mxu0
        %v3189 = vadd.f32 0.0, %v3188
        %3190 = vmatprep.mubr.f32.mxu0 0.0
        %3191 = vmatmul.mubr.f32.gmra.mxu0 %v1056
        %v3192 = vpop.f32.mrf.mxu0
        %v3193 = vadd.f32 0.0, %v3192
        %v3194 = vpop.f32.mrf.mxu0
        %v3195 = vadd.f32 0.0, %v3194
        %3196 = vdwg.mxu0
        %v3197 = vmax.f32 %v1125, %v1684
        %v3198 = vmax.f32 %v1127, %v1686
        %v3199 = vmax.f32 %v1202, %v1761
        %v3200 = vmax.f32 %v1204, %v1763
        %v3201 = vmax.f32 %v1279, %v1838
        %v3202 = vmax.f32 %v1281, %v1840
        %v3203 = vmax.f32 %v1356, %v1915
        %v3204 = vmax.f32 %v1358, %v1917
        %v3205 = vmax.f32 %v1433, %v1992
        %v3206 = vmax.f32 %v1435, %v1994
        %v3207 = vmax.f32 %v1510, %v2069
        %v3208 = vmax.f32 %v1512, %v2071
        %v3209 = vmax.f32 %v1131, %v1690
        %v3210 = vmax.f32 %v1133, %v1692
        %v3211 = vmax.f32 %v1208, %v1767
        %v3212 = vmax.f32 %v1210, %v1769
        %v3213 = vmax.f32 %v1285, %v1844
        %v3214 = vmax.f32 %v1287, %v1846
        %v3215 = vmax.f32 %v1362, %v1921
        %v3216 = vmax.f32 %v1364, %v1923
        %v3217 = vmax.f32 %v1439, %v1998
        %v3218 = vmax.f32 %v1441, %v2000
        %v3219 = vmax.f32 %v1516, %v2075
        %v3220 = vmax.f32 %v1518, %v2077
        %v3221 = vmax.f32 %v2243, %v2802
        %v3222 = vmax.f32 %v2245, %v2804
        %v3223 = vmax.f32 %v2320, %v2879
        %v3224 = vmax.f32 %v2322, %v2881
        %v3225 = vmax.f32 %v2397, %v2956
        %v3226 = vmax.f32 %v2399, %v2958
        %v3227 = vmax.f32 %v2474, %v3033
        %v3228 = vmax.f32 %v2476, %v3035
        %v3229 = vmax.f32 %v2551, %v3110
        %v3230 = vmax.f32 %v2553, %v3112
        %v3231 = vmax.f32 %v2628, %v3187
        %v3232 = vmax.f32 %v2630, %v3189
        %v3233 = vmax.f32 %v2249, %v2808
        %v3234 = vmax.f32 %v2251, %v2810
        %v3235 = vmax.f32 %v2326, %v2885
        %v3236 = vmax.f32 %v2328, %v2887
        %v3237 = vmax.f32 %v2403, %v2962
        %v3238 = vmax.f32 %v2405, %v2964
        %v3239 = vmax.f32 %v2480, %v3039
        %v3240 = vmax.f32 %v2482, %v3041
        %v3241 = vmax.f32 %v2557, %v3116
        %v3242 = vmax.f32 %v2559, %v3118
        %v3243 = vmax.f32 %v2634, %v3193
        %v3244 = vmax.f32 %v2636, %v3195
        %v3245 = vmax.f32 %v3197, %v3221
        %v3246 = vmax.f32 %v3198, %v3222
        %v3247 = vmax.f32 %v3199, %v3223
        %v3248 = vmax.f32 %v3200, %v3224
        %v3249 = vmax.f32 %v3201, %v3225
        %v3250 = vmax.f32 %v3202, %v3226
        %v3251 = vmax.f32 %v3203, %v3227
        %v3252 = vmax.f32 %v3204, %v3228
        %v3253 = vmax.f32 %v3205, %v3229
        %v3254 = vmax.f32 %v3206, %v3230
        %v3255 = vmax.f32 %v3207, %v3231
        %v3256 = vmax.f32 %v3208, %v3232
        %v3257 = vmax.f32 %v3209, %v3233
        %v3258 = vmax.f32 %v3210, %v3234
        %v3259 = vmax.f32 %v3211, %v3235
        %v3260 = vmax.f32 %v3212, %v3236
        %v3261 = vmax.f32 %v3213, %v3237
        %v3262 = vmax.f32 %v3214, %v3238
        %v3263 = vmax.f32 %v3215, %v3239
        %v3264 = vmax.f32 %v3216, %v3240
        %v3265 = vmax.f32 %v3217, %v3241
        %v3266 = vmax.f32 %v3218, %v3242
        %v3267 = vmax.f32 %v3219, %v3243
        %v3268 = vmax.f32 %v3220, %v3244
        %v3269 = vld [vmem:[%s2] sm:$0xff]
        %v3270 = vld [vmem:[%s2 + $0x8] sm:$0xff]
        %3272 = vset.pattern.permute.xlu0 0
        %3273 = vperm.xlu0 %3272, %v3269
        %v3274 = vpop.permute.xlu0 %3273
        %3277 = vset.pattern.permute.xlu0 0
        %3278 = vperm.xlu0 %3277, %v3270
        %v3279 = vpop.permute.xlu0 %3278
        %v3281 = vadd.f32 %v3245, %v3274
        %v3282 = vadd.f32 %v3246, %v3274
        %v3283 = vadd.f32 %v3247, %v3274
        %v3284 = vadd.f32 %v3248, %v3274
        %v3285 = vadd.f32 %v3249, %v3274
        %v3286 = vadd.f32 %v3250, %v3274
        %v3287 = vadd.f32 %v3251, %v3274
        %v3288 = vadd.f32 %v3252, %v3274
        %v3289 = vadd.f32 %v3253, %v3274
        %v3290 = vadd.f32 %v3254, %v3274
        %v3291 = vadd.f32 %v3255, %v3274
        %v3292 = vadd.f32 %v3256, %v3274
        %v3293 = vadd.f32 %v3257, %v3279
        %v3294 = vadd.f32 %v3258, %v3279
        %v3295 = vadd.f32 %v3259, %v3279
        %v3296 = vadd.f32 %v3260, %v3279
        %v3297 = vadd.f32 %v3261, %v3279
        %v3298 = vadd.f32 %v3262, %v3279
        %v3299 = vadd.f32 %v3263, %v3279
        %v3300 = vadd.f32 %v3264, %v3279
        %v3301 = vadd.f32 %v3265, %v3279
        %v3302 = vadd.f32 %v3266, %v3279
        %v3303 = vadd.f32 %v3267, %v3279
        %v3304 = vadd.f32 %v3268, %v3279
        %v3305 = vmax.f32 %v3281, 0.0
        %v3306 = vmax.f32 %v3282, 0.0
        %v3307 = vmax.f32 %v3283, 0.0
        %v3308 = vmax.f32 %v3284, 0.0
        %v3309 = vmax.f32 %v3285, 0.0
        %v3310 = vmax.f32 %v3286, 0.0
        %v3311 = vmax.f32 %v3287, 0.0
        %v3312 = vmax.f32 %v3288, 0.0
        %v3313 = vmax.f32 %v3289, 0.0
        %v3314 = vmax.f32 %v3290, 0.0
        %v3315 = vmax.f32 %v3291, 0.0
        %v3316 = vmax.f32 %v3292, 0.0
        %v3317 = vmax.f32 %v3293, 0.0
        %v3318 = vmax.f32 %v3294, 0.0
        %v3319 = vmax.f32 %v3295, 0.0
        %v3320 = vmax.f32 %v3296, 0.0
        %v3321 = vmax.f32 %v3297, 0.0
        %v3322 = vmax.f32 %v3298, 0.0
        %v3323 = vmax.f32 %v3299, 0.0
        %v3324 = vmax.f32 %v3300, 0.0
        %v3325 = vmax.f32 %v3301, 0.0
        %v3326 = vmax.f32 %v3302, 0.0
        %v3327 = vmax.f32 %v3303, 0.0
        %v3328 = vmax.f32 %v3304, 0.0
        %3329 = vst [vmem:[%s950] sm:$0xff] %v3305
        %3330 = vst [vmem:[%s950 + $0x8] sm:$0xff] %v3306
        %3331 = vst [vmem:[%s950 + $0x10] sm:$0xff] %v3307
        %3332 = vst [vmem:[%s950 + $0x18] sm:$0xff] %v3308
        %3333 = vst [vmem:[%s950 + $0x20] sm:$0xff] %v3309
        %3334 = vst [vmem:[%s950 + $0x28] sm:$0xff] %v3310
        %3335 = vst [vmem:[%s950 + $0x30] sm:$0xff] %v3311
        %3336 = vst [vmem:[%s950 + $0x38] sm:$0xff] %v3312
        %3337 = vst [vmem:[%s950 + $0x40] sm:$0xff] %v3313
        %3338 = vst [vmem:[%s950 + $0x48] sm:$0xff] %v3314
        %3339 = vst [vmem:[%s950 + $0x50] sm:$0xff] %v3315
        %3340 = vst [vmem:[%s950 + $0x58] sm:$0xff] %v3316
        %3341 = vst [vmem:[%s950 + $0x60] sm:$0xff] %v3317
        %3342 = vst [vmem:[%s950 + $0x68] sm:$0xff] %v3318
        %3343 = vst [vmem:[%s950 + $0x70] sm:$0xff] %v3319
        %3344 = vst [vmem:[%s950 + $0x78] sm:$0xff] %v3320
        %3345 = vst [vmem:[%s950 + $0x80] sm:$0xff] %v3321
        %3346 = vst [vmem:[%s950 + $0x88] sm:$0xff] %v3322
        %3347 = vst [vmem:[%s950 + $0x90] sm:$0xff] %v3323
        %3348 = vst [vmem:[%s950 + $0x98] sm:$0xff] %v3324
        %3349 = vst [vmem:[%s950 + $0xa0] sm:$0xff] %v3325
        %3350 = vst [vmem:[%s950 + $0xa8] sm:$0xff] %v3326
        %3351 = vst [vmem:[%s950 + $0xb0] sm:$0xff] %v3327
        %3352 = vst [vmem:[%s950 + $0xb8] sm:$0xff] %v3328
        %s3353 = sand.u32 %s90, 1
        %s3354 = sand.u32 %s90, 1
        %s3355 = smul.addr %s3354, 192
        %s3356 = scalar_lea.vmem [#allocation3], %s3355
        // Predicated region
        $region56: #{dqn_forward.4} parent=50 // pred_check
          %p3357 = pneg %p100
        $region57: #{dqn_forward.4} parent=50 // pred_check_branch
          %3359 = sbr.rel (%p3357) target = $region59
        $region58: #{dqn_forward.4} parent=50 // pred_region
          %s3360 = smul.u32 12, %s14
          %s3361 = smul.addr %s3360, 8
          %s3362 = scalar_lea.vmem %s3, %s3361
          // Predicated region
          $region60: #{dqn_forward.4} parent=58 // pred_check
            _
          $region61: #{dqn_forward.4} parent=58 // pred_check_branch
            %3364 = sbr.rel (0) target = $region63
          $region62: #{dqn_forward.4} parent=58 // pred_region
            // Predicated region
            $region64: #{dqn_forward.4} parent=62 // pred_check
              _
            $region65: #{dqn_forward.4} parent=62 // pred_check_branch
              %3366 = sbr.rel (0) target = $region67
            $region66: #{dqn_forward.4} parent=62 // pred_region
              loop: start=0, step=1, limit=1
              $region68: #{dqn_forward.4} parent=66 // loop_pre_header
                _
              $region69: #{dqn_forward.4} parent=66 // loop_header
                %s3368 = sphi 0, %s3372
                %p3369 = scmp.ge.s32.totalorder %s3368, 1
                %s3373 = sphi %s3356, %s3356
                %s3374 = sphi %s3362, %s3362
              $region70: #{dqn_forward.4} parent=66 // loop_header_branch
                %3371 = sbr.rel (%p3369) target = $region74
              $region71: #{dqn_forward.4} parent=66 // loop_body
                %v3375 = vld [vmem:[%s3373] sm:$0xff]
                %3376 = vst [vmem:[%s3374] sm:$0xff] %v3375
                %v3377 = vld [vmem:[%s3373 + $0x8] sm:$0xff]
                %3378 = vst [vmem:[%s3374 + $0x8] sm:$0xff] %v3377
                %v3379 = vld [vmem:[%s3373 + $0x10] sm:$0xff]
                %3380 = vst [vmem:[%s3374 + $0x10] sm:$0xff] %v3379
                %v3381 = vld [vmem:[%s3373 + $0x18] sm:$0xff]
                %3382 = vst [vmem:[%s3374 + $0x18] sm:$0xff] %v3381
                %v3383 = vld [vmem:[%s3373 + $0x20] sm:$0xff]
                %3384 = vst [vmem:[%s3374 + $0x20] sm:$0xff] %v3383
                %v3385 = vld [vmem:[%s3373 + $0x28] sm:$0xff]
                %3386 = vst [vmem:[%s3374 + $0x28] sm:$0xff] %v3385
                %v3387 = vld [vmem:[%s3373 + $0x30] sm:$0xff]
                %3388 = vst [vmem:[%s3374 + $0x30] sm:$0xff] %v3387
                %v3389 = vld [vmem:[%s3373 + $0x38] sm:$0xff]
                %3390 = vst [vmem:[%s3374 + $0x38] sm:$0xff] %v3389
                %v3391 = vld [vmem:[%s3373 + $0x40] sm:$0xff]
                %3392 = vst [vmem:[%s3374 + $0x40] sm:$0xff] %v3391
                %v3393 = vld [vmem:[%s3373 + $0x48] sm:$0xff]
                %3394 = vst [vmem:[%s3374 + $0x48] sm:$0xff] %v3393
                %v3395 = vld [vmem:[%s3373 + $0x50] sm:$0xff]
                %3396 = vst [vmem:[%s3374 + $0x50] sm:$0xff] %v3395
                %v3397 = vld [vmem:[%s3373 + $0x58] sm:$0xff]
                %3398 = vst [vmem:[%s3374 + $0x58] sm:$0xff] %v3397
                %v3399 = vld [vmem:[%s3373 + $0x60] sm:$0xff]
                %3400 = vst [vmem:[%s3374 + $0x120] sm:$0xff] %v3399
                %v3401 = vld [vmem:[%s3373 + $0x68] sm:$0xff]
                %3402 = vst [vmem:[%s3374 + $0x128] sm:$0xff] %v3401
                %v3403 = vld [vmem:[%s3373 + $0x70] sm:$0xff]
                %3404 = vst [vmem:[%s3374 + $0x130] sm:$0xff] %v3403
                %v3405 = vld [vmem:[%s3373 + $0x78] sm:$0xff]
                %3406 = vst [vmem:[%s3374 + $0x138] sm:$0xff] %v3405
                %v3407 = vld [vmem:[%s3373 + $0x80] sm:$0xff]
                %3408 = vst [vmem:[%s3374 + $0x140] sm:$0xff] %v3407
                %v3409 = vld [vmem:[%s3373 + $0x88] sm:$0xff]
                %3410 = vst [vmem:[%s3374 + $0x148] sm:$0xff] %v3409
                %v3411 = vld [vmem:[%s3373 + $0x90] sm:$0xff]
                %3412 = vst [vmem:[%s3374 + $0x150] sm:$0xff] %v3411
                %v3413 = vld [vmem:[%s3373 + $0x98] sm:$0xff]
                %3414 = vst [vmem:[%s3374 + $0x158] sm:$0xff] %v3413
                %v3415 = vld [vmem:[%s3373 + $0xa0] sm:$0xff]
                %3416 = vst [vmem:[%s3374 + $0x160] sm:$0xff] %v3415
                %v3417 = vld [vmem:[%s3373 + $0xa8] sm:$0xff]
                %3418 = vst [vmem:[%s3374 + $0x168] sm:$0xff] %v3417
                %v3419 = vld [vmem:[%s3373 + $0xb0] sm:$0xff]
                %3420 = vst [vmem:[%s3374 + $0x170] sm:$0xff] %v3419
                %v3421 = vld [vmem:[%s3373 + $0xb8] sm:$0xff]
                %3422 = vst [vmem:[%s3374 + $0x178] sm:$0xff] %v3421
              $region72: #{dqn_forward.4} parent=66 // loop_footer
                %s3372 = sadd.s32 1, %s3368
              $region73: #{dqn_forward.4} parent=66 // loop_footer_branch
                %3367 = sbr.rel target = $region69
              $region74: #{dqn_forward.4} parent=66 // loop_exit
                _
            $region67: #{dqn_forward.4} parent=62 // pred_fallthru
              _
            // Predicated region
            $region75: #{dqn_forward.4} parent=62 // pred_check
              _
            $region76: #{dqn_forward.4} parent=62 // pred_check_branch
              %3424 = sbr.rel target = $region78
            $region77: #{dqn_forward.4} parent=62 // pred_region
              _
            $region78: #{dqn_forward.4} parent=62 // pred_fallthru
              _
          $region63: #{dqn_forward.4} parent=58 // pred_fallthru
            _
          %3425 = vnop
        $region59: #{dqn_forward.4} parent=50 // pred_fallthru
          _
      $region51: #{dqn_forward.4} parent=5 // pred_fallthru
        _
      %p3426 = scmp.le.s32.totalorder 2, %s9
      // Predicated region
      $region79: #{dqn_forward.4} parent=5 // pred_check
        %p3427 = pneg %p3426
      $region80: #{dqn_forward.4} parent=5 // pred_check_branch
        %3429 = sbr.rel (%p3427) target = $region82
      $region81: #{dqn_forward.4} parent=5 // pred_region
        %s3430 = ssub.s32 %s9, 2
        // Predicated region
        $region83: #{dqn_forward.4} parent=81 // pred_check
          %p3431 = pneg %p106
        $region84: #{dqn_forward.4} parent=81 // pred_check_branch
          %3433 = sbr.rel (%p3431) target = $region86
        $region85: #{dqn_forward.4} parent=81 // pred_region
          %s3434 = sand.u32 %s91, 1
          %s3435 = sand.u32 %s91, 1
          %s3436 = smul.addr %s3435, 192
          %s3437 = scalar_lea.vmem [#allocation3], %s3436
        $region86: #{dqn_forward.4} parent=81 // pred_fallthru
          _
      $region82: #{dqn_forward.4} parent=5 // pred_fallthru
        _
    $region6: #{dqn_forward.4} parent=1 // loop_footer
      %s13 = sadd.s32 1, %s9
    $region7: #{dqn_forward.4} parent=1 // loop_footer_branch
      %8 = sbr.rel target = $region3
    $region8: #{dqn_forward.4} parent=1 // loop_exit
      _

// kernel: dqn_forward.5
$region0: #{dqn_forward.5}
  #allocation0 [shape = 'u32[]', space=smem, size = 0x4, offset = 0x4, fixed_abs, tag = 'smem constant byte address 0x4 - core index']
  #allocation1 [shape = 'u32[144,128]{1,0:T(1,128)}', space=vmem, size = 0x12000, scoped, tag = 'internal scratch']
  %s0 = inlined_call_operand.vmem [shape: f32[4,256,256], index: 0, kind: input, shape index: {}]
  %s1 = inlined_call_operand.vmem [shape: f32[32,256], index: 1, kind: input, shape index: {}]
  %s2 = inlined_call_operand.vmem [shape: f32[32,1], index: 2, kind: input, shape index: {}]
  %s3 = inlined_call_operand.vmem [shape: f32[32,256], index: 3, kind: output, shape index: {}]
  %s4 = sld [smem:[#allocation0]]
  $region22: #{dqn_forward.5} parent=0
    _
  %s6 = ssub.s32 1, %s4
  %s7 = scalar_select 0, %s6, %s4
  // Predicated region
  $region2: #{dqn_forward.5} parent=0 // pred_check
    _
  $region3: #{dqn_forward.5} parent=0 // pred_check_branch
    %9 = sbr.rel (0) target = $region5
  $region4: #{dqn_forward.5} parent=0 // pred_region
    _
  $region5: #{dqn_forward.5} parent=0 // pred_fallthru
    _
  // Predicated region
  $region6: #{dqn_forward.5} parent=0 // pred_check
    _
  $region7: #{dqn_forward.5} parent=0 // pred_check_branch
    %11 = sbr.rel (0) target = $region9
  $region8: #{dqn_forward.5} parent=0 // pred_region
    _
  $region9: #{dqn_forward.5} parent=0 // pred_fallthru
    _
  // Predicated region
  $region10: #{dqn_forward.5} parent=0 // pred_check
    _
  $region11: #{dqn_forward.5} parent=0 // pred_check_branch
    %13 = sbr.rel (0) target = $region13
  $region12: #{dqn_forward.5} parent=0 // pred_region
    _
  $region13: #{dqn_forward.5} parent=0 // pred_fallthru
    _
  %v14 = vld [vmem:[%s1] sm:$0xff]
  %v15 = vld [vmem:[%s1 + $0x8] sm:$0xff]
  %v16 = vld [vmem:[%s1 + $0x10] sm:$0xff]
  %v17 = vld [vmem:[%s1 + $0x18] sm:$0xff]
  %v18 = vld [vmem:[%s1 + $0x20] sm:$0xff]
  %v19 = vld [vmem:[%s1 + $0x28] sm:$0xff]
  %v20 = vld [vmem:[%s1 + $0x30] sm:$0xff]
  %v21 = vld [vmem:[%s1 + $0x38] sm:$0xff]
  %v22 = vld [vmem:[%s0] sm:$0xff]
  %v23 = vld [vmem:[%s0 + $0x8] sm:$0xff]
  %v24 = vld [vmem:[%s0 + $0x10] sm:$0xff]
  %v25 = vld [vmem:[%s0 + $0x18] sm:$0xff]
  %v26 = vld [vmem:[%s0 + $0x20] sm:$0xff]
  %v27 = vld [vmem:[%s0 + $0x28] sm:$0xff]
  %v28 = vld [vmem:[%s0 + $0x30] sm:$0xff]
  %v29 = vld [vmem:[%s0 + $0x38] sm:$0xff]
  %v30 = vld [vmem:[%s0 + $0x40] sm:$0xff]
  %v31 = vld [vmem:[%s0 + $0x48] sm:$0xff]
  %v32 = vld [vmem:[%s0 + $0x50] sm:$0xff]
  %v33 = vld [vmem:[%s0 + $0x58] sm:$0xff]
  %v34 = vld [vmem:[%s0 + $0x60] sm:$0xff]
  %v35 = vld [vmem:[%s0 + $0x68] sm:$0xff]
  %v36 = vld [vmem:[%s0 + $0x70] sm:$0xff]
  %v37 = vld [vmem:[%s0 + $0x78] sm:$0xff]
  %v38 = vld [vmem:[%s0 + $0x80] sm:$0xff]
  %v39 = vld [vmem:[%s0 + $0x88] sm:$0xff]
  %v40 = vld [vmem:[%s0 + $0x90] sm:$0xff]
  %v41 = vld [vmem:[%s0 + $0x98] sm:$0xff]
  %v42 = vld [vmem:[%s0 + $0xa0] sm:$0xff]
  %v43 = vld [vmem:[%s0 + $0xa8] sm:$0xff]
  %v44 = vld [vmem:[%s0 + $0xb0] sm:$0xff]
  %v45 = vld [vmem:[%s0 + $0xb8] sm:$0xff]
  %v46 = vld [vmem:[%s0 + $0xc0] sm:$0xff]
  %v47 = vld [vmem:[%s0 + $0xc8] sm:$0xff]
  %v48 = vld [vmem:[%s0 + $0xd0] sm:$0xff]
  %v49 = vld [vmem:[%s0 + $0xd8] sm:$0xff]
  %v50 = vld [vmem:[%s0 + $0xe0] sm:$0xff]
  %v51 = vld [vmem:[%s0 + $0xe8] sm:$0xff]
  %v52 = vld [vmem:[%s0 + $0xf0] sm:$0xff]
  %v53 = vld [vmem:[%s0 + $0xf8] sm:$0xff]
  %v54 = vld [vmem:[%s0 + $0x100] sm:$0xff]
  %v55 = vld [vmem:[%s0 + $0x108] sm:$0xff]
  %v56 = vld [vmem:[%s0 + $0x110] sm:$0xff]
  %v57 = vld [vmem:[%s0 + $0x118] sm:$0xff]
  %v58 = vld [vmem:[%s0 + $0x120] sm:$0xff]
  %v59 = vld [vmem:[%s0 + $0x128] sm:$0xff]
  %v60 = vld [vmem:[%s0 + $0x130] sm:$0xff]
  %v61 = vld [vmem:[%s0 + $0x138] sm:$0xff]
  %v62 = vld [vmem:[%s0 + $0x140] sm:$0xff]
  %v63 = vld [vmem:[%s0 + $0x148] sm:$0xff]
  %v64 = vld [vmem:[%s0 + $0x150] sm:$0xff]
  %v65 = vld [vmem:[%s0 + $0x158] sm:$0xff]
  %v66 = vld [vmem:[%s0 + $0x160] sm:$0xff]
  %v67 = vld [vmem:[%s0 + $0x168] sm:$0xff]
  %v68 = vld [vmem:[%s0 + $0x170] sm:$0xff]
  %v69 = vld [vmem:[%s0 + $0x178] sm:$0xff]
  %v70 = vld [vmem:[%s0 + $0x180] sm:$0xff]
  %v71 = vld [vmem:[%s0 + $0x188] sm:$0xff]
  %v72 = vld [vmem:[%s0 + $0x190] sm:$0xff]
  %v73 = vld [vmem:[%s0 + $0x198] sm:$0xff]
  %v74 = vld [vmem:[%s0 + $0x1a0] sm:$0xff]
  %v75 = vld [vmem:[%s0 + $0x1a8] sm:$0xff]
  %v76 = vld [vmem:[%s0 + $0x1b0] sm:$0xff]
  %v77 = vld [vmem:[%s0 + $0x1b8] sm:$0xff]
  %v78 = vld [vmem:[%s0 + $0x1c0] sm:$0xff]
  %v79 = vld [vmem:[%s0 + $0x1c8] sm:$0xff]
  %v80 = vld [vmem:[%s0 + $0x1d0] sm:$0xff]
  %v81 = vld [vmem:[%s0 + $0x1d8] sm:$0xff]
  %v82 = vld [vmem:[%s0 + $0x1e0] sm:$0xff]
  %v83 = vld [vmem:[%s0 + $0x1e8] sm:$0xff]
  %v84 = vld [vmem:[%s0 + $0x1f0] sm:$0xff]
  %v85 = vld [vmem:[%s0 + $0x1f8] sm:$0xff]
  %86 = vmatprep.subr.mxu0 %v53
  %87 = vmatpush1.msra.mxu0 %v52
  %88 = vmatprep.subr.mxu0 %v51
  %89 = vmatpush1.msra.mxu0 %v50
  %90 = vmatprep.subr.mxu0 %v49
  %91 = vmatpush1.msra.mxu0 %v48
  %92 = vmatprep.subr.mxu0 %v47
  %93 = vmatpush1.msra.mxu0 %v46
  %94 = vmatprep.subr.mxu0 %v45
  %95 = vmatpush1.msra.mxu0 %v44
  %96 = vmatprep.subr.mxu0 %v43
  %97 = vmatpush1.msra.mxu0 %v42
  %98 = vmatprep.subr.mxu0 %v41
  %99 = vmatpush1.msra.mxu0 %v40
  %100 = vmatprep.subr.mxu0 %v39
  %101 = vmatpush1.msra.mxu0 %v38
  %102 = vmatprep.subr.mxu0 %v37
  %103 = vmatpush1.msra.mxu0 %v36
  %104 = vmatprep.subr.mxu0 %v35
  %105 = vmatpush1.msra.mxu0 %v34
  %106 = vmatprep.subr.mxu0 %v33
  %107 = vmatpush1.msra.mxu0 %v32
  %108 = vmatprep.subr.mxu0 %v31
  %109 = vmatpush1.msra.mxu0 %v30
  %110 = vmatprep.subr.mxu0 %v29
  %111 = vmatpush1.msra.mxu0 %v28
  %112 = vmatprep.subr.mxu0 %v27
  %113 = vmatpush1.msra.mxu0 %v26
  %114 = vmatprep.subr.mxu0 %v25
  %115 = vmatpush1.msra.mxu0 %v24
  %116 = vmatprep.subr.mxu0 %v23
  %117 = vmatpush1.msra.mxu0 %v22
  %118 = vmatprep.subr.mxu0 %v85
  %119 = vmatpush2.msra.mxu0 %v84
  %120 = vmatprep.subr.mxu0 %v83
  %121 = vmatpush2.msra.mxu0 %v82
  %122 = vmatprep.subr.mxu0 %v81
  %123 = vmatpush2.msra.mxu0 %v80
  %124 = vmatprep.subr.mxu0 %v79
  %125 = vmatpush2.msra.mxu0 %v78
  %126 = vmatprep.subr.mxu0 %v77
  %127 = vmatpush2.msra.mxu0 %v76
  %128 = vmatprep.subr.mxu0 %v75
  %129 = vmatpush2.msra.mxu0 %v74
  %130 = vmatprep.subr.mxu0 %v73
  %131 = vmatpush2.msra.mxu0 %v72
  %132 = vmatprep.subr.mxu0 %v71
  %133 = vmatpush2.msra.mxu0 %v70
  %134 = vmatprep.subr.mxu0 %v69
  %135 = vmatpush2.msra.mxu0 %v68
  %136 = vmatprep.subr.mxu0 %v67
  %137 = vmatpush2.msra.mxu0 %v66
  %138 = vmatprep.subr.mxu0 %v65
  %139 = vmatpush2.msra.mxu0 %v64
  %140 = vmatprep.subr.mxu0 %v63
  %141 = vmatpush2.msra.mxu0 %v62
  %142 = vmatprep.subr.mxu0 %v61
  %143 = vmatpush2.msra.mxu0 %v60
  %144 = vmatprep.subr.mxu0 %v59
  %145 = vmatpush2.msra.mxu0 %v58
  %146 = vmatprep.subr.mxu0 %v57
  %147 = vmatpush2.msra.mxu0 %v56
  %148 = vmatprep.subr.mxu0 %v55
  %149 = vmatpush2.msra.mxu0 %v54
  %150 = vmatprep.mubr.f32.mxu0 %v15
  %151 = vmatmul.mubr.f32.gmra.mxu0 %v14
  %v152 = vpop.f32.mrf.mxu0
  %v153 = vadd.f32 0.0, %v152
  %v154 = vpop.f32.mrf.mxu0
  %v155 = vadd.f32 0.0, %v154
  %156 = vmatprep.mubr.f32.mxu0 %v17
  %157 = vmatmul.mubr.f32.gmra.mxu0 %v16
  %v158 = vpop.f32.mrf.mxu0
  %v159 = vadd.f32 0.0, %v158
  %v160 = vpop.f32.mrf.mxu0
  %v161 = vadd.f32 0.0, %v160
  %162 = vmatprep.mubr.f32.mxu0 %v19
  %163 = vmatmul.mubr.f32.gmra.mxu0 %v18
  %v164 = vpop.f32.mrf.mxu0
  %v165 = vadd.f32 0.0, %v164
  %v166 = vpop.f32.mrf.mxu0
  %v167 = vadd.f32 0.0, %v166
  %168 = vmatprep.mubr.f32.mxu0 %v21
  %169 = vmatmul.mubr.f32.gmra.mxu0 %v20
  %v170 = vpop.f32.mrf.mxu0
  %v171 = vadd.f32 0.0, %v170
  %v172 = vpop.f32.mrf.mxu0
  %v173 = vadd.f32 0.0, %v172
  %174 = vdwg.mxu0
  %s175 = scalar_lea.vmem %s0, 512
  %v176 = vld [vmem:[%s175] sm:$0xff]
  %v177 = vld [vmem:[%s175 + $0x8] sm:$0xff]
  %v178 = vld [vmem:[%s175 + $0x10] sm:$0xff]
  %v179 = vld [vmem:[%s175 + $0x18] sm:$0xff]
  %v180 = vld [vmem:[%s175 + $0x20] sm:$0xff]
  %v181 = vld [vmem:[%s175 + $0x28] sm:$0xff]
  %v182 = vld [vmem:[%s175 + $0x30] sm:$0xff]
  %v183 = vld [vmem:[%s175 + $0x38] sm:$0xff]
  %v184 = vld [vmem:[%s175 + $0x40] sm:$0xff]
  %v185 = vld [vmem:[%s175 + $0x48] sm:$0xff]
  %v186 = vld [vmem:[%s175 + $0x50] sm:$0xff]
  %v187 = vld [vmem:[%s175 + $0x58] sm:$0xff]
  %v188 = vld [vmem:[%s175 + $0x60] sm:$0xff]
  %v189 = vld [vmem:[%s175 + $0x68] sm:$0xff]
  %v190 = vld [vmem:[%s175 + $0x70] sm:$0xff]
  %v191 = vld [vmem:[%s175 + $0x78] sm:$0xff]
  %v192 = vld [vmem:[%s175 + $0x80] sm:$0xff]
  %v193 = vld [vmem:[%s175 + $0x88] sm:$0xff]
  %v194 = vld [vmem:[%s175 + $0x90] sm:$0xff]
  %v195 = vld [vmem:[%s175 + $0x98] sm:$0xff]
  %v196 = vld [vmem:[%s175 + $0xa0] sm:$0xff]
  %v197 = vld [vmem:[%s175 + $0xa8] sm:$0xff]
  %v198 = vld [vmem:[%s175 + $0xb0] sm:$0xff]
  %v199 = vld [vmem:[%s175 + $0xb8] sm:$0xff]
  %v200 = vld [vmem:[%s175 + $0xc0] sm:$0xff]
  %v201 = vld [vmem:[%s175 + $0xc8] sm:$0xff]
  %v202 = vld [vmem:[%s175 + $0xd0] sm:$0xff]
  %v203 = vld [vmem:[%s175 + $0xd8] sm:$0xff]
  %v204 = vld [vmem:[%s175 + $0xe0] sm:$0xff]
  %v205 = vld [vmem:[%s175 + $0xe8] sm:$0xff]
  %v206 = vld [vmem:[%s175 + $0xf0] sm:$0xff]
  %v207 = vld [vmem:[%s175 + $0xf8] sm:$0xff]
  %v208 = vld [vmem:[%s175 + $0x100] sm:$0xff]
  %v209 = vld [vmem:[%s175 + $0x108] sm:$0xff]
  %v210 = vld [vmem:[%s175 + $0x110] sm:$0xff]
  %v211 = vld [vmem:[%s175 + $0x118] sm:$0xff]
  %v212 = vld [vmem:[%s175 + $0x120] sm:$0xff]
  %v213 = vld [vmem:[%s175 + $0x128] sm:$0xff]
  %v214 = vld [vmem:[%s175 + $0x130] sm:$0xff]
  %v215 = vld [vmem:[%s175 + $0x138] sm:$0xff]
  %v216 = vld [vmem:[%s175 + $0x140] sm:$0xff]
  %v217 = vld [vmem:[%s175 + $0x148] sm:$0xff]
  %v218 = vld [vmem:[%s175 + $0x150] sm:$0xff]
  %v219 = vld [vmem:[%s175 + $0x158] sm:$0xff]
  %v220 = vld [vmem:[%s175 + $0x160] sm:$0xff]
  %v221 = vld [vmem:[%s175 + $0x168] sm:$0xff]
  %v222 = vld [vmem:[%s175 + $0x170] sm:$0xff]
  %v223 = vld [vmem:[%s175 + $0x178] sm:$0xff]
  %v224 = vld [vmem:[%s175 + $0x180] sm:$0xff]
  %v225 = vld [vmem:[%s175 + $0x188] sm:$0xff]
  %v226 = vld [vmem:[%s175 + $0x190] sm:$0xff]
  %v227 = vld [vmem:[%s175 + $0x198] sm:$0xff]
  %v228 = vld [vmem:[%s175 + $0x1a0] sm:$0xff]
  %v229 = vld [vmem:[%s175 + $0x1a8] sm:$0xff]
  %v230 = vld [vmem:[%s175 + $0x1b0] sm:$0xff]
  %v231 = vld [vmem:[%s175 + $0x1b8] sm:$0xff]
  %v232 = vld [vmem:[%s175 + $0x1c0] sm:$0xff]
  %v233 = vld [vmem:[%s175 + $0x1c8] sm:$0xff]
  %v234 = vld [vmem:[%s175 + $0x1d0] sm:$0xff]
  %v235 = vld [vmem:[%s175 + $0x1d8] sm:$0xff]
  %v236 = vld [vmem:[%s175 + $0x1e0] sm:$0xff]
  %v237 = vld [vmem:[%s175 + $0x1e8] sm:$0xff]
  %v238 = vld [vmem:[%s175 + $0x1f0] sm:$0xff]
  %v239 = vld [vmem:[%s175 + $0x1f8] sm:$0xff]
  %240 = vmatprep.subr.mxu0 %v207
  %241 = vmatpush1.msra.mxu0 %v206
  %242 = vmatprep.subr.mxu0 %v205
  %243 = vmatpush1.msra.mxu0 %v204
  %244 = vmatprep.subr.mxu0 %v203
  %245 = vmatpush1.msra.mxu0 %v202
  %246 = vmatprep.subr.mxu0 %v201
  %247 = vmatpush1.msra.mxu0 %v200
  %248 = vmatprep.subr.mxu0 %v199
  %249 = vmatpush1.msra.mxu0 %v198
  %250 = vmatprep.subr.mxu0 %v197
  %251 = vmatpush1.msra.mxu0 %v196
  %252 = vmatprep.subr.mxu0 %v195
  %253 = vmatpush1.msra.mxu0 %v194
  %254 = vmatprep.subr.mxu0 %v193
  %255 = vmatpush1.msra.mxu0 %v192
  %256 = vmatprep.subr.mxu0 %v191
  %257 = vmatpush1.msra.mxu0 %v190
  %258 = vmatprep.subr.mxu0 %v189
  %259 = vmatpush1.msra.mxu0 %v188
  %260 = vmatprep.subr.mxu0 %v187
  %261 = vmatpush1.msra.mxu0 %v186
  %262 = vmatprep.subr.mxu0 %v185
  %263 = vmatpush1.msra.mxu0 %v184
  %264 = vmatprep.subr.mxu0 %v183
  %265 = vmatpush1.msra.mxu0 %v182
  %266 = vmatprep.subr.mxu0 %v181
  %267 = vmatpush1.msra.mxu0 %v180
  %268 = vmatprep.subr.mxu0 %v179
  %269 = vmatpush1.msra.mxu0 %v178
  %270 = vmatprep.subr.mxu0 %v177
  %271 = vmatpush1.msra.mxu0 %v176
  %272 = vmatprep.subr.mxu0 %v239
  %273 = vmatpush2.msra.mxu0 %v238
  %274 = vmatprep.subr.mxu0 %v237
  %275 = vmatpush2.msra.mxu0 %v236
  %276 = vmatprep.subr.mxu0 %v235
  %277 = vmatpush2.msra.mxu0 %v234
  %278 = vmatprep.subr.mxu0 %v233
  %279 = vmatpush2.msra.mxu0 %v232
  %280 = vmatprep.subr.mxu0 %v231
  %281 = vmatpush2.msra.mxu0 %v230
  %282 = vmatprep.subr.mxu0 %v229
  %283 = vmatpush2.msra.mxu0 %v228
  %284 = vmatprep.subr.mxu0 %v227
  %285 = vmatpush2.msra.mxu0 %v226
  %286 = vmatprep.subr.mxu0 %v225
  %287 = vmatpush2.msra.mxu0 %v224
  %288 = vmatprep.subr.mxu0 %v223
  %289 = vmatpush2.msra.mxu0 %v222
  %290 = vmatprep.subr.mxu0 %v221
  %291 = vmatpush2.msra.mxu0 %v220
  %292 = vmatprep.subr.mxu0 %v219
  %293 = vmatpush2.msra.mxu0 %v218
  %294 = vmatprep.subr.mxu0 %v217
  %295 = vmatpush2.msra.mxu0 %v216
  %296 = vmatprep.subr.mxu0 %v215
  %297 = vmatpush2.msra.mxu0 %v214
  %298 = vmatprep.subr.mxu0 %v213
  %299 = vmatpush2.msra.mxu0 %v212
  %300 = vmatprep.subr.mxu0 %v211
  %301 = vmatpush2.msra.mxu0 %v210
  %302 = vmatprep.subr.mxu0 %v209
  %303 = vmatpush2.msra.mxu0 %v208
  %304 = vmatprep.mubr.f32.mxu0 %v15
  %305 = vmatmul.mubr.f32.gmra.mxu0 %v14
  %v306 = vpop.f32.mrf.mxu0
  %v307 = vadd.f32 0.0, %v306
  %v308 = vpop.f32.mrf.mxu0
  %v309 = vadd.f32 0.0, %v308
  %310 = vmatprep.mubr.f32.mxu0 %v17
  %311 = vmatmul.mubr.f32.gmra.mxu0 %v16
  %v312 = vpop.f32.mrf.mxu0
  %v313 = vadd.f32 0.0, %v312
  %v314 = vpop.f32.mrf.mxu0
  %v315 = vadd.f32 0.0, %v314
  %316 = vmatprep.mubr.f32.mxu0 %v19
  %317 = vmatmul.mubr.f32.gmra.mxu0 %v18
  %v318 = vpop.f32.mrf.mxu0
  %v319 = vadd.f32 0.0, %v318
  %v320 = vpop.f32.mrf.mxu0
  %v321 = vadd.f32 0.0, %v320
  %322 = vmatprep.mubr.f32.mxu0 %v21
  %323 = vmatmul.mubr.f32.gmra.mxu0 %v20
  %v324 = vpop.f32.mrf.mxu0
  %v325 = vadd.f32 0.0, %v324
  %v326 = vpop.f32.mrf.mxu0
  %v327 = vadd.f32 0.0, %v326
  %328 = vdwg.mxu0
  %s329 = scalar_lea.vmem %s0, 1024
  %v330 = vld [vmem:[%s329] sm:$0xff]
  %v331 = vld [vmem:[%s329 + $0x8] sm:$0xff]
  %v332 = vld [vmem:[%s329 + $0x10] sm:$0xff]
  %v333 = vld [vmem:[%s329 + $0x18] sm:$0xff]
  %v334 = vld [vmem:[%s329 + $0x20] sm:$0xff]
  %v335 = vld [vmem:[%s329 + $0x28] sm:$0xff]
  %v336 = vld [vmem:[%s329 + $0x30] sm:$0xff]
  %v337 = vld [vmem:[%s329 + $0x38] sm:$0xff]
  %v338 = vld [vmem:[%s329 + $0x40] sm:$0xff]
  %v339 = vld [vmem:[%s329 + $0x48] sm:$0xff]
  %v340 = vld [vmem:[%s329 + $0x50] sm:$0xff]
  %v341 = vld [vmem:[%s329 + $0x58] sm:$0xff]
  %v342 = vld [vmem:[%s329 + $0x60] sm:$0xff]
  %v343 = vld [vmem:[%s329 + $0x68] sm:$0xff]
  %v344 = vld [vmem:[%s329 + $0x70] sm:$0xff]
  %v345 = vld [vmem:[%s329 + $0x78] sm:$0xff]
  %v346 = vld [vmem:[%s329 + $0x80] sm:$0xff]
  %v347 = vld [vmem:[%s329 + $0x88] sm:$0xff]
  %v348 = vld [vmem:[%s329 + $0x90] sm:$0xff]
  %v349 = vld [vmem:[%s329 + $0x98] sm:$0xff]
  %v350 = vld [vmem:[%s329 + $0xa0] sm:$0xff]
  %v351 = vld [vmem:[%s329 + $0xa8] sm:$0xff]
  %v352 = vld [vmem:[%s329 + $0xb0] sm:$0xff]
  %v353 = vld [vmem:[%s329 + $0xb8] sm:$0xff]
  %v354 = vld [vmem:[%s329 + $0xc0] sm:$0xff]
  %v355 = vld [vmem:[%s329 + $0xc8] sm:$0xff]
  %v356 = vld [vmem:[%s329 + $0xd0] sm:$0xff]
  %v357 = vld [vmem:[%s329 + $0xd8] sm:$0xff]
  %v358 = vld [vmem:[%s329 + $0xe0] sm:$0xff]
  %v359 = vld [vmem:[%s329 + $0xe8] sm:$0xff]
  %v360 = vld [vmem:[%s329 + $0xf0] sm:$0xff]
  %v361 = vld [vmem:[%s329 + $0xf8] sm:$0xff]
  %v362 = vld [vmem:[%s329 + $0x100] sm:$0xff]
  %v363 = vld [vmem:[%s329 + $0x108] sm:$0xff]
  %v364 = vld [vmem:[%s329 + $0x110] sm:$0xff]
  %v365 = vld [vmem:[%s329 + $0x118] sm:$0xff]
  %v366 = vld [vmem:[%s329 + $0x120] sm:$0xff]
  %v367 = vld [vmem:[%s329 + $0x128] sm:$0xff]
  %v368 = vld [vmem:[%s329 + $0x130] sm:$0xff]
  %v369 = vld [vmem:[%s329 + $0x138] sm:$0xff]
  %v370 = vld [vmem:[%s329 + $0x140] sm:$0xff]
  %v371 = vld [vmem:[%s329 + $0x148] sm:$0xff]
  %v372 = vld [vmem:[%s329 + $0x150] sm:$0xff]
  %v373 = vld [vmem:[%s329 + $0x158] sm:$0xff]
  %v374 = vld [vmem:[%s329 + $0x160] sm:$0xff]
  %v375 = vld [vmem:[%s329 + $0x168] sm:$0xff]
  %v376 = vld [vmem:[%s329 + $0x170] sm:$0xff]
  %v377 = vld [vmem:[%s329 + $0x178] sm:$0xff]
  %v378 = vld [vmem:[%s329 + $0x180] sm:$0xff]
  %v379 = vld [vmem:[%s329 + $0x188] sm:$0xff]
  %v380 = vld [vmem:[%s329 + $0x190] sm:$0xff]
  %v381 = vld [vmem:[%s329 + $0x198] sm:$0xff]
  %v382 = vld [vmem:[%s329 + $0x1a0] sm:$0xff]
  %v383 = vld [vmem:[%s329 + $0x1a8] sm:$0xff]
  %v384 = vld [vmem:[%s329 + $0x1b0] sm:$0xff]
  %v385 = vld [vmem:[%s329 + $0x1b8] sm:$0xff]
  %v386 = vld [vmem:[%s329 + $0x1c0] sm:$0xff]
  %v387 = vld [vmem:[%s329 + $0x1c8] sm:$0xff]
  %v388 = vld [vmem:[%s329 + $0x1d0] sm:$0xff]
  %v389 = vld [vmem:[%s329 + $0x1d8] sm:$0xff]
  %v390 = vld [vmem:[%s329 + $0x1e0] sm:$0xff]
  %v391 = vld [vmem:[%s329 + $0x1e8] sm:$0xff]
  %v392 = vld [vmem:[%s329 + $0x1f0] sm:$0xff]
  %v393 = vld [vmem:[%s329 + $0x1f8] sm:$0xff]
  %394 = vmatprep.subr.mxu0 %v361
  %395 = vmatpush1.msra.mxu0 %v360
  %396 = vmatprep.subr.mxu0 %v359
  %397 = vmatpush1.msra.mxu0 %v358
  %398 = vmatprep.subr.mxu0 %v357
  %399 = vmatpush1.msra.mxu0 %v356
  %400 = vmatprep.subr.mxu0 %v355
  %401 = vmatpush1.msra.mxu0 %v354
  %402 = vmatprep.subr.mxu0 %v353
  %403 = vmatpush1.msra.mxu0 %v352
  %404 = vmatprep.subr.mxu0 %v351
  %405 = vmatpush1.msra.mxu0 %v350
  %406 = vmatprep.subr.mxu0 %v349
  %407 = vmatpush1.msra.mxu0 %v348
  %408 = vmatprep.subr.mxu0 %v347
  %409 = vmatpush1.msra.mxu0 %v346
  %410 = vmatprep.subr.mxu0 %v345
  %411 = vmatpush1.msra.mxu0 %v344
  %412 = vmatprep.subr.mxu0 %v343
  %413 = vmatpush1.msra.mxu0 %v342
  %414 = vmatprep.subr.mxu0 %v341
  %415 = vmatpush1.msra.mxu0 %v340
  %416 = vmatprep.subr.mxu0 %v339
  %417 = vmatpush1.msra.mxu0 %v338
  %418 = vmatprep.subr.mxu0 %v337
  %419 = vmatpush1.msra.mxu0 %v336
  %420 = vmatprep.subr.mxu0 %v335
  %421 = vmatpush1.msra.mxu0 %v334
  %422 = vmatprep.subr.mxu0 %v333
  %423 = vmatpush1.msra.mxu0 %v332
  %424 = vmatprep.subr.mxu0 %v331
  %425 = vmatpush1.msra.mxu0 %v330
  %426 = vmatprep.subr.mxu0 %v393
  %427 = vmatpush2.msra.mxu0 %v392
  %428 = vmatprep.subr.mxu0 %v391
  %429 = vmatpush2.msra.mxu0 %v390
  %430 = vmatprep.subr.mxu0 %v389
  %431 = vmatpush2.msra.mxu0 %v388
  %432 = vmatprep.subr.mxu0 %v387
  %433 = vmatpush2.msra.mxu0 %v386
  %434 = vmatprep.subr.mxu0 %v385
  %435 = vmatpush2.msra.mxu0 %v384
  %436 = vmatprep.subr.mxu0 %v383
  %437 = vmatpush2.msra.mxu0 %v382
  %438 = vmatprep.subr.mxu0 %v381
  %439 = vmatpush2.msra.mxu0 %v380
  %440 = vmatprep.subr.mxu0 %v379
  %441 = vmatpush2.msra.mxu0 %v378
  %442 = vmatprep.subr.mxu0 %v377
  %443 = vmatpush2.msra.mxu0 %v376
  %444 = vmatprep.subr.mxu0 %v375
  %445 = vmatpush2.msra.mxu0 %v374
  %446 = vmatprep.subr.mxu0 %v373
  %447 = vmatpush2.msra.mxu0 %v372
  %448 = vmatprep.subr.mxu0 %v371
  %449 = vmatpush2.msra.mxu0 %v370
  %450 = vmatprep.subr.mxu0 %v369
  %451 = vmatpush2.msra.mxu0 %v368
  %452 = vmatprep.subr.mxu0 %v367
  %453 = vmatpush2.msra.mxu0 %v366
  %454 = vmatprep.subr.mxu0 %v365
  %455 = vmatpush2.msra.mxu0 %v364
  %456 = vmatprep.subr.mxu0 %v363
  %457 = vmatpush2.msra.mxu0 %v362
  %458 = vmatprep.mubr.f32.mxu0 %v15
  %459 = vmatmul.mubr.f32.gmra.mxu0 %v14
  %v460 = vpop.f32.mrf.mxu0
  %v461 = vadd.f32 0.0, %v460
  %v462 = vpop.f32.mrf.mxu0
  %v463 = vadd.f32 0.0, %v462
  %464 = vmatprep.mubr.f32.mxu0 %v17
  %465 = vmatmul.mubr.f32.gmra.mxu0 %v16
  %v466 = vpop.f32.mrf.mxu0
  %v467 = vadd.f32 0.0, %v466
  %v468 = vpop.f32.mrf.mxu0
  %v469 = vadd.f32 0.0, %v468
  %470 = vmatprep.mubr.f32.mxu0 %v19
  %471 = vmatmul.mubr.f32.gmra.mxu0 %v18
  %v472 = vpop.f32.mrf.mxu0
  %v473 = vadd.f32 0.0, %v472
  %v474 = vpop.f32.mrf.mxu0
  %v475 = vadd.f32 0.0, %v474
  %476 = vmatprep.mubr.f32.mxu0 %v21
  %477 = vmatmul.mubr.f32.gmra.mxu0 %v20
  %v478 = vpop.f32.mrf.mxu0
  %v479 = vadd.f32 0.0, %v478
  %v480 = vpop.f32.mrf.mxu0
  %v481 = vadd.f32 0.0, %v480
  %482 = vdwg.mxu0
  %s483 = scalar_lea.vmem %s0, 1536
  %v484 = vld [vmem:[%s483] sm:$0xff]
  %v485 = vld [vmem:[%s483 + $0x8] sm:$0xff]
  %v486 = vld [vmem:[%s483 + $0x10] sm:$0xff]
  %v487 = vld [vmem:[%s483 + $0x18] sm:$0xff]
  %v488 = vld [vmem:[%s483 + $0x20] sm:$0xff]
  %v489 = vld [vmem:[%s483 + $0x28] sm:$0xff]
  %v490 = vld [vmem:[%s483 + $0x30] sm:$0xff]
  %v491 = vld [vmem:[%s483 + $0x38] sm:$0xff]
  %v492 = vld [vmem:[%s483 + $0x40] sm:$0xff]
  %v493 = vld [vmem:[%s483 + $0x48] sm:$0xff]
  %v494 = vld [vmem:[%s483 + $0x50] sm:$0xff]
  %v495 = vld [vmem:[%s483 + $0x58] sm:$0xff]
  %v496 = vld [vmem:[%s483 + $0x60] sm:$0xff]
  %v497 = vld [vmem:[%s483 + $0x68] sm:$0xff]
  %v498 = vld [vmem:[%s483 + $0x70] sm:$0xff]
  %v499 = vld [vmem:[%s483 + $0x78] sm:$0xff]
  %v500 = vld [vmem:[%s483 + $0x80] sm:$0xff]
  %v501 = vld [vmem:[%s483 + $0x88] sm:$0xff]
  %v502 = vld [vmem:[%s483 + $0x90] sm:$0xff]
  %v503 = vld [vmem:[%s483 + $0x98] sm:$0xff]
  %v504 = vld [vmem:[%s483 + $0xa0] sm:$0xff]
  %v505 = vld [vmem:[%s483 + $0xa8] sm:$0xff]
  %v506 = vld [vmem:[%s483 + $0xb0] sm:$0xff]
  %v507 = vld [vmem:[%s483 + $0xb8] sm:$0xff]
  %v508 = vld [vmem:[%s483 + $0xc0] sm:$0xff]
  %v509 = vld [vmem:[%s483 + $0xc8] sm:$0xff]
  %v510 = vld [vmem:[%s483 + $0xd0] sm:$0xff]
  %v511 = vld [vmem:[%s483 + $0xd8] sm:$0xff]
  %v512 = vld [vmem:[%s483 + $0xe0] sm:$0xff]
  %v513 = vld [vmem:[%s483 + $0xe8] sm:$0xff]
  %v514 = vld [vmem:[%s483 + $0xf0] sm:$0xff]
  %v515 = vld [vmem:[%s483 + $0xf8] sm:$0xff]
  %v516 = vld [vmem:[%s483 + $0x100] sm:$0xff]
  %v517 = vld [vmem:[%s483 + $0x108] sm:$0xff]
  %v518 = vld [vmem:[%s483 + $0x110] sm:$0xff]
  %v519 = vld [vmem:[%s483 + $0x118] sm:$0xff]
  %v520 = vld [vmem:[%s483 + $0x120] sm:$0xff]
  %v521 = vld [vmem:[%s483 + $0x128] sm:$0xff]
  %v522 = vld [vmem:[%s483 + $0x130] sm:$0xff]
  %v523 = vld [vmem:[%s483 + $0x138] sm:$0xff]
  %v524 = vld [vmem:[%s483 + $0x140] sm:$0xff]
  %v525 = vld [vmem:[%s483 + $0x148] sm:$0xff]
  %v526 = vld [vmem:[%s483 + $0x150] sm:$0xff]
  %v527 = vld [vmem:[%s483 + $0x158] sm:$0xff]
  %v528 = vld [vmem:[%s483 + $0x160] sm:$0xff]
  %v529 = vld [vmem:[%s483 + $0x168] sm:$0xff]
  %v530 = vld [vmem:[%s483 + $0x170] sm:$0xff]
  %v531 = vld [vmem:[%s483 + $0x178] sm:$0xff]
  %v532 = vld [vmem:[%s483 + $0x180] sm:$0xff]
  %v533 = vld [vmem:[%s483 + $0x188] sm:$0xff]
  %v534 = vld [vmem:[%s483 + $0x190] sm:$0xff]
  %v535 = vld [vmem:[%s483 + $0x198] sm:$0xff]
  %v536 = vld [vmem:[%s483 + $0x1a0] sm:$0xff]
  %v537 = vld [vmem:[%s483 + $0x1a8] sm:$0xff]
  %v538 = vld [vmem:[%s483 + $0x1b0] sm:$0xff]
  %v539 = vld [vmem:[%s483 + $0x1b8] sm:$0xff]
  %v540 = vld [vmem:[%s483 + $0x1c0] sm:$0xff]
  %v541 = vld [vmem:[%s483 + $0x1c8] sm:$0xff]
  %v542 = vld [vmem:[%s483 + $0x1d0] sm:$0xff]
  %v543 = vld [vmem:[%s483 + $0x1d8] sm:$0xff]
  %v544 = vld [vmem:[%s483 + $0x1e0] sm:$0xff]
  %v545 = vld [vmem:[%s483 + $0x1e8] sm:$0xff]
  %v546 = vld [vmem:[%s483 + $0x1f0] sm:$0xff]
  %v547 = vld [vmem:[%s483 + $0x1f8] sm:$0xff]
  %548 = vmatprep.subr.mxu0 %v515
  %549 = vmatpush1.msra.mxu0 %v514
  %550 = vmatprep.subr.mxu0 %v513
  %551 = vmatpush1.msra.mxu0 %v512
  %552 = vmatprep.subr.mxu0 %v511
  %553 = vmatpush1.msra.mxu0 %v510
  %554 = vmatprep.subr.mxu0 %v509
  %555 = vmatpush1.msra.mxu0 %v508
  %556 = vmatprep.subr.mxu0 %v507
  %557 = vmatpush1.msra.mxu0 %v506
  %558 = vmatprep.subr.mxu0 %v505
  %559 = vmatpush1.msra.mxu0 %v504
  %560 = vmatprep.subr.mxu0 %v503
  %561 = vmatpush1.msra.mxu0 %v502
  %562 = vmatprep.subr.mxu0 %v501
  %563 = vmatpush1.msra.mxu0 %v500
  %564 = vmatprep.subr.mxu0 %v499
  %565 = vmatpush1.msra.mxu0 %v498
  %566 = vmatprep.subr.mxu0 %v497
  %567 = vmatpush1.msra.mxu0 %v496
  %568 = vmatprep.subr.mxu0 %v495
  %569 = vmatpush1.msra.mxu0 %v494
  %570 = vmatprep.subr.mxu0 %v493
  %571 = vmatpush1.msra.mxu0 %v492
  %572 = vmatprep.subr.mxu0 %v491
  %573 = vmatpush1.msra.mxu0 %v490
  %574 = vmatprep.subr.mxu0 %v489
  %575 = vmatpush1.msra.mxu0 %v488
  %576 = vmatprep.subr.mxu0 %v487
  %577 = vmatpush1.msra.mxu0 %v486
  %578 = vmatprep.subr.mxu0 %v485
  %579 = vmatpush1.msra.mxu0 %v484
  %580 = vmatprep.subr.mxu0 %v547
  %581 = vmatpush2.msra.mxu0 %v546
  %582 = vmatprep.subr.mxu0 %v545
  %583 = vmatpush2.msra.mxu0 %v544
  %584 = vmatprep.subr.mxu0 %v543
  %585 = vmatpush2.msra.mxu0 %v542
  %586 = vmatprep.subr.mxu0 %v541
  %587 = vmatpush2.msra.mxu0 %v540
  %588 = vmatprep.subr.mxu0 %v539
  %589 = vmatpush2.msra.mxu0 %v538
  %590 = vmatprep.subr.mxu0 %v537
  %591 = vmatpush2.msra.mxu0 %v536
  %592 = vmatprep.subr.mxu0 %v535
  %593 = vmatpush2.msra.mxu0 %v534
  %594 = vmatprep.subr.mxu0 %v533
  %595 = vmatpush2.msra.mxu0 %v532
  %596 = vmatprep.subr.mxu0 %v531
  %597 = vmatpush2.msra.mxu0 %v530
  %598 = vmatprep.subr.mxu0 %v529
  %599 = vmatpush2.msra.mxu0 %v528
  %600 = vmatprep.subr.mxu0 %v527
  %601 = vmatpush2.msra.mxu0 %v526
  %602 = vmatprep.subr.mxu0 %v525
  %603 = vmatpush2.msra.mxu0 %v524
  %604 = vmatprep.subr.mxu0 %v523
  %605 = vmatpush2.msra.mxu0 %v522
  %606 = vmatprep.subr.mxu0 %v521
  %607 = vmatpush2.msra.mxu0 %v520
  %608 = vmatprep.subr.mxu0 %v519
  %609 = vmatpush2.msra.mxu0 %v518
  %610 = vmatprep.subr.mxu0 %v517
  %611 = vmatpush2.msra.mxu0 %v516
  %612 = vmatprep.mubr.f32.mxu0 %v15
  %613 = vmatmul.mubr.f32.gmra.mxu0 %v14
  %v614 = vpop.f32.mrf.mxu0
  %v615 = vadd.f32 0.0, %v614
  %v616 = vpop.f32.mrf.mxu0
  %v617 = vadd.f32 0.0, %v616
  %618 = vmatprep.mubr.f32.mxu0 %v17
  %619 = vmatmul.mubr.f32.gmra.mxu0 %v16
  %v620 = vpop.f32.mrf.mxu0
  %v621 = vadd.f32 0.0, %v620
  %v622 = vpop.f32.mrf.mxu0
  %v623 = vadd.f32 0.0, %v622
  %624 = vmatprep.mubr.f32.mxu0 %v19
  %625 = vmatmul.mubr.f32.gmra.mxu0 %v18
  %v626 = vpop.f32.mrf.mxu0
  %v627 = vadd.f32 0.0, %v626
  %v628 = vpop.f32.mrf.mxu0
  %v629 = vadd.f32 0.0, %v628
  %630 = vmatprep.mubr.f32.mxu0 %v21
  %631 = vmatmul.mubr.f32.gmra.mxu0 %v20
  %v632 = vpop.f32.mrf.mxu0
  %v633 = vadd.f32 0.0, %v632
  %v634 = vpop.f32.mrf.mxu0
  %v635 = vadd.f32 0.0, %v634
  %636 = vdwg.mxu0
  %v637 = vmax.f32 %v153, %v307
  %v638 = vmax.f32 %v155, %v309
  %v639 = vmax.f32 %v159, %v313
  %v640 = vmax.f32 %v161, %v315
  %v641 = vmax.f32 %v165, %v319
  %v642 = vmax.f32 %v167, %v321
  %v643 = vmax.f32 %v171, %v325
  %v644 = vmax.f32 %v173, %v327
  %v645 = vmax.f32 %v461, %v615
  %v646 = vmax.f32 %v463, %v617
  %v647 = vmax.f32 %v467, %v621
  %v648 = vmax.f32 %v469, %v623
  %v649 = vmax.f32 %v473, %v627
  %v650 = vmax.f32 %v475, %v629
  %v651 = vmax.f32 %v479, %v633
  %v652 = vmax.f32 %v481, %v635
  %v653 = vmax.f32 %v637, %v645
  %v654 = vmax.f32 %v638, %v646
  %v655 = vmax.f32 %v639, %v647
  %v656 = vmax.f32 %v640, %v648
  %v657 = vmax.f32 %v641, %v649
  %v658 = vmax.f32 %v642, %v650
  %v659 = vmax.f32 %v643, %v651
  %v660 = vmax.f32 %v644, %v652
  %v661 = vld [vmem:[%s2] sm:$0xff]
  %v662 = vld [vmem:[%s2 + $0x8] sm:$0xff]
  %v663 = vld [vmem:[%s2 + $0x10] sm:$0xff]
  %v664 = vld [vmem:[%s2 + $0x18] sm:$0xff]
  %666 = vset.pattern.permute.xlu0 0
  %667 = vperm.xlu0 %666, %v661
  %v668 = vpop.permute.xlu0 %667
  %671 = vset.pattern.permute.xlu0 0
  %672 = vperm.xlu0 %671, %v662
  %v673 = vpop.permute.xlu0 %672
  %676 = vset.pattern.permute.xlu0 0
  %677 = vperm.xlu0 %676, %v663
  %v678 = vpop.permute.xlu0 %677
  %681 = vset.pattern.permute.xlu0 0
  %682 = vperm.xlu0 %681, %v664
  %v683 = vpop.permute.xlu0 %682
  %v685 = vadd.f32 %v653, %v668
  %v686 = vadd.f32 %v654, %v668
  %v687 = vadd.f32 %v655, %v673
  %v688 = vadd.f32 %v656, %v673
  %v689 = vadd.f32 %v657, %v678
  %v690 = vadd.f32 %v658, %v678
  %v691 = vadd.f32 %v659, %v683
  %v692 = vadd.f32 %v660, %v683
  %v693 = vmax.f32 %v685, 0.0
  %v694 = vmax.f32 %v686, 0.0
  %v695 = vmax.f32 %v687, 0.0
  %v696 = vmax.f32 %v688, 0.0
  %v697 = vmax.f32 %v689, 0.0
  %v698 = vmax.f32 %v690, 0.0
  %v699 = vmax.f32 %v691, 0.0
  %v700 = vmax.f32 %v692, 0.0
  %701 = vst [vmem:[%s3] sm:$0xff] %v693
  %702 = vst [vmem:[%s3 + $0x8] sm:$0xff] %v694
  %703 = vst [vmem:[%s3 + $0x10] sm:$0xff] %v695
  %704 = vst [vmem:[%s3 + $0x18] sm:$0xff] %v696
  %705 = vst [vmem:[%s3 + $0x20] sm:$0xff] %v697
  %706 = vst [vmem:[%s3 + $0x28] sm:$0xff] %v698
  %707 = vst [vmem:[%s3 + $0x30] sm:$0xff] %v699
  %708 = vst [vmem:[%s3 + $0x38] sm:$0xff] %v700
  // Predicated region
  $region14: #{dqn_forward.5} parent=0 // pred_check
    _
  $region15: #{dqn_forward.5} parent=0 // pred_check_branch
    %710 = sbr.rel (0) target = $region17
  $region16: #{dqn_forward.5} parent=0 // pred_region
    _
  $region17: #{dqn_forward.5} parent=0 // pred_fallthru
    _
  // Predicated region
  $region18: #{dqn_forward.5} parent=0 // pred_check
    _
  $region19: #{dqn_forward.5} parent=0 // pred_check_branch
    %712 = sbr.rel (0) target = $region21
  $region20: #{dqn_forward.5} parent=0 // pred_region
    _
  $region21: #{dqn_forward.5} parent=0 // pred_fallthru
    _

// kernel: dqn_forward.6
$region0: #{dqn_forward.6}
  #allocation0 [shape = 'u32[]', space=smem, size = 0x4, offset = 0x4, fixed_abs, tag = 'smem constant byte address 0x4 - core index']
  #allocation1 [shape = 'u32[144,128]{1,0:T(1,128)}', space=vmem, size = 0x12000, scoped, tag = 'internal scratch']
  %s0 = inlined_call_operand.vmem [shape: f32[4,288,128], index: 0, kind: input, shape index: {}]
  %s1 = inlined_call_operand.vmem [shape: f32[16,288], index: 1, kind: input, shape index: {}]
  %s2 = inlined_call_operand.vmem [shape: f32[16,1], index: 2, kind: input, shape index: {}]
  %s3 = inlined_call_operand.vmem [shape: f32[16,128], index: 3, kind: output, shape index: {}]
  %s4 = sld [smem:[#allocation0]]
  $region22: #{dqn_forward.6} parent=0
    _
  %s6 = ssub.s32 1, %s4
  %s7 = scalar_select 0, %s6, %s4
  // Predicated region
  $region2: #{dqn_forward.6} parent=0 // pred_check
    _
  $region3: #{dqn_forward.6} parent=0 // pred_check_branch
    %9 = sbr.rel (0) target = $region5
  $region4: #{dqn_forward.6} parent=0 // pred_region
    _
  $region5: #{dqn_forward.6} parent=0 // pred_fallthru
    _
  // Predicated region
  $region6: #{dqn_forward.6} parent=0 // pred_check
    _
  $region7: #{dqn_forward.6} parent=0 // pred_check_branch
    %11 = sbr.rel (0) target = $region9
  $region8: #{dqn_forward.6} parent=0 // pred_region
    _
  $region9: #{dqn_forward.6} parent=0 // pred_fallthru
    _
  // Predicated region
  $region10: #{dqn_forward.6} parent=0 // pred_check
    _
  $region11: #{dqn_forward.6} parent=0 // pred_check_branch
    %13 = sbr.rel (0) target = $region13
  $region12: #{dqn_forward.6} parent=0 // pred_region
    _
  $region13: #{dqn_forward.6} parent=0 // pred_fallthru
    _
  %v14 = vld [vmem:[%s1] sm:$0xff]
  %v15 = vld [vmem:[%s1 + $0x8] sm:$0xff]
  %v16 = vld [vmem:[%s1 + $0x10] sm:$0xff]
  %v17 = vld [vmem:[%s1 + $0x18] sm:$0xff]
  %v18 = vld [vmem:[%s1 + $0x20] sm:$0xff]
  %v19 = vld [vmem:[%s1 + $0x28] sm:$0xff]
  %v20 = vld [vmem:[%s0] sm:$0xff]
  %v21 = vld [vmem:[%s0 + $0x8] sm:$0xff]
  %v22 = vld [vmem:[%s0 + $0x10] sm:$0xff]
  %v23 = vld [vmem:[%s0 + $0x18] sm:$0xff]
  %v24 = vld [vmem:[%s0 + $0x20] sm:$0xff]
  %v25 = vld [vmem:[%s0 + $0x28] sm:$0xff]
  %v26 = vld [vmem:[%s0 + $0x30] sm:$0xff]
  %v27 = vld [vmem:[%s0 + $0x38] sm:$0xff]
  %v28 = vld [vmem:[%s0 + $0x40] sm:$0xff]
  %v29 = vld [vmem:[%s0 + $0x48] sm:$0xff]
  %v30 = vld [vmem:[%s0 + $0x50] sm:$0xff]
  %v31 = vld [vmem:[%s0 + $0x58] sm:$0xff]
  %v32 = vld [vmem:[%s0 + $0x60] sm:$0xff]
  %v33 = vld [vmem:[%s0 + $0x68] sm:$0xff]
  %v34 = vld [vmem:[%s0 + $0x70] sm:$0xff]
  %v35 = vld [vmem:[%s0 + $0x78] sm:$0xff]
  %v36 = vld [vmem:[%s0 + $0x80] sm:$0xff]
  %v37 = vld [vmem:[%s0 + $0x88] sm:$0xff]
  %v38 = vld [vmem:[%s0 + $0x90] sm:$0xff]
  %v39 = vld [vmem:[%s0 + $0x98] sm:$0xff]
  %v40 = vld [vmem:[%s0 + $0xa0] sm:$0xff]
  %v41 = vld [vmem:[%s0 + $0xa8] sm:$0xff]
  %v42 = vld [vmem:[%s0 + $0xb0] sm:$0xff]
  %v43 = vld [vmem:[%s0 + $0xb8] sm:$0xff]
  %v44 = vld [vmem:[%s0 + $0xc0] sm:$0xff]
  %v45 = vld [vmem:[%s0 + $0xc8] sm:$0xff]
  %v46 = vld [vmem:[%s0 + $0xd0] sm:$0xff]
  %v47 = vld [vmem:[%s0 + $0xd8] sm:$0xff]
  %v48 = vld [vmem:[%s0 + $0xe0] sm:$0xff]
  %v49 = vld [vmem:[%s0 + $0xe8] sm:$0xff]
  %v50 = vld [vmem:[%s0 + $0xf0] sm:$0xff]
  %v51 = vld [vmem:[%s0 + $0xf8] sm:$0xff]
  %v52 = vld [vmem:[%s0 + $0x100] sm:$0xff]
  %v53 = vld [vmem:[%s0 + $0x108] sm:$0xff]
  %v54 = vld [vmem:[%s0 + $0x110] sm:$0xff]
  %v55 = vld [vmem:[%s0 + $0x118] sm:$0xff]
  %vm56 = vcmask 261120
  %v58 = vsel %vm56, %v16, 0
  %v61 = vsel %vm56, %v19, 0
  %63 = vmatprep.subr.mxu0 0.0
  %64 = vmatpush1.msra.mxu0 %v35
  %65 = vmatprep.subr.mxu0 0.0
  %66 = vmatpush1.msra.mxu0 %v34
  %67 = vmatprep.subr.mxu0 0.0
  %68 = vmatpush1.msra.mxu0 %v33
  %69 = vmatprep.subr.mxu0 0.0
  %70 = vmatpush1.msra.mxu0 %v32
  %71 = vmatprep.subr.mxu0 0.0
  %72 = vmatpush1.msra.mxu0 %v31
  %73 = vmatprep.subr.mxu0 0.0
  %74 = vmatpush1.msra.mxu0 %v30
  %75 = vmatprep.subr.mxu0 0.0
  %76 = vmatpush1.msra.mxu0 %v29
  %77 = vmatprep.subr.mxu0 0.0
  %78 = vmatpush1.msra.mxu0 %v28
  %79 = vmatprep.subr.mxu0 0.0
  %80 = vmatpush1.msra.mxu0 %v27
  %81 = vmatprep.subr.mxu0 0.0
  %82 = vmatpush1.msra.mxu0 %v26
  %83 = vmatprep.subr.mxu0 0.0
  %84 = vmatpush1.msra.mxu0 %v25
  %85 = vmatprep.subr.mxu0 0.0
  %86 = vmatpush1.msra.mxu0 %v24
  %87 = vmatprep.subr.mxu0 0.0
  %88 = vmatpush1.msra.mxu0 %v23
  %89 = vmatprep.subr.mxu0 0.0
  %90 = vmatpush1.msra.mxu0 %v22
  %91 = vmatprep.subr.mxu0 0.0
  %92 = vmatpush1.msra.mxu0 %v21
  %93 = vmatprep.subr.mxu0 0.0
  %94 = vmatpush1.msra.mxu0 %v20
  %95 = vmatprep.subr.mxu0 0.0
  %96 = vmatpush2.msra.mxu0 %v51
  %97 = vmatprep.subr.mxu0 0.0
  %98 = vmatpush2.msra.mxu0 %v50
  %99 = vmatprep.subr.mxu0 0.0
  %100 = vmatpush2.msra.mxu0 %v49
  %101 = vmatprep.subr.mxu0 0.0
  %102 = vmatpush2.msra.mxu0 %v48
  %103 = vmatprep.subr.mxu0 0.0
  %104 = vmatpush2.msra.mxu0 %v47
  %105 = vmatprep.subr.mxu0 0.0
  %106 = vmatpush2.msra.mxu0 %v46
  %107 = vmatprep.subr.mxu0 0.0
  %108 = vmatpush2.msra.mxu0 %v45
  %109 = vmatprep.subr.mxu0 0.0
  %110 = vmatpush2.msra.mxu0 %v44
  %111 = vmatprep.subr.mxu0 0.0
  %112 = vmatpush2.msra.mxu0 %v43
  %113 = vmatprep.subr.mxu0 0.0
  %114 = vmatpush2.msra.mxu0 %v42
  %115 = vmatprep.subr.mxu0 0.0
  %116 = vmatpush2.msra.mxu0 %v41
  %117 = vmatprep.subr.mxu0 0.0
  %118 = vmatpush2.msra.mxu0 %v40
  %119 = vmatprep.subr.mxu0 0.0
  %120 = vmatpush2.msra.mxu0 %v39
  %121 = vmatprep.subr.mxu0 0.0
  %122 = vmatpush2.msra.mxu0 %v38
  %123 = vmatprep.subr.mxu0 0.0
  %124 = vmatpush2.msra.mxu0 %v37
  %125 = vmatprep.subr.mxu0 0.0
  %126 = vmatpush2.msra.mxu0 %v36
  %127 = vmatprep.mubr.f32.mxu0 %v15
  %128 = vmatmul.mubr.f32.gmra.mxu0 %v14
  %v129 = vpop.f32.mrf.mxu0
  %v130 = vadd.f32 0.0, %v129
  %v131 = vpop.f32.mrf.mxu0
  %132 = vmatprep.mubr.f32.mxu0 %v18
  %133 = vmatmul.mubr.f32.gmra.mxu0 %v17
  %v134 = vpop.f32.mrf.mxu0
  %v135 = vadd.f32 0.0, %v134
  %v136 = vpop.f32.mrf.mxu0
  %137 = vdwg.mxu0
  %138 = vmatprep.subr.mxu0 0.0
  %139 = vmatpush1.msra.mxu0 0.0
  %140 = vmatprep.subr.mxu0 0.0
  %141 = vmatpush1.msra.mxu0 0.0
  %142 = vmatprep.subr.mxu0 0.0
  %143 = vmatpush1.msra.mxu0 0.0
  %144 = vmatprep.subr.mxu0 0.0
  %145 = vmatpush1.msra.mxu0 0.0
  %146 = vmatprep.subr.mxu0 0.0
  %147 = vmatpush1.msra.mxu0 0.0
  %148 = vmatprep.subr.mxu0 0.0
  %149 = vmatpush1.msra.mxu0 0.0
  %150 = vmatprep.subr.mxu0 0.0
  %151 = vmatpush1.msra.mxu0 0.0
  %152 = vmatprep.subr.mxu0 0.0
  %153 = vmatpush1.msra.mxu0 0.0
  %154 = vmatprep.subr.mxu0 0.0
  %155 = vmatpush1.msra.mxu0 0.0
  %156 = vmatprep.subr.mxu0 0.0
  %157 = vmatpush1.msra.mxu0 0.0
  %158 = vmatprep.subr.mxu0 0.0
  %159 = vmatpush1.msra.mxu0 0.0
  %160 = vmatprep.subr.mxu0 0.0
  %161 = vmatpush1.msra.mxu0 0.0
  %162 = vmatprep.subr.mxu0 0.0
  %163 = vmatpush1.msra.mxu0 %v55
  %164 = vmatprep.subr.mxu0 0.0
  %165 = vmatpush1.msra.mxu0 %v54
  %166 = vmatprep.subr.mxu0 0.0
  %167 = vmatpush1.msra.mxu0 %v53
  %168 = vmatprep.subr.mxu0 0.0
  %169 = vmatpush1.msra.mxu0 %v52
  %170 = vmatprep.subr.mxu0 0.0
  %171 = vmatpush2.msra.mxu0 0.0
  %172 = vmatprep.subr.mxu0 0.0
  %173 = vmatpush2.msra.mxu0 0.0
  %174 = vmatprep.subr.mxu0 0.0
  %175 = vmatpush2.msra.mxu0 0.0
  %176 = vmatprep.subr.mxu0 0.0
  %177 = vmatpush2.msra.mxu0 0.0
  %178 = vmatprep.subr.mxu0 0.0
  %179 = vmatpush2.msra.mxu0 0.0
  %180 = vmatprep.subr.mxu0 0.0
  %181 = vmatpush2.msra.mxu0 0.0
  %182 = vmatprep.subr.mxu0 0.0
  %183 = vmatpush2.msra.mxu0 0.0
  %184 = vmatprep.subr.mxu0 0.0
  %185 = vmatpush2.msra.mxu0 0.0
  %186 = vmatprep.subr.mxu0 0.0
  %187 = vmatpush2.msra.mxu0 0.0
  %188 = vmatprep.subr.mxu0 0.0
  %189 = vmatpush2.msra.mxu0 0.0
  %190 = vmatprep.subr.mxu0 0.0
  %191 = vmatpush2.msra.mxu0 0.0
  %192 = vmatprep.subr.mxu0 0.0
  %193 = vmatpush2.msra.mxu0 0.0
  %194 = vmatprep.subr.mxu0 0.0
  %195 = vmatpush2.msra.mxu0 0.0
  %196 = vmatprep.subr.mxu0 0.0
  %197 = vmatpush2.msra.mxu0 0.0
  %198 = vmatprep.subr.mxu0 0.0
  %199 = vmatpush2.msra.mxu0 0.0
  %200 = vmatprep.subr.mxu0 0.0
  %201 = vmatpush2.msra.mxu0 0.0
  %202 = vmatprep.mubr.f32.mxu0 0.0
  %203 = vmatmul.mubr.f32.gmra.mxu0 %v58
  %v204 = vpop.f32.mrf.mxu0
  %v205 = vadd.f32 %v130, %v204
  %v206 = vpop.f32.mrf.mxu0
  %207 = vmatprep.mubr.f32.mxu0 0.0
  %208 = vmatmul.mubr.f32.gmra.mxu0 %v61
  %v209 = vpop.f32.mrf.mxu0
  %v210 = vadd.f32 %v135, %v209
  %v211 = vpop.f32.mrf.mxu0
  %212 = vdwg.mxu0
  %s213 = scalar_lea.vmem %s0, 288
  %v214 = vld [vmem:[%s213] sm:$0xff]
  %v215 = vld [vmem:[%s213 + $0x8] sm:$0xff]
  %v216 = vld [vmem:[%s213 + $0x10] sm:$0xff]
  %v217 = vld [vmem:[%s213 + $0x18] sm:$0xff]
  %v218 = vld [vmem:[%s213 + $0x20] sm:$0xff]
  %v219 = vld [vmem:[%s213 + $0x28] sm:$0xff]
  %v220 = vld [vmem:[%s213 + $0x30] sm:$0xff]
  %v221 = vld [vmem:[%s213 + $0x38] sm:$0xff]
  %v222 = vld [vmem:[%s213 + $0x40] sm:$0xff]
  %v223 = vld [vmem:[%s213 + $0x48] sm:$0xff]
  %v224 = vld [vmem:[%s213 + $0x50] sm:$0xff]
  %v225 = vld [vmem:[%s213 + $0x58] sm:$0xff]
  %v226 = vld [vmem:[%s213 + $0x60] sm:$0xff]
  %v227 = vld [vmem:[%s213 + $0x68] sm:$0xff]
  %v228 = vld [vmem:[%s213 + $0x70] sm:$0xff]
  %v229 = vld [vmem:[%s213 + $0x78] sm:$0xff]
  %v230 = vld [vmem:[%s213 + $0x80] sm:$0xff]
  %v231 = vld [vmem:[%s213 + $0x88] sm:$0xff]
  %v232 = vld [vmem:[%s213 + $0x90] sm:$0xff]
  %v233 = vld [vmem:[%s213 + $0x98] sm:$0xff]
  %v234 = vld [vmem:[%s213 + $0xa0] sm:$0xff]
  %v235 = vld [vmem:[%s213 + $0xa8] sm:$0xff]
  %v236 = vld [vmem:[%s213 + $0xb0] sm:$0xff]
  %v237 = vld [vmem:[%s213 + $0xb8] sm:$0xff]
  %v238 = vld [vmem:[%s213 + $0xc0] sm:$0xff]
  %v239 = vld [vmem:[%s213 + $0xc8] sm:$0xff]
  %v240 = vld [vmem:[%s213 + $0xd0] sm:$0xff]
  %v241 = vld [vmem:[%s213 + $0xd8] sm:$0xff]
  %v242 = vld [vmem:[%s213 + $0xe0] sm:$0xff]
  %v243 = vld [vmem:[%s213 + $0xe8] sm:$0xff]
  %v244 = vld [vmem:[%s213 + $0xf0] sm:$0xff]
  %v245 = vld [vmem:[%s213 + $0xf8] sm:$0xff]
  %v246 = vld [vmem:[%s213 + $0x100] sm:$0xff]
  %v247 = vld [vmem:[%s213 + $0x108] sm:$0xff]
  %v248 = vld [vmem:[%s213 + $0x110] sm:$0xff]
  %v249 = vld [vmem:[%s213 + $0x118] sm:$0xff]
  %250 = vmatprep.subr.mxu0 0.0
  %251 = vmatpush1.msra.mxu0 %v229
  %252 = vmatprep.subr.mxu0 0.0
  %253 = vmatpush1.msra.mxu0 %v228
  %254 = vmatprep.subr.mxu0 0.0
  %255 = vmatpush1.msra.mxu0 %v227
  %256 = vmatprep.subr.mxu0 0.0
  %257 = vmatpush1.msra.mxu0 %v226
  %258 = vmatprep.subr.mxu0 0.0
  %259 = vmatpush1.msra.mxu0 %v225
  %260 = vmatprep.subr.mxu0 0.0
  %261 = vmatpush1.msra.mxu0 %v224
  %262 = vmatprep.subr.mxu0 0.0
  %263 = vmatpush1.msra.mxu0 %v223
  %264 = vmatprep.subr.mxu0 0.0
  %265 = vmatpush1.msra.mxu0 %v222
  %266 = vmatprep.subr.mxu0 0.0
  %267 = vmatpush1.msra.mxu0 %v221
  %268 = vmatprep.subr.mxu0 0.0
  %269 = vmatpush1.msra.mxu0 %v220
  %270 = vmatprep.subr.mxu0 0.0
  %271 = vmatpush1.msra.mxu0 %v219
  %272 = vmatprep.subr.mxu0 0.0
  %273 = vmatpush1.msra.mxu0 %v218
  %274 = vmatprep.subr.mxu0 0.0
  %275 = vmatpush1.msra.mxu0 %v217
  %276 = vmatprep.subr.mxu0 0.0
  %277 = vmatpush1.msra.mxu0 %v216
  %278 = vmatprep.subr.mxu0 0.0
  %279 = vmatpush1.msra.mxu0 %v215
  %280 = vmatprep.subr.mxu0 0.0
  %281 = vmatpush1.msra.mxu0 %v214
  %282 = vmatprep.subr.mxu0 0.0
  %283 = vmatpush2.msra.mxu0 %v245
  %284 = vmatprep.subr.mxu0 0.0
  %285 = vmatpush2.msra.mxu0 %v244
  %286 = vmatprep.subr.mxu0 0.0
  %287 = vmatpush2.msra.mxu0 %v243
  %288 = vmatprep.subr.mxu0 0.0
  %289 = vmatpush2.msra.mxu0 %v242
  %290 = vmatprep.subr.mxu0 0.0
  %291 = vmatpush2.msra.mxu0 %v241
  %292 = vmatprep.subr.mxu0 0.0
  %293 = vmatpush2.msra.mxu0 %v240
  %294 = vmatprep.subr.mxu0 0.0
  %295 = vmatpush2.msra.mxu0 %v239
  %296 = vmatprep.subr.mxu0 0.0
  %297 = vmatpush2.msra.mxu0 %v238
  %298 = vmatprep.subr.mxu0 0.0
  %299 = vmatpush2.msra.mxu0 %v237
  %300 = vmatprep.subr.mxu0 0.0
  %301 = vmatpush2.msra.mxu0 %v236
  %302 = vmatprep.subr.mxu0 0.0
  %303 = vmatpush2.msra.mxu0 %v235
  %304 = vmatprep.subr.mxu0 0.0
  %305 = vmatpush2.msra.mxu0 %v234
  %306 = vmatprep.subr.mxu0 0.0
  %307 = vmatpush2.msra.mxu0 %v233
  %308 = vmatprep.subr.mxu0 0.0
  %309 = vmatpush2.msra.mxu0 %v232
  %310 = vmatprep.subr.mxu0 0.0
  %311 = vmatpush2.msra.mxu0 %v231
  %312 = vmatprep.subr.mxu0 0.0
  %313 = vmatpush2.msra.mxu0 %v230
  %314 = vmatprep.mubr.f32.mxu0 %v15
  %315 = vmatmul.mubr.f32.gmra.mxu0 %v14
  %v316 = vpop.f32.mrf.mxu0
  %v317 = vadd.f32 0.0, %v316
  %v318 = vpop.f32.mrf.mxu0
  %319 = vmatprep.mubr.f32.mxu0 %v18
  %320 = vmatmul.mubr.f32.gmra.mxu0 %v17
  %v321 = vpop.f32.mrf.mxu0
  %v322 = vadd.f32 0.0, %v321
  %v323 = vpop.f32.mrf.mxu0
  %324 = vdwg.mxu0
  %325 = vmatprep.subr.mxu0 0.0
  %326 = vmatpush1.msra.mxu0 0.0
  %327 = vmatprep.subr.mxu0 0.0
  %328 = vmatpush1.msra.mxu0 0.0
  %329 = vmatprep.subr.mxu0 0.0
  %330 = vmatpush1.msra.mxu0 0.0
  %331 = vmatprep.subr.mxu0 0.0
  %332 = vmatpush1.msra.mxu0 0.0
  %333 = vmatprep.subr.mxu0 0.0
  %334 = vmatpush1.msra.mxu0 0.0
  %335 = vmatprep.subr.mxu0 0.0
  %336 = vmatpush1.msra.mxu0 0.0
  %337 = vmatprep.subr.mxu0 0.0
  %338 = vmatpush1.msra.mxu0 0.0
  %339 = vmatprep.subr.mxu0 0.0
  %340 = vmatpush1.msra.mxu0 0.0
  %341 = vmatprep.subr.mxu0 0.0
  %342 = vmatpush1.msra.mxu0 0.0
  %343 = vmatprep.subr.mxu0 0.0
  %344 = vmatpush1.msra.mxu0 0.0
  %345 = vmatprep.subr.mxu0 0.0
  %346 = vmatpush1.msra.mxu0 0.0
  %347 = vmatprep.subr.mxu0 0.0
  %348 = vmatpush1.msra.mxu0 0.0
  %349 = vmatprep.subr.mxu0 0.0
  %350 = vmatpush1.msra.mxu0 %v249
  %351 = vmatprep.subr.mxu0 0.0
  %352 = vmatpush1.msra.mxu0 %v248
  %353 = vmatprep.subr.mxu0 0.0
  %354 = vmatpush1.msra.mxu0 %v247
  %355 = vmatprep.subr.mxu0 0.0
  %356 = vmatpush1.msra.mxu0 %v246
  %357 = vmatprep.subr.mxu0 0.0
  %358 = vmatpush2.msra.mxu0 0.0
  %359 = vmatprep.subr.mxu0 0.0
  %360 = vmatpush2.msra.mxu0 0.0
  %361 = vmatprep.subr.mxu0 0.0
  %362 = vmatpush2.msra.mxu0 0.0
  %363 = vmatprep.subr.mxu0 0.0
  %364 = vmatpush2.msra.mxu0 0.0
  %365 = vmatprep.subr.mxu0 0.0
  %366 = vmatpush2.msra.mxu0 0.0
  %367 = vmatprep.subr.mxu0 0.0
  %368 = vmatpush2.msra.mxu0 0.0
  %369 = vmatprep.subr.mxu0 0.0
  %370 = vmatpush2.msra.mxu0 0.0
  %371 = vmatprep.subr.mxu0 0.0
  %372 = vmatpush2.msra.mxu0 0.0
  %373 = vmatprep.subr.mxu0 0.0
  %374 = vmatpush2.msra.mxu0 0.0
  %375 = vmatprep.subr.mxu0 0.0
  %376 = vmatpush2.msra.mxu0 0.0
  %377 = vmatprep.subr.mxu0 0.0
  %378 = vmatpush2.msra.mxu0 0.0
  %379 = vmatprep.subr.mxu0 0.0
  %380 = vmatpush2.msra.mxu0 0.0
  %381 = vmatprep.subr.mxu0 0.0
  %382 = vmatpush2.msra.mxu0 0.0
  %383 = vmatprep.subr.mxu0 0.0
  %384 = vmatpush2.msra.mxu0 0.0
  %385 = vmatprep.subr.mxu0 0.0
  %386 = vmatpush2.msra.mxu0 0.0
  %387 = vmatprep.subr.mxu0 0.0
  %388 = vmatpush2.msra.mxu0 0.0
  %389 = vmatprep.mubr.f32.mxu0 0.0
  %390 = vmatmul.mubr.f32.gmra.mxu0 %v58
  %v391 = vpop.f32.mrf.mxu0
  %v392 = vadd.f32 %v317, %v391
  %v393 = vpop.f32.mrf.mxu0
  %394 = vmatprep.mubr.f32.mxu0 0.0
  %395 = vmatmul.mubr.f32.gmra.mxu0 %v61
  %v396 = vpop.f32.mrf.mxu0
  %v397 = vadd.f32 %v322, %v396
  %v398 = vpop.f32.mrf.mxu0
  %399 = vdwg.mxu0
  %s400 = scalar_lea.vmem %s0, 576
  %v401 = vld [vmem:[%s400] sm:$0xff]
  %v402 = vld [vmem:[%s400 + $0x8] sm:$0xff]
  %v403 = vld [vmem:[%s400 + $0x10] sm:$0xff]
  %v404 = vld [vmem:[%s400 + $0x18] sm:$0xff]
  %v405 = vld [vmem:[%s400 + $0x20] sm:$0xff]
  %v406 = vld [vmem:[%s400 + $0x28] sm:$0xff]
  %v407 = vld [vmem:[%s400 + $0x30] sm:$0xff]
  %v408 = vld [vmem:[%s400 + $0x38] sm:$0xff]
  %v409 = vld [vmem:[%s400 + $0x40] sm:$0xff]
  %v410 = vld [vmem:[%s400 + $0x48] sm:$0xff]
  %v411 = vld [vmem:[%s400 + $0x50] sm:$0xff]
  %v412 = vld [vmem:[%s400 + $0x58] sm:$0xff]
  %v413 = vld [vmem:[%s400 + $0x60] sm:$0xff]
  %v414 = vld [vmem:[%s400 + $0x68] sm:$0xff]
  %v415 = vld [vmem:[%s400 + $0x70] sm:$0xff]
  %v416 = vld [vmem:[%s400 + $0x78] sm:$0xff]
  %v417 = vld [vmem:[%s400 + $0x80] sm:$0xff]
  %v418 = vld [vmem:[%s400 + $0x88] sm:$0xff]
  %v419 = vld [vmem:[%s400 + $0x90] sm:$0xff]
  %v420 = vld [vmem:[%s400 + $0x98] sm:$0xff]
  %v421 = vld [vmem:[%s400 + $0xa0] sm:$0xff]
  %v422 = vld [vmem:[%s400 + $0xa8] sm:$0xff]
  %v423 = vld [vmem:[%s400 + $0xb0] sm:$0xff]
  %v424 = vld [vmem:[%s400 + $0xb8] sm:$0xff]
  %v425 = vld [vmem:[%s400 + $0xc0] sm:$0xff]
  %v426 = vld [vmem:[%s400 + $0xc8] sm:$0xff]
  %v427 = vld [vmem:[%s400 + $0xd0] sm:$0xff]
  %v428 = vld [vmem:[%s400 + $0xd8] sm:$0xff]
  %v429 = vld [vmem:[%s400 + $0xe0] sm:$0xff]
  %v430 = vld [vmem:[%s400 + $0xe8] sm:$0xff]
  %v431 = vld [vmem:[%s400 + $0xf0] sm:$0xff]
  %v432 = vld [vmem:[%s400 + $0xf8] sm:$0xff]
  %v433 = vld [vmem:[%s400 + $0x100] sm:$0xff]
  %v434 = vld [vmem:[%s400 + $0x108] sm:$0xff]
  %v435 = vld [vmem:[%s400 + $0x110] sm:$0xff]
  %v436 = vld [vmem:[%s400 + $0x118] sm:$0xff]
  %437 = vmatprep.subr.mxu0 0.0
  %438 = vmatpush1.msra.mxu0 %v416
  %439 = vmatprep.subr.mxu0 0.0
  %440 = vmatpush1.msra.mxu0 %v415
  %441 = vmatprep.subr.mxu0 0.0
  %442 = vmatpush1.msra.mxu0 %v414
  %443 = vmatprep.subr.mxu0 0.0
  %444 = vmatpush1.msra.mxu0 %v413
  %445 = vmatprep.subr.mxu0 0.0
  %446 = vmatpush1.msra.mxu0 %v412
  %447 = vmatprep.subr.mxu0 0.0
  %448 = vmatpush1.msra.mxu0 %v411
  %449 = vmatprep.subr.mxu0 0.0
  %450 = vmatpush1.msra.mxu0 %v410
  %451 = vmatprep.subr.mxu0 0.0
  %452 = vmatpush1.msra.mxu0 %v409
  %453 = vmatprep.subr.mxu0 0.0
  %454 = vmatpush1.msra.mxu0 %v408
  %455 = vmatprep.subr.mxu0 0.0
  %456 = vmatpush1.msra.mxu0 %v407
  %457 = vmatprep.subr.mxu0 0.0
  %458 = vmatpush1.msra.mxu0 %v406
  %459 = vmatprep.subr.mxu0 0.0
  %460 = vmatpush1.msra.mxu0 %v405
  %461 = vmatprep.subr.mxu0 0.0
  %462 = vmatpush1.msra.mxu0 %v404
  %463 = vmatprep.subr.mxu0 0.0
  %464 = vmatpush1.msra.mxu0 %v403
  %465 = vmatprep.subr.mxu0 0.0
  %466 = vmatpush1.msra.mxu0 %v402
  %467 = vmatprep.subr.mxu0 0.0
  %468 = vmatpush1.msra.mxu0 %v401
  %469 = vmatprep.subr.mxu0 0.0
  %470 = vmatpush2.msra.mxu0 %v432
  %471 = vmatprep.subr.mxu0 0.0
  %472 = vmatpush2.msra.mxu0 %v431
  %473 = vmatprep.subr.mxu0 0.0
  %474 = vmatpush2.msra.mxu0 %v430
  %475 = vmatprep.subr.mxu0 0.0
  %476 = vmatpush2.msra.mxu0 %v429
  %477 = vmatprep.subr.mxu0 0.0
  %478 = vmatpush2.msra.mxu0 %v428
  %479 = vmatprep.subr.mxu0 0.0
  %480 = vmatpush2.msra.mxu0 %v427
  %481 = vmatprep.subr.mxu0 0.0
  %482 = vmatpush2.msra.mxu0 %v426
  %483 = vmatprep.subr.mxu0 0.0
  %484 = vmatpush2.msra.mxu0 %v425
  %485 = vmatprep.subr.mxu0 0.0
  %486 = vmatpush2.msra.mxu0 %v424
  %487 = vmatprep.subr.mxu0 0.0
  %488 = vmatpush2.msra.mxu0 %v423
  %489 = vmatprep.subr.mxu0 0.0
  %490 = vmatpush2.msra.mxu0 %v422
  %491 = vmatprep.subr.mxu0 0.0
  %492 = vmatpush2.msra.mxu0 %v421
  %493 = vmatprep.subr.mxu0 0.0
  %494 = vmatpush2.msra.mxu0 %v420
  %495 = vmatprep.subr.mxu0 0.0
  %496 = vmatpush2.msra.mxu0 %v419
  %497 = vmatprep.subr.mxu0 0.0
  %498 = vmatpush2.msra.mxu0 %v418
  %499 = vmatprep.subr.mxu0 0.0
  %500 = vmatpush2.msra.mxu0 %v417
  %501 = vmatprep.mubr.f32.mxu0 %v15
  %502 = vmatmul.mubr.f32.gmra.mxu0 %v14
  %v503 = vpop.f32.mrf.mxu0
  %v504 = vadd.f32 0.0, %v503
  %v505 = vpop.f32.mrf.mxu0
  %506 = vmatprep.mubr.f32.mxu0 %v18
  %507 = vmatmul.mubr.f32.gmra.mxu0 %v17
  %v508 = vpop.f32.mrf.mxu0
  %v509 = vadd.f32 0.0, %v508
  %v510 = vpop.f32.mrf.mxu0
  %511 = vdwg.mxu0
  %512 = vmatprep.subr.mxu0 0.0
  %513 = vmatpush1.msra.mxu0 0.0
  %514 = vmatprep.subr.mxu0 0.0
  %515 = vmatpush1.msra.mxu0 0.0
  %516 = vmatprep.subr.mxu0 0.0
  %517 = vmatpush1.msra.mxu0 0.0
  %518 = vmatprep.subr.mxu0 0.0
  %519 = vmatpush1.msra.mxu0 0.0
  %520 = vmatprep.subr.mxu0 0.0
  %521 = vmatpush1.msra.mxu0 0.0
  %522 = vmatprep.subr.mxu0 0.0
  %523 = vmatpush1.msra.mxu0 0.0
  %524 = vmatprep.subr.mxu0 0.0
  %525 = vmatpush1.msra.mxu0 0.0
  %526 = vmatprep.subr.mxu0 0.0
  %527 = vmatpush1.msra.mxu0 0.0
  %528 = vmatprep.subr.mxu0 0.0
  %529 = vmatpush1.msra.mxu0 0.0
  %530 = vmatprep.subr.mxu0 0.0
  %531 = vmatpush1.msra.mxu0 0.0
  %532 = vmatprep.subr.mxu0 0.0
  %533 = vmatpush1.msra.mxu0 0.0
  %534 = vmatprep.subr.mxu0 0.0
  %535 = vmatpush1.msra.mxu0 0.0
  %536 = vmatprep.subr.mxu0 0.0
  %537 = vmatpush1.msra.mxu0 %v436
  %538 = vmatprep.subr.mxu0 0.0
  %539 = vmatpush1.msra.mxu0 %v435
  %540 = vmatprep.subr.mxu0 0.0
  %541 = vmatpush1.msra.mxu0 %v434
  %542 = vmatprep.subr.mxu0 0.0
  %543 = vmatpush1.msra.mxu0 %v433
  %544 = vmatprep.subr.mxu0 0.0
  %545 = vmatpush2.msra.mxu0 0.0
  %546 = vmatprep.subr.mxu0 0.0
  %547 = vmatpush2.msra.mxu0 0.0
  %548 = vmatprep.subr.mxu0 0.0
  %549 = vmatpush2.msra.mxu0 0.0
  %550 = vmatprep.subr.mxu0 0.0
  %551 = vmatpush2.msra.mxu0 0.0
  %552 = vmatprep.subr.mxu0 0.0
  %553 = vmatpush2.msra.mxu0 0.0
  %554 = vmatprep.subr.mxu0 0.0
  %555 = vmatpush2.msra.mxu0 0.0
  %556 = vmatprep.subr.mxu0 0.0
  %557 = vmatpush2.msra.mxu0 0.0
  %558 = vmatprep.subr.mxu0 0.0
  %559 = vmatpush2.msra.mxu0 0.0
  %560 = vmatprep.subr.mxu0 0.0
  %561 = vmatpush2.msra.mxu0 0.0
  %562 = vmatprep.subr.mxu0 0.0
  %563 = vmatpush2.msra.mxu0 0.0
  %564 = vmatprep.subr.mxu0 0.0
  %565 = vmatpush2.msra.mxu0 0.0
  %566 = vmatprep.subr.mxu0 0.0
  %567 = vmatpush2.msra.mxu0 0.0
  %568 = vmatprep.subr.mxu0 0.0
  %569 = vmatpush2.msra.mxu0 0.0
  %570 = vmatprep.subr.mxu0 0.0
  %571 = vmatpush2.msra.mxu0 0.0
  %572 = vmatprep.subr.mxu0 0.0
  %573 = vmatpush2.msra.mxu0 0.0
  %574 = vmatprep.subr.mxu0 0.0
  %575 = vmatpush2.msra.mxu0 0.0
  %576 = vmatprep.mubr.f32.mxu0 0.0
  %577 = vmatmul.mubr.f32.gmra.mxu0 %v58
  %v578 = vpop.f32.mrf.mxu0
  %v579 = vadd.f32 %v504, %v578
  %v580 = vpop.f32.mrf.mxu0
  %581 = vmatprep.mubr.f32.mxu0 0.0
  %582 = vmatmul.mubr.f32.gmra.mxu0 %v61
  %v583 = vpop.f32.mrf.mxu0
  %v584 = vadd.f32 %v509, %v583
  %v585 = vpop.f32.mrf.mxu0
  %586 = vdwg.mxu0
  %s587 = scalar_lea.vmem %s0, 864
  %v588 = vld [vmem:[%s587] sm:$0xff]
  %v589 = vld [vmem:[%s587 + $0x8] sm:$0xff]
  %v590 = vld [vmem:[%s587 + $0x10] sm:$0xff]
  %v591 = vld [vmem:[%s587 + $0x18] sm:$0xff]
  %v592 = vld [vmem:[%s587 + $0x20] sm:$0xff]
  %v593 = vld [vmem:[%s587 + $0x28] sm:$0xff]
  %v594 = vld [vmem:[%s587 + $0x30] sm:$0xff]
  %v595 = vld [vmem:[%s587 + $0x38] sm:$0xff]
  %v596 = vld [vmem:[%s587 + $0x40] sm:$0xff]
  %v597 = vld [vmem:[%s587 + $0x48] sm:$0xff]
  %v598 = vld [vmem:[%s587 + $0x50] sm:$0xff]
  %v599 = vld [vmem:[%s587 + $0x58] sm:$0xff]
  %v600 = vld [vmem:[%s587 + $0x60] sm:$0xff]
  %v601 = vld [vmem:[%s587 + $0x68] sm:$0xff]
  %v602 = vld [vmem:[%s587 + $0x70] sm:$0xff]
  %v603 = vld [vmem:[%s587 + $0x78] sm:$0xff]
  %v604 = vld [vmem:[%s587 + $0x80] sm:$0xff]
  %v605 = vld [vmem:[%s587 + $0x88] sm:$0xff]
  %v606 = vld [vmem:[%s587 + $0x90] sm:$0xff]
  %v607 = vld [vmem:[%s587 + $0x98] sm:$0xff]
  %v608 = vld [vmem:[%s587 + $0xa0] sm:$0xff]
  %v609 = vld [vmem:[%s587 + $0xa8] sm:$0xff]
  %v610 = vld [vmem:[%s587 + $0xb0] sm:$0xff]
  %v611 = vld [vmem:[%s587 + $0xb8] sm:$0xff]
  %v612 = vld [vmem:[%s587 + $0xc0] sm:$0xff]
  %v613 = vld [vmem:[%s587 + $0xc8] sm:$0xff]
  %v614 = vld [vmem:[%s587 + $0xd0] sm:$0xff]
  %v615 = vld [vmem:[%s587 + $0xd8] sm:$0xff]
  %v616 = vld [vmem:[%s587 + $0xe0] sm:$0xff]
  %v617 = vld [vmem:[%s587 + $0xe8] sm:$0xff]
  %v618 = vld [vmem:[%s587 + $0xf0] sm:$0xff]
  %v619 = vld [vmem:[%s587 + $0xf8] sm:$0xff]
  %v620 = vld [vmem:[%s587 + $0x100] sm:$0xff]
  %v621 = vld [vmem:[%s587 + $0x108] sm:$0xff]
  %v622 = vld [vmem:[%s587 + $0x110] sm:$0xff]
  %v623 = vld [vmem:[%s587 + $0x118] sm:$0xff]
  %624 = vmatprep.subr.mxu0 0.0
  %625 = vmatpush1.msra.mxu0 %v603
  %626 = vmatprep.subr.mxu0 0.0
  %627 = vmatpush1.msra.mxu0 %v602
  %628 = vmatprep.subr.mxu0 0.0
  %629 = vmatpush1.msra.mxu0 %v601
  %630 = vmatprep.subr.mxu0 0.0
  %631 = vmatpush1.msra.mxu0 %v600
  %632 = vmatprep.subr.mxu0 0.0
  %633 = vmatpush1.msra.mxu0 %v599
  %634 = vmatprep.subr.mxu0 0.0
  %635 = vmatpush1.msra.mxu0 %v598
  %636 = vmatprep.subr.mxu0 0.0
  %637 = vmatpush1.msra.mxu0 %v597
  %638 = vmatprep.subr.mxu0 0.0
  %639 = vmatpush1.msra.mxu0 %v596
  %640 = vmatprep.subr.mxu0 0.0
  %641 = vmatpush1.msra.mxu0 %v595
  %642 = vmatprep.subr.mxu0 0.0
  %643 = vmatpush1.msra.mxu0 %v594
  %644 = vmatprep.subr.mxu0 0.0
  %645 = vmatpush1.msra.mxu0 %v593
  %646 = vmatprep.subr.mxu0 0.0
  %647 = vmatpush1.msra.mxu0 %v592
  %648 = vmatprep.subr.mxu0 0.0
  %649 = vmatpush1.msra.mxu0 %v591
  %650 = vmatprep.subr.mxu0 0.0
  %651 = vmatpush1.msra.mxu0 %v590
  %652 = vmatprep.subr.mxu0 0.0
  %653 = vmatpush1.msra.mxu0 %v589
  %654 = vmatprep.subr.mxu0 0.0
  %655 = vmatpush1.msra.mxu0 %v588
  %656 = vmatprep.subr.mxu0 0.0
  %657 = vmatpush2.msra.mxu0 %v619
  %658 = vmatprep.subr.mxu0 0.0
  %659 = vmatpush2.msra.mxu0 %v618
  %660 = vmatprep.subr.mxu0 0.0
  %661 = vmatpush2.msra.mxu0 %v617
  %662 = vmatprep.subr.mxu0 0.0
  %663 = vmatpush2.msra.mxu0 %v616
  %664 = vmatprep.subr.mxu0 0.0
  %665 = vmatpush2.msra.mxu0 %v615
  %666 = vmatprep.subr.mxu0 0.0
  %667 = vmatpush2.msra.mxu0 %v614
  %668 = vmatprep.subr.mxu0 0.0
  %669 = vmatpush2.msra.mxu0 %v613
  %670 = vmatprep.subr.mxu0 0.0
  %671 = vmatpush2.msra.mxu0 %v612
  %672 = vmatprep.subr.mxu0 0.0
  %673 = vmatpush2.msra.mxu0 %v611
  %674 = vmatprep.subr.mxu0 0.0
  %675 = vmatpush2.msra.mxu0 %v610
  %676 = vmatprep.subr.mxu0 0.0
  %677 = vmatpush2.msra.mxu0 %v609
  %678 = vmatprep.subr.mxu0 0.0
  %679 = vmatpush2.msra.mxu0 %v608
  %680 = vmatprep.subr.mxu0 0.0
  %681 = vmatpush2.msra.mxu0 %v607
  %682 = vmatprep.subr.mxu0 0.0
  %683 = vmatpush2.msra.mxu0 %v606
  %684 = vmatprep.subr.mxu0 0.0
  %685 = vmatpush2.msra.mxu0 %v605
  %686 = vmatprep.subr.mxu0 0.0
  %687 = vmatpush2.msra.mxu0 %v604
  %688 = vmatprep.mubr.f32.mxu0 %v15
  %689 = vmatmul.mubr.f32.gmra.mxu0 %v14
  %v690 = vpop.f32.mrf.mxu0
  %v691 = vadd.f32 0.0, %v690
  %v692 = vpop.f32.mrf.mxu0
  %693 = vmatprep.mubr.f32.mxu0 %v18
  %694 = vmatmul.mubr.f32.gmra.mxu0 %v17
  %v695 = vpop.f32.mrf.mxu0
  %v696 = vadd.f32 0.0, %v695
  %v697 = vpop.f32.mrf.mxu0
  %698 = vdwg.mxu0
  %699 = vmatprep.subr.mxu0 0.0
  %700 = vmatpush1.msra.mxu0 0.0
  %701 = vmatprep.subr.mxu0 0.0
  %702 = vmatpush1.msra.mxu0 0.0
  %703 = vmatprep.subr.mxu0 0.0
  %704 = vmatpush1.msra.mxu0 0.0
  %705 = vmatprep.subr.mxu0 0.0
  %706 = vmatpush1.msra.mxu0 0.0
  %707 = vmatprep.subr.mxu0 0.0
  %708 = vmatpush1.msra.mxu0 0.0
  %709 = vmatprep.subr.mxu0 0.0
  %710 = vmatpush1.msra.mxu0 0.0
  %711 = vmatprep.subr.mxu0 0.0
  %712 = vmatpush1.msra.mxu0 0.0
  %713 = vmatprep.subr.mxu0 0.0
  %714 = vmatpush1.msra.mxu0 0.0
  %715 = vmatprep.subr.mxu0 0.0
  %716 = vmatpush1.msra.mxu0 0.0
  %717 = vmatprep.subr.mxu0 0.0
  %718 = vmatpush1.msra.mxu0 0.0
  %719 = vmatprep.subr.mxu0 0.0
  %720 = vmatpush1.msra.mxu0 0.0
  %721 = vmatprep.subr.mxu0 0.0
  %722 = vmatpush1.msra.mxu0 0.0
  %723 = vmatprep.subr.mxu0 0.0
  %724 = vmatpush1.msra.mxu0 %v623
  %725 = vmatprep.subr.mxu0 0.0
  %726 = vmatpush1.msra.mxu0 %v622
  %727 = vmatprep.subr.mxu0 0.0
  %728 = vmatpush1.msra.mxu0 %v621
  %729 = vmatprep.subr.mxu0 0.0
  %730 = vmatpush1.msra.mxu0 %v620
  %731 = vmatprep.subr.mxu0 0.0
  %732 = vmatpush2.msra.mxu0 0.0
  %733 = vmatprep.subr.mxu0 0.0
  %734 = vmatpush2.msra.mxu0 0.0
  %735 = vmatprep.subr.mxu0 0.0
  %736 = vmatpush2.msra.mxu0 0.0
  %737 = vmatprep.subr.mxu0 0.0
  %738 = vmatpush2.msra.mxu0 0.0
  %739 = vmatprep.subr.mxu0 0.0
  %740 = vmatpush2.msra.mxu0 0.0
  %741 = vmatprep.subr.mxu0 0.0
  %742 = vmatpush2.msra.mxu0 0.0
  %743 = vmatprep.subr.mxu0 0.0
  %744 = vmatpush2.msra.mxu0 0.0
  %745 = vmatprep.subr.mxu0 0.0
  %746 = vmatpush2.msra.mxu0 0.0
  %747 = vmatprep.subr.mxu0 0.0
  %748 = vmatpush2.msra.mxu0 0.0
  %749 = vmatprep.subr.mxu0 0.0
  %750 = vmatpush2.msra.mxu0 0.0
  %751 = vmatprep.subr.mxu0 0.0
  %752 = vmatpush2.msra.mxu0 0.0
  %753 = vmatprep.subr.mxu0 0.0
  %754 = vmatpush2.msra.mxu0 0.0
  %755 = vmatprep.subr.mxu0 0.0
  %756 = vmatpush2.msra.mxu0 0.0
  %757 = vmatprep.subr.mxu0 0.0
  %758 = vmatpush2.msra.mxu0 0.0
  %759 = vmatprep.subr.mxu0 0.0
  %760 = vmatpush2.msra.mxu0 0.0
  %761 = vmatprep.subr.mxu0 0.0
  %762 = vmatpush2.msra.mxu0 0.0
  %763 = vmatprep.mubr.f32.mxu0 0.0
  %764 = vmatmul.mubr.f32.gmra.mxu0 %v58
  %v765 = vpop.f32.mrf.mxu0
  %v766 = vadd.f32 %v691, %v765
  %v767 = vpop.f32.mrf.mxu0
  %768 = vmatprep.mubr.f32.mxu0 0.0
  %769 = vmatmul.mubr.f32.gmra.mxu0 %v61
  %v770 = vpop.f32.mrf.mxu0
  %v771 = vadd.f32 %v696, %v770
  %v772 = vpop.f32.mrf.mxu0
  %773 = vdwg.mxu0
  %v774 = vmax.f32 %v205, %v392
  %v775 = vmax.f32 %v210, %v397
  %v776 = vmax.f32 %v579, %v766
  %v777 = vmax.f32 %v584, %v771
  %v778 = vmax.f32 %v774, %v776
  %v779 = vmax.f32 %v775, %v777
  %v780 = vld [vmem:[%s2] sm:$0xff]
  %v781 = vld [vmem:[%s2 + $0x8] sm:$0xff]
  %783 = vset.pattern.permute.xlu0 0
  %784 = vperm.xlu0 %783, %v780
  %v785 = vpop.permute.xlu0 %784
  %788 = vset.pattern.permute.xlu0 0
  %789 = vperm.xlu0 %788, %v781
  %v790 = vpop.permute.xlu0 %789
  %v792 = vadd.f32 %v778, %v785
  %v793 = vadd.f32 %v779, %v790
  %v794 = vmax.f32 %v792, 0.0
  %v795 = vmax.f32 %v793, 0.0
  %796 = vst [vmem:[%s3] sm:$0xff] %v794
  %797 = vst [vmem:[%s3 + $0x8] sm:$0xff] %v795
  // Predicated region
  $region14: #{dqn_forward.6} parent=0 // pred_check
    _
  $region15: #{dqn_forward.6} parent=0 // pred_check_branch
    %799 = sbr.rel (0) target = $region17
  $region16: #{dqn_forward.6} parent=0 // pred_region
    _
  $region17: #{dqn_forward.6} parent=0 // pred_fallthru
    _
  // Predicated region
  $region18: #{dqn_forward.6} parent=0 // pred_check
    _
  $region19: #{dqn_forward.6} parent=0 // pred_check_branch
    %801 = sbr.rel (0) target = $region21
  $region20: #{dqn_forward.6} parent=0 // pred_region
    _
  $region21: #{dqn_forward.6} parent=0 // pred_fallthru
    _

// kernel: dqn_forward.7
$region0: #{dqn_forward.7}
  #allocation0 [shape = 'u32[]', space=smem, size = 0x4, offset = 0x4, fixed_abs, tag = 'smem constant byte address 0x4 - core index']
  #allocation1 [shape = 'u32[144,128]{1,0:T(1,128)}', space=vmem, size = 0x12000, scoped, tag = 'internal scratch']
  %s0 = inlined_call_operand.vmem [shape: f32[2,288], index: 0, kind: input, shape index: {}]
  %s1 = inlined_call_operand.vmem [shape: f32[288,32], index: 1, kind: input, shape index: {}]
  %s2 = inlined_call_operand.vmem [shape: f32[1,32], index: 2, kind: input, shape index: {}]
  %s3 = inlined_call_operand.vmem [shape: f32[32,2], index: 3, kind: input, shape index: {}]
  %s4 = inlined_call_operand.vmem [shape: f32[1,2], index: 4, kind: input, shape index: {}]
  %s5 = inlined_call_operand.hbm [shape: f32[2,2], index: 5, kind: output, shape index: {}]
  %s6 = sld [smem:[#allocation0]]
  $region30: #{dqn_forward.7} parent=0
    _
  %s8 = ssub.s32 1, %s6
  %s9 = scalar_select 0, %s8, %s6
  $region1: #{dqn_forward.7} parent=0
    #allocation2 [shape = 'u8[1024]{0}', space=vmem, size = 0x400, scoped, tag = 'output window, operand 0, single buffered']
    #allocation3 [shape = 's32[1]{0}', space=sflag, size = 0x4, scoped, tag = 'scoped memory for dqn_forward.7']
    %10 = vsyncpa [#allocation3], 0
    // Predicated region
    $region2: #{dqn_forward.7} parent=1 // pred_check
      _
    $region3: #{dqn_forward.7} parent=1 // pred_check_branch
      %12 = sbr.rel (0) target = $region5
    $region4: #{dqn_forward.7} parent=1 // pred_region
      _
    $region5: #{dqn_forward.7} parent=1 // pred_fallthru
      _
    // Predicated region
    $region6: #{dqn_forward.7} parent=1 // pred_check
      _
    $region7: #{dqn_forward.7} parent=1 // pred_check_branch
      %14 = sbr.rel (0) target = $region9
    $region8: #{dqn_forward.7} parent=1 // pred_region
      _
    $region9: #{dqn_forward.7} parent=1 // pred_fallthru
      _
    // Predicated region
    $region10: #{dqn_forward.7} parent=1 // pred_check
      _
    $region11: #{dqn_forward.7} parent=1 // pred_check_branch
      %16 = sbr.rel (0) target = $region13
    $region12: #{dqn_forward.7} parent=1 // pred_region
      _
    $region13: #{dqn_forward.7} parent=1 // pred_fallthru
      _
    // Predicated region
    $region14: #{dqn_forward.7} parent=1 // pred_check
      _
    $region15: #{dqn_forward.7} parent=1 // pred_check_branch
      %18 = sbr.rel (0) target = $region17
    $region16: #{dqn_forward.7} parent=1 // pred_region
      _
    $region17: #{dqn_forward.7} parent=1 // pred_fallthru
      _
    // Predicated region
    $region18: #{dqn_forward.7} parent=1 // pred_check
      _
    $region19: #{dqn_forward.7} parent=1 // pred_check_branch
      %20 = sbr.rel (0) target = $region21
    $region20: #{dqn_forward.7} parent=1 // pred_region
      _
    $region21: #{dqn_forward.7} parent=1 // pred_fallthru
      _
    %v21 = vld [vmem:[%s0] sm:$0x3f]
    %v22 = vld [vmem:[%s1] sm:$0xff]
    %v23 = vld [vmem:[%s1 + $0x8] sm:$0xff]
    %v24 = vld [vmem:[%s1 + $0x10] sm:$0xff]
    %v25 = vld [vmem:[%s1 + $0x18] sm:$0xff]
    %v26 = vld [vmem:[%s1 + $0x20] sm:$0xff]
    %v27 = vld [vmem:[%s1 + $0x28] sm:$0xff]
    %v28 = vld [vmem:[%s1 + $0x30] sm:$0xff]
    %v29 = vld [vmem:[%s1 + $0x38] sm:$0xff]
    %v30 = vld [vmem:[%s1 + $0x40] sm:$0xff]
    %v31 = vld [vmem:[%s1 + $0x48] sm:$0xff]
    %v32 = vld [vmem:[%s1 + $0x50] sm:$0xff]
    %v33 = vld [vmem:[%s1 + $0x58] sm:$0xff]
    %v34 = vld [vmem:[%s1 + $0x60] sm:$0xff]
    %v35 = vld [vmem:[%s1 + $0x68] sm:$0xff]
    %v36 = vld [vmem:[%s1 + $0x70] sm:$0xff]
    %v37 = vld [vmem:[%s1 + $0x78] sm:$0xff]
    %v38 = vld [vmem:[%s1 + $0x80] sm:$0xff]
    %v39 = vld [vmem:[%s1 + $0x88] sm:$0xff]
    %v40 = vld [vmem:[%s1 + $0x90] sm:$0xff]
    %v41 = vld [vmem:[%s1 + $0x98] sm:$0xff]
    %v42 = vld [vmem:[%s1 + $0xa0] sm:$0xff]
    %v43 = vld [vmem:[%s1 + $0xa8] sm:$0xff]
    %v44 = vld [vmem:[%s1 + $0xb0] sm:$0xff]
    %v45 = vld [vmem:[%s1 + $0xb8] sm:$0xff]
    %v46 = vld [vmem:[%s1 + $0xc0] sm:$0xff]
    %v47 = vld [vmem:[%s1 + $0xc8] sm:$0xff]
    %v48 = vld [vmem:[%s1 + $0xd0] sm:$0xff]
    %v49 = vld [vmem:[%s1 + $0xd8] sm:$0xff]
    %v50 = vld [vmem:[%s1 + $0xe0] sm:$0xff]
    %v51 = vld [vmem:[%s1 + $0xe8] sm:$0xff]
    %v52 = vld [vmem:[%s1 + $0xf0] sm:$0xff]
    %v53 = vld [vmem:[%s1 + $0xf8] sm:$0xff]
    %v54 = vld [vmem:[%s1 + $0x100] sm:$0xff]
    %v55 = vld [vmem:[%s1 + $0x108] sm:$0xff]
    %v56 = vld [vmem:[%s1 + $0x110] sm:$0xff]
    %v57 = vld [vmem:[%s1 + $0x118] sm:$0xff]
    %v58 = vld [vmem:[%s2] sm:$0x1]
    %v60 = vlaneseq
    %v61 = vshrl.u32 %v60, 7
    %v62 = vsub.s32 0, %v61
    %v63 = vrot.slane %v58, %v62
    %v66 = vcombine.high %v21, %v21
    %v68 = vunpack.c.l.s4 1983009808
    %v69 = vunpack.c.0.s8 %v68
    %v70 = vlaneseq
    %v71 = vshrl.u32 %v70, 7
    %v72 = vsub.s32 %v69, %v71
    %v73 = vrot.slane %v21, %v72
    %v75 = vunpack.c.l.s4 1983009808
    %v76 = vunpack.c.0.s8 %v75
    %v77 = vlaneseq
    %v78 = vshrl.u32 %v77, 7
    %v79 = vsub.s32 %v76, %v78
    %v80 = vrot.slane %v66, %v79
    %v81 = vcombine.high %v73, %v73
    %vm84 = vcmask 261120
    %v85 = vsel %vm84, %v80, 0
    %87 = vmatprep.subr.mxu0 0.0
    %88 = vmatpush1.msra.mxu0 %v37
    %89 = vmatprep.subr.mxu0 0.0
    %90 = vmatpush1.msra.mxu0 %v36
    %91 = vmatprep.subr.mxu0 0.0
    %92 = vmatpush1.msra.mxu0 %v35
    %93 = vmatprep.subr.mxu0 0.0
    %94 = vmatpush1.msra.mxu0 %v34
    %95 = vmatprep.subr.mxu0 0.0
    %96 = vmatpush1.msra.mxu0 %v33
    %97 = vmatprep.subr.mxu0 0.0
    %98 = vmatpush1.msra.mxu0 %v32
    %99 = vmatprep.subr.mxu0 0.0
    %100 = vmatpush1.msra.mxu0 %v31
    %101 = vmatprep.subr.mxu0 0.0
    %102 = vmatpush1.msra.mxu0 %v30
    %103 = vmatprep.subr.mxu0 0.0
    %104 = vmatpush1.msra.mxu0 %v29
    %105 = vmatprep.subr.mxu0 0.0
    %106 = vmatpush1.msra.mxu0 %v28
    %107 = vmatprep.subr.mxu0 0.0
    %108 = vmatpush1.msra.mxu0 %v27
    %109 = vmatprep.subr.mxu0 0.0
    %110 = vmatpush1.msra.mxu0 %v26
    %111 = vmatprep.subr.mxu0 0.0
    %112 = vmatpush1.msra.mxu0 %v25
    %113 = vmatprep.subr.mxu0 0.0
    %114 = vmatpush1.msra.mxu0 %v24
    %115 = vmatprep.subr.mxu0 0.0
    %116 = vmatpush1.msra.mxu0 %v23
    %117 = vmatprep.subr.mxu0 0.0
    %118 = vmatpush1.msra.mxu0 %v22
    %119 = vmatprep.subr.mxu0 0.0
    %120 = vmatpush2.msra.mxu0 %v53
    %121 = vmatprep.subr.mxu0 0.0
    %122 = vmatpush2.msra.mxu0 %v52
    %123 = vmatprep.subr.mxu0 0.0
    %124 = vmatpush2.msra.mxu0 %v51
    %125 = vmatprep.subr.mxu0 0.0
    %126 = vmatpush2.msra.mxu0 %v50
    %127 = vmatprep.subr.mxu0 0.0
    %128 = vmatpush2.msra.mxu0 %v49
    %129 = vmatprep.subr.mxu0 0.0
    %130 = vmatpush2.msra.mxu0 %v48
    %131 = vmatprep.subr.mxu0 0.0
    %132 = vmatpush2.msra.mxu0 %v47
    %133 = vmatprep.subr.mxu0 0.0
    %134 = vmatpush2.msra.mxu0 %v46
    %135 = vmatprep.subr.mxu0 0.0
    %136 = vmatpush2.msra.mxu0 %v45
    %137 = vmatprep.subr.mxu0 0.0
    %138 = vmatpush2.msra.mxu0 %v44
    %139 = vmatprep.subr.mxu0 0.0
    %140 = vmatpush2.msra.mxu0 %v43
    %141 = vmatprep.subr.mxu0 0.0
    %142 = vmatpush2.msra.mxu0 %v42
    %143 = vmatprep.subr.mxu0 0.0
    %144 = vmatpush2.msra.mxu0 %v41
    %145 = vmatprep.subr.mxu0 0.0
    %146 = vmatpush2.msra.mxu0 %v40
    %147 = vmatprep.subr.mxu0 0.0
    %148 = vmatpush2.msra.mxu0 %v39
    %149 = vmatprep.subr.mxu0 0.0
    %150 = vmatpush2.msra.mxu0 %v38
    %151 = vmatprep.mubr.f32.mxu0 %v81
    %152 = vmatmul.mubr.f32.gmra.mxu0 %v73
    %v153 = vpop.f32.mrf.mxu0
    %v154 = vadd.f32 %v63, %v153
    %v155 = vpop.f32.mrf.mxu0
    %156 = vdwg.mxu0
    %157 = vmatprep.subr.mxu0 0.0
    %158 = vmatpush1.msra.mxu0 0.0
    %159 = vmatprep.subr.mxu0 0.0
    %160 = vmatpush1.msra.mxu0 0.0
    %161 = vmatprep.subr.mxu0 0.0
    %162 = vmatpush1.msra.mxu0 0.0
    %163 = vmatprep.subr.mxu0 0.0
    %164 = vmatpush1.msra.mxu0 0.0
    %165 = vmatprep.subr.mxu0 0.0
    %166 = vmatpush1.msra.mxu0 0.0
    %167 = vmatprep.subr.mxu0 0.0
    %168 = vmatpush1.msra.mxu0 0.0
    %169 = vmatprep.subr.mxu0 0.0
    %170 = vmatpush1.msra.mxu0 0.0
    %171 = vmatprep.subr.mxu0 0.0
    %172 = vmatpush1.msra.mxu0 0.0
    %173 = vmatprep.subr.mxu0 0.0
    %174 = vmatpush1.msra.mxu0 0.0
    %175 = vmatprep.subr.mxu0 0.0
    %176 = vmatpush1.msra.mxu0 0.0
    %177 = vmatprep.subr.mxu0 0.0
    %178 = vmatpush1.msra.mxu0 0.0
    %179 = vmatprep.subr.mxu0 0.0
    %180 = vmatpush1.msra.mxu0 0.0
    %181 = vmatprep.subr.mxu0 0.0
    %182 = vmatpush1.msra.mxu0 %v57
    %183 = vmatprep.subr.mxu0 0.0
    %184 = vmatpush1.msra.mxu0 %v56
    %185 = vmatprep.subr.mxu0 0.0
    %186 = vmatpush1.msra.mxu0 %v55
    %187 = vmatprep.subr.mxu0 0.0
    %188 = vmatpush1.msra.mxu0 %v54
    %189 = vmatprep.subr.mxu0 0.0
    %190 = vmatpush2.msra.mxu0 0.0
    %191 = vmatprep.subr.mxu0 0.0
    %192 = vmatpush2.msra.mxu0 0.0
    %193 = vmatprep.subr.mxu0 0.0
    %194 = vmatpush2.msra.mxu0 0.0
    %195 = vmatprep.subr.mxu0 0.0
    %196 = vmatpush2.msra.mxu0 0.0
    %197 = vmatprep.subr.mxu0 0.0
    %198 = vmatpush2.msra.mxu0 0.0
    %199 = vmatprep.subr.mxu0 0.0
    %200 = vmatpush2.msra.mxu0 0.0
    %201 = vmatprep.subr.mxu0 0.0
    %202 = vmatpush2.msra.mxu0 0.0
    %203 = vmatprep.subr.mxu0 0.0
    %204 = vmatpush2.msra.mxu0 0.0
    %205 = vmatprep.subr.mxu0 0.0
    %206 = vmatpush2.msra.mxu0 0.0
    %207 = vmatprep.subr.mxu0 0.0
    %208 = vmatpush2.msra.mxu0 0.0
    %209 = vmatprep.subr.mxu0 0.0
    %210 = vmatpush2.msra.mxu0 0.0
    %211 = vmatprep.subr.mxu0 0.0
    %212 = vmatpush2.msra.mxu0 0.0
    %213 = vmatprep.subr.mxu0 0.0
    %214 = vmatpush2.msra.mxu0 0.0
    %215 = vmatprep.subr.mxu0 0.0
    %216 = vmatpush2.msra.mxu0 0.0
    %217 = vmatprep.subr.mxu0 0.0
    %218 = vmatpush2.msra.mxu0 0.0
    %219 = vmatprep.subr.mxu0 0.0
    %220 = vmatpush2.msra.mxu0 0.0
    %221 = vmatprep.mubr.f32.mxu0 0.0
    %222 = vmatmul.mubr.f32.gmra.mxu0 %v85
    %v223 = vpop.f32.mrf.mxu0
    %v224 = vadd.f32 %v154, %v223
    %v225 = vpop.f32.mrf.mxu0
    %226 = vdwg.mxu0
    %v227 = vmax.f32 %v224, 0.0
    %v228 = vld [vmem:[%s3] sm:$0xff]
    %v229 = vld [vmem:[%s3 + $0x8] sm:$0xff]
    %v230 = vld [vmem:[%s3 + $0x10] sm:$0xff]
    %v231 = vld [vmem:[%s3 + $0x18] sm:$0xff]
    %v232 = vld [vmem:[%s4] sm:$0x1]
    %v234 = vlaneseq
    %v235 = vshrl.u32 %v234, 7
    %v236 = vsub.s32 0, %v235
    %v237 = vrot.slane %v232, %v236
    %v240 = vsel %vm84, %v227, 0
    %242 = vmatprep.subr.mxu0 0.0
    %243 = vmatpush1.msra.mxu0 0.0
    %244 = vmatprep.subr.mxu0 0.0
    %245 = vmatpush1.msra.mxu0 0.0
    %246 = vmatprep.subr.mxu0 0.0
    %247 = vmatpush1.msra.mxu0 0.0
    %248 = vmatprep.subr.mxu0 0.0
    %249 = vmatpush1.msra.mxu0 0.0
    %250 = vmatprep.subr.mxu0 0.0
    %251 = vmatpush1.msra.mxu0 0.0
    %252 = vmatprep.subr.mxu0 0.0
    %253 = vmatpush1.msra.mxu0 0.0
    %254 = vmatprep.subr.mxu0 0.0
    %255 = vmatpush1.msra.mxu0 0.0
    %256 = vmatprep.subr.mxu0 0.0
    %257 = vmatpush1.msra.mxu0 0.0
    %258 = vmatprep.subr.mxu0 0.0
    %259 = vmatpush1.msra.mxu0 0.0
    %260 = vmatprep.subr.mxu0 0.0
    %261 = vmatpush1.msra.mxu0 0.0
    %262 = vmatprep.subr.mxu0 0.0
    %263 = vmatpush1.msra.mxu0 0.0
    %264 = vmatprep.subr.mxu0 0.0
    %265 = vmatpush1.msra.mxu0 0.0
    %266 = vmatprep.subr.mxu0 0.0
    %267 = vmatpush1.msra.mxu0 %v231
    %268 = vmatprep.subr.mxu0 0.0
    %269 = vmatpush1.msra.mxu0 %v230
    %270 = vmatprep.subr.mxu0 0.0
    %271 = vmatpush1.msra.mxu0 %v229
    %272 = vmatprep.subr.mxu0 0.0
    %273 = vmatpush1.msra.mxu0 %v228
    %274 = vmatprep.subr.mxu0 0.0
    %275 = vmatpush2.msra.mxu0 0.0
    %276 = vmatprep.subr.mxu0 0.0
    %277 = vmatpush2.msra.mxu0 0.0
    %278 = vmatprep.subr.mxu0 0.0
    %279 = vmatpush2.msra.mxu0 0.0
    %280 = vmatprep.subr.mxu0 0.0
    %281 = vmatpush2.msra.mxu0 0.0
    %282 = vmatprep.subr.mxu0 0.0
    %283 = vmatpush2.msra.mxu0 0.0
    %284 = vmatprep.subr.mxu0 0.0
    %285 = vmatpush2.msra.mxu0 0.0
    %286 = vmatprep.subr.mxu0 0.0
    %287 = vmatpush2.msra.mxu0 0.0
    %288 = vmatprep.subr.mxu0 0.0
    %289 = vmatpush2.msra.mxu0 0.0
    %290 = vmatprep.subr.mxu0 0.0
    %291 = vmatpush2.msra.mxu0 0.0
    %292 = vmatprep.subr.mxu0 0.0
    %293 = vmatpush2.msra.mxu0 0.0
    %294 = vmatprep.subr.mxu0 0.0
    %295 = vmatpush2.msra.mxu0 0.0
    %296 = vmatprep.subr.mxu0 0.0
    %297 = vmatpush2.msra.mxu0 0.0
    %298 = vmatprep.subr.mxu0 0.0
    %299 = vmatpush2.msra.mxu0 0.0
    %300 = vmatprep.subr.mxu0 0.0
    %301 = vmatpush2.msra.mxu0 0.0
    %302 = vmatprep.subr.mxu0 0.0
    %303 = vmatpush2.msra.mxu0 0.0
    %304 = vmatprep.subr.mxu0 0.0
    %305 = vmatpush2.msra.mxu0 0.0
    %306 = vmatprep.mubr.f32.mxu0 0.0
    %307 = vmatmul.mubr.f32.gmra.mxu0 %v240
    %v308 = vpop.f32.mrf.mxu0
    %v309 = vadd.f32 %v237, %v308
    %v310 = vpop.f32.mrf.mxu0
    %311 = vdwg.mxu0
    %vm312 = vcmask 9216
    %313 = vst.msk [vmem:[#allocation2] sm:$0x3] %vm312, %v309
    // Predicated region
    $region22: #{dqn_forward.7} parent=1 // pred_check
      _
    $region23: #{dqn_forward.7} parent=1 // pred_check_branch
      %315 = sbr.rel (0) target = $region25
    $region24: #{dqn_forward.7} parent=1 // pred_region
      %s317 = ssub.s32 32, 32
      %318 = vsyncadd [#allocation3], %s317
      %s320 = sshll.u32 [#allocation2], 4
      %s321 = int_to_ptr.vmem [resolvable:$true] %s320
      %323 = dma.vmem_to_hbm [thread:$0]  %s321, 32, %s5, [#allocation3]
    $region25: #{dqn_forward.7} parent=1 // pred_fallthru
      _
    // Predicated region
    $region26: #{dqn_forward.7} parent=1 // pred_check
      _
    $region27: #{dqn_forward.7} parent=1 // pred_check_branch
      %325 = sbr.rel (0) target = $region29
    $region28: #{dqn_forward.7} parent=1 // pred_region
      %326 = dma.done [#allocation3], 32
    $region29: #{dqn_forward.7} parent=1 // pred_fallthru
      _
    %327 = vsyncpa [#allocation3], 1

</llo_original>
